<compile_context>
chip_gen: v6e
topology: v6e:2x2x1
jax: 0.10.0
libtpu: 0.0.40
codegen_flags: <defaults>
</compile_context>

<pallas_src>
import jax
import jax.numpy as jnp
from jax import lax
from jax.experimental import pallas as pl
from jax.experimental.pallas import tpu as pltpu


# ----------------------------- model dimensions -----------------------------
V = 10            # target_num
E = 16            # paras.embed_size (LSTM hidden == embed width)
D20 = E * 20      # 320
D10 = E * 10      # 160
D4 = E * 4        # 64
E2 = E // 2       # 8
G4 = 4 * E        # 64   (4 fused LSTM gates)
F_IN = 4          # input feature size (embed_key is Linear(4, 4))
BN_EPS = 1e-5

# bias-slab row ids
(B_EQ, B_EK, B_T1, B_T2, B_T3, B_Q, B_D1,
 B_D2, B_D3, B_QOD, B_O1, B_O2, B_LSTM) = range(13)
BIAS_COLS = D20   # widest bias (320)

_VMEM = pl.BlockSpec(memory_space=pltpu.MemorySpace.VMEM)


# ------------------------------ fused kernel --------------------------------
def seqattn_kernel(tgt_ref, keys_ref, xlast_ref,
                   w320_ref, wt2_ref, w64_ref, w16_ref, wsm_ref, bias_ref,
                   logp_ref, od_ref):
    B = xlast_ref.shape[0]
    T = keys_ref.shape[0]
    f32 = jnp.float32

    def bias(row, width):
        return bias_ref[row:row + 1, :width]               # (1, width)

    # ---- unpack packed weight slabs (static row offsets, hoisted once) -------
    w_t1 = w320_ref[0:V, :]                # (10, 320) transform_targets L1
    w_d2 = w320_ref[16:16 + D4, :]         # (64, 320) decode L2 (BN folded)
    w_t2 = wt2_ref[...]                    # (320, 160) transform_targets L2
    w_d1 = w64_ref[0:E, :]                 # (16, 64)  decode L1
    w_ih = w64_ref[16:16 + V, :]           # (10, 64)  LSTM input-hidden (i,f,o,g)
    w_hh = w64_ref[32:32 + E, :]           # (16, 64)  LSTM hidden-hidden
    w_t3 = w16_ref[0:D10, :]               # (160, 16) transform_targets L3
    w_q = w16_ref[160:161, :]              # (1, 16)   transform_query (BN folded)
    w_qod0 = w16_ref[168:169, :]           # transform_query_od rows (BN folded)
    w_qod1 = w16_ref[169:170, :]
    w_qod2 = w16_ref[170:171, :]
    w_d3 = w16_ref[176:176 + D20, 0:V]     # (320, 10) decode L3 (BN folded)
    w_o1 = wsm_ref[0:E, 0:E2]              # (16, 8)   decode_od L1 (BN folded)
    w_o2t = wsm_ref[16:17, 0:E2]           # (1, 8)    decode_od L2 (stored transposed)
    w_eq = wsm_ref[24:25, 0:4]             # (1, 4)    embed_query
    w_ek = wsm_ref[32:36, 0:4]             # (4, 4)    embed_key

    b_lstm = bias(B_LSTM, G4)
    b_ek = bias(B_EK, 4)

    xlast = xlast_ref[...]                               # (B, 4) = inputs[:, -1, :]
    query = xlast[:, 0:1]                                # (B, 1)

    # embed_query: Linear(1,4)+ReLU -> K=1 matmul as a broadcast multiply
    eq = jnp.maximum(query * w_eq + bias(B_EQ, 4), 0.0)  # (B, 4)

    # transform_targets applied to every possible class (its input is one-hot)
    tt = jnp.maximum(w_t1 + bias(B_T1, D20), 0.0)                              # (V, 320)
    tt = jnp.maximum(jnp.dot(tt, w_t2, preferred_element_type=f32)
                     + bias(B_T2, D10), 0.0)                                   # (V, 160)
    tt_table = jnp.maximum(jnp.dot(tt, w_t3, preferred_element_type=f32)
                           + bias(B_T3, E), 0.0)                               # (V, 16)

    iota_v = lax.broadcasted_iota(jnp.int32, (B, V), 1)
    ek_rows = [w_ek[f:f + 1, :] for f in range(4)]        # each (1, 4)

    # ---- per-timestep: attention-weighted one-hot accumulation + LSTM ih ------
    # (input-hidden term hoisted out of the serial recurrence)
    attn_oh = jnp.zeros((B, V), f32)
    ih = []
    for t in range(T):
        oh_t = (tgt_ref[:, t:t + 1] == iota_v).astype(f32)                     # (B, V)
        ih.append(jnp.dot(oh_t, w_ih, preferred_element_type=f32) + b_lstm)    # (B, 64)
        k_t = keys_ref[t]                                                      # (B, 4)
        ek_t = (k_t[:, 0:1] * ek_rows[0] + k_t[:, 1:2] * ek_rows[1]
                + k_t[:, 2:3] * ek_rows[2] + k_t[:, 3:4] * ek_rows[3] + b_ek)
        ek_t = jnp.maximum(ek_t, 0.0)                                          # (B, 4)
        w_t = jnp.sum(ek_t * eq, axis=1, keepdims=True)                        # (B, 1)
        # F.softmax(weights, dim=0): normalize across the batch, per timestep
        mx = jnp.max(w_t, axis=0, keepdims=True)
        ex = jnp.exp(w_t - mx)
        a_t = ex / jnp.sum(ex, axis=0, keepdims=True)                          # (B, 1)
        attn_oh = attn_oh + a_t * oh_t
    targets_applied = jnp.dot(attn_oh, tt_table, preferred_element_type=f32)   # (B, 16)

    # ---- embed_past: fused-gate LSTM over targets -----------------------------
    h = jnp.zeros((B, E), f32)
    c = jnp.zeros((B, E), f32)
    for t in range(T):
        gates = ih[t] + jnp.dot(h, w_hh, preferred_element_type=f32)           # (B, 64)
        s = jax.nn.sigmoid(gates[:, 0:3 * E])                                  # i, f, o
        i_g = s[:, 0:E]
        f_g = s[:, E:2 * E]
        o_g = s[:, 2 * E:3 * E]
        g_g = jnp.tanh(gates[:, 3 * E:4 * E])
        c = f_g * c + i_g * g_g
        h = o_g * jnp.tanh(c)
    embed_past = h                                                             # (B, 16)

    # ---- estimate_state: transform_query + decode (BN folded into linears) ----
    tq = jnp.maximum(query * w_q + bias(B_Q, E), 0.0)                          # (B, 16)
    z = tq + targets_applied + embed_past
    d = jnp.maximum(jnp.dot(z, w_d1, preferred_element_type=f32) + bias(B_D1, D4), 0.0)
    d = jnp.maximum(jnp.dot(d, w_d2, preferred_element_type=f32) + bias(B_D2, D20), 0.0)
    est = jnp.maximum(jnp.dot(d, w_d3, preferred_element_type=f32) + bias(B_D3, V), 0.0)

    # log_softmax output
    est_max = jnp.max(est, axis=1, keepdims=True)
    shifted = est - est_max
    logp_ref[...] = shifted - jnp.log(jnp.sum(jnp.exp(shifted), axis=1, keepdims=True))

    # ---- predict_od ------------------------------------------------------------
    # topk(1) of softmax(est) == first argmax of est (softmax is monotone)
    iota_f = iota_v.astype(f32)
    cand = jnp.where(est == est_max, iota_f, float(V))
    first_idx = jnp.min(cand, axis=1, keepdims=True)                           # (B, 1)
    oh_pred = (iota_f == first_idx).astype(f32)                                # (B, V)
    pred_embed = jnp.dot(oh_pred, tt_table, preferred_element_type=f32)        # (B, 16)

    # transform_query_od on [x0, x2, x3]: K=3 matmul as three broadcast terms
    tq_od = jnp.maximum(xlast[:, 0:1] * w_qod0 + xlast[:, 2:3] * w_qod1
                        + xlast[:, 3:4] * w_qod2 + bias(B_QOD, E), 0.0)        # (B, 16)
    zo = tq_od + (targets_applied + pred_embed) + embed_past
    o1 = jnp.maximum(jnp.dot(zo, w_o1, preferred_element_type=f32)
                     + bias(B_O1, E2), 0.0)                                    # (B, 8)
    od_ref[...] = jnp.maximum(jnp.sum(o1 * w_o2t, axis=1, keepdims=True)
                              + bias(B_O2, 1), 0.0)                            # (B, 1)


# --------------------------- full forward (wrapper) --------------------------
@jax.jit
def seqattn_forward(inputs, targets, params):
    assert targets.shape[1] == inputs.shape[1] - 1, "keys length must equal target length"
    keys_tm = jnp.transpose(inputs[:, :-1, :], (1, 0, 2))       # (T_k, B, 4) time-major
    x_last = inputs[:, -1, :]                                   # (B, 4)
    tgt = targets.astype(jnp.int32)                             # (B, T) - one-hot built in-kernel
    B = inputs.shape[0]
    logp, od = pl.pallas_call(
        seqattn_kernel,
        out_shape=(jax.ShapeDtypeStruct((B, V), jnp.float32),
                   jax.ShapeDtypeStruct((B, 1), jnp.float32)),
        in_specs=[_VMEM] * (3 + len(params)),
        out_specs=(_VMEM, _VMEM),
    )(tgt, keys_tm, x_last, *params)
    return logp, od


# ------------------------------ parameter init -------------------------------
def init_params(key):
    ks = iter(jax.random.split(key, 40))

    def w(shape, scale=0.1):
        return (scale * jax.random.normal(next(ks), shape)).astype(jnp.float32)

    def lin(n_in, n_out):
        return w((n_in, n_out)), w((n_out,))

    def fold_bn(w_, b_, n):
        # eval-mode BatchNorm1d with freshly initialized running stats
        gamma = jnp.ones((n,), jnp.float32)
        beta = jnp.zeros((n,), jnp.float32)
        mean = jnp.zeros((n,), jnp.float32)
        var = jnp.ones((n,), jnp.float32)
        scale = gamma / jnp.sqrt(var + BN_EPS)
        return w_ * scale[None, :], (b_ - mean) * scale + beta

    # embed_query / embed_key
    w_eq, b_eq = lin(1, 4)
    w_ek, b_ek = lin(4, 4)
    # transform_targets
    w_t1, b_t1 = lin(V, D20)
    w_t2, b_t2 = lin(D20, D10)
    w_t3, b_t3 = lin(D10, E)
    # transform_query (+ BN(E) folded)
    w_q, b_q = fold_bn(*lin(1, E), E)
    # decode (+ BN(20E), BN(V) folded)
    w_d1, b_d1 = lin(E, D4)
    w_d2, b_d2 = fold_bn(*lin(D4, D20), D20)
    w_d3, b_d3 = fold_bn(*lin(D20, V), V)
    # transform_query_od (+ BN(E) folded)
    w_qod, b_qod = fold_bn(*lin(3, E), E)
    # decode_od (+ BN(E//2) folded)
    w_o1, b_o1 = fold_bn(*lin(E, E2), E2)
    w_o2, b_o2 = lin(E2, 1)
    # LSTM, fused gates stored in (i, f, o, g) order; bias = b_ih + b_hh
    w_ih = w((V, G4))
    w_hh = w((E, G4))
    b_lstm = w((G4,)) + w((G4,))

    # --------------------------- pack into slabs -----------------------------
    def pad_rows(a, rows):
        return jnp.zeros((rows, a.shape[1]), jnp.float32).at[:a.shape[0], :].set(a)

    def pad_block(a, rows, cols):
        return jnp.zeros((rows, cols), jnp.float32).at[:a.shape[0], :a.shape[1]].set(a)

    w320 = jnp.concatenate([pad_rows(w_t1, 16), w_d2], axis=0)                 # (80, 320)
    wt2 = w_t2                                                                 # (320, 160)
    w64 = jnp.concatenate([w_d1, pad_rows(w_ih, 16), w_hh], axis=0)            # (48, 64)
    w16 = jnp.concatenate([w_t3, pad_rows(w_q, 8), pad_rows(w_qod, 8),
                           pad_block(w_d3, D20, E)], axis=0)                   # (496, 16)
    wsm = jnp.concatenate([pad_block(w_o1, 16, 8), pad_block(w_o2.T, 8, 8),
                           pad_block(w_eq, 8, 8), pad_block(w_ek, 8, 8)],
                          axis=0)                                              # (40, 8)

    def brow(b_):
        return jnp.zeros((1, BIAS_COLS), jnp.float32).at[0, :b_.shape[0]].set(b_)

    bias = jnp.concatenate(
        [brow(b_eq), brow(b_ek), brow(b_t1), brow(b_t2), brow(b_t3),
         brow(b_q), brow(b_d1), brow(b_d2), brow(b_d3), brow(b_qod),
         brow(b_o1), brow(b_o2), brow(b_lstm),
         jnp.zeros((3, BIAS_COLS), jnp.float32)], axis=0)                      # (16, 320)

    return (w320, wt2, w64, w16, wsm, bias)


# ----------------------------------- main ------------------------------------
if __name__ == "__main__":
    key = jax.random.PRNGKey(0)
    k_in, k_tg, k_p = jax.random.split(key, 3)

    B, T_IN = 2, 9                      # keys length == target length == 8
    T_SEQ = T_IN - 1
    inputs = jax.random.normal(k_in, (B, T_IN, F_IN), dtype=jnp.float32)
    targets = jax.random.randint(k_tg, (B, T_SEQ), 0, V, dtype=jnp.int32)

    params = init_params(k_p)
    logp, od = seqattn_forward(inputs, targets, params)
    jax.block_until_ready((logp, od))
    assert logp.shape == (B, V) and od.shape == (B, 1)
    print("KERNEL_OK")
</pallas_src>

<mosaic_0001>
module attributes {stable_mosaic.version = 11 : i64} {
  func.func @seqattn_kernel(%arg0: memref<2x8xi32, #tpu.memory_space<vmem>>, %arg1: memref<8x2x4xf32, #tpu.memory_space<vmem>>, %arg2: memref<2x4xf32, #tpu.memory_space<vmem>>, %arg3: memref<80x320xf32, #tpu.memory_space<vmem>>, %arg4: memref<320x160xf32, #tpu.memory_space<vmem>>, %arg5: memref<48x64xf32, #tpu.memory_space<vmem>>, %arg6: memref<496x16xf32, #tpu.memory_space<vmem>>, %arg7: memref<40x8xf32, #tpu.memory_space<vmem>>, %arg8: memref<16x320xf32, #tpu.memory_space<vmem>>, %arg9: memref<2x10xf32, #tpu.memory_space<vmem>>, %arg10: memref<2x1xf32, #tpu.memory_space<vmem>>) attributes {dimension_semantics = [], scalar_prefetch = 0 : i64, scratch_operands = 0 : i64, tpu.core_type = #tpu.core_type<tc>} {
    %c0 = arith.constant 0 : index
    %c0_0 = arith.constant 0 : index
    %0 = vector.load %arg3[%c0, %c0_0] : memref<80x320xf32, #tpu.memory_space<vmem>>, vector<10x320xf32>
    %c16 = arith.constant 16 : index
    %c0_1 = arith.constant 0 : index
    %1 = vector.load %arg3[%c16, %c0_1] : memref<80x320xf32, #tpu.memory_space<vmem>>, vector<64x320xf32>
    %c0_2 = arith.constant 0 : index
    %c0_3 = arith.constant 0 : index
    %2 = vector.load %arg4[%c0_2, %c0_3] : memref<320x160xf32, #tpu.memory_space<vmem>>, vector<320x160xf32>
    %c0_4 = arith.constant 0 : index
    %c0_5 = arith.constant 0 : index
    %3 = vector.load %arg5[%c0_4, %c0_5] : memref<48x64xf32, #tpu.memory_space<vmem>>, vector<16x64xf32>
    %c16_6 = arith.constant 16 : index
    %c0_7 = arith.constant 0 : index
    %4 = vector.load %arg5[%c16_6, %c0_7] : memref<48x64xf32, #tpu.memory_space<vmem>>, vector<10x64xf32>
    %c32 = arith.constant 32 : index
    %c0_8 = arith.constant 0 : index
    %5 = vector.load %arg5[%c32, %c0_8] : memref<48x64xf32, #tpu.memory_space<vmem>>, vector<16x64xf32>
    %c0_9 = arith.constant 0 : index
    %c0_10 = arith.constant 0 : index
    %6 = vector.load %arg6[%c0_9, %c0_10] : memref<496x16xf32, #tpu.memory_space<vmem>>, vector<160x16xf32>
    %c160 = arith.constant 160 : index
    %c0_11 = arith.constant 0 : index
    %7 = vector.load %arg6[%c160, %c0_11] : memref<496x16xf32, #tpu.memory_space<vmem>>, vector<1x16xf32>
    %c168 = arith.constant 168 : index
    %c0_12 = arith.constant 0 : index
    %8 = vector.load %arg6[%c168, %c0_12] : memref<496x16xf32, #tpu.memory_space<vmem>>, vector<1x16xf32>
    %c169 = arith.constant 169 : index
    %c0_13 = arith.constant 0 : index
    %9 = vector.load %arg6[%c169, %c0_13] : memref<496x16xf32, #tpu.memory_space<vmem>>, vector<1x16xf32>
    %c170 = arith.constant 170 : index
    %c0_14 = arith.constant 0 : index
    %10 = vector.load %arg6[%c170, %c0_14] : memref<496x16xf32, #tpu.memory_space<vmem>>, vector<1x16xf32>
    %c176 = arith.constant 176 : index
    %c0_15 = arith.constant 0 : index
    %11 = vector.load %arg6[%c176, %c0_15] : memref<496x16xf32, #tpu.memory_space<vmem>>, vector<320x10xf32>
    %c0_16 = arith.constant 0 : index
    %c0_17 = arith.constant 0 : index
    %12 = vector.load %arg7[%c0_16, %c0_17] : memref<40x8xf32, #tpu.memory_space<vmem>>, vector<16x8xf32>
    %c16_18 = arith.constant 16 : index
    %c0_19 = arith.constant 0 : index
    %13 = vector.load %arg7[%c16_18, %c0_19] : memref<40x8xf32, #tpu.memory_space<vmem>>, vector<1x8xf32>
    %c24 = arith.constant 24 : index
    %c0_20 = arith.constant 0 : index
    %14 = vector.load %arg7[%c24, %c0_20] : memref<40x8xf32, #tpu.memory_space<vmem>>, vector<1x4xf32>
    %c32_21 = arith.constant 32 : index
    %c0_22 = arith.constant 0 : index
    %15 = vector.load %arg7[%c32_21, %c0_22] : memref<40x8xf32, #tpu.memory_space<vmem>>, vector<4x4xf32>
    %c12 = arith.constant 12 : index
    %c0_23 = arith.constant 0 : index
    %16 = vector.load %arg8[%c12, %c0_23] : memref<16x320xf32, #tpu.memory_space<vmem>>, vector<1x64xf32>
    %c1 = arith.constant 1 : index
    %c0_24 = arith.constant 0 : index
    %17 = vector.load %arg8[%c1, %c0_24] : memref<16x320xf32, #tpu.memory_space<vmem>>, vector<1x4xf32>
    %c0_25 = arith.constant 0 : index
    %c0_26 = arith.constant 0 : index
    %18 = vector.load %arg2[%c0_25, %c0_26] : memref<2x4xf32, #tpu.memory_space<vmem>>, vector<2x4xf32>
    %19 = vector.extract_strided_slice %18 {offsets = [0, 0], sizes = [2, 1], strides = [1, 1]} : vector<2x4xf32> to vector<2x1xf32>
    %20 = vector.broadcast %19 : vector<2x1xf32> to vector<2x4xf32>
    %21 = vector.broadcast %14 : vector<1x4xf32> to vector<2x4xf32>
    %22 = arith.mulf %20, %21 : vector<2x4xf32>
    %c0_27 = arith.constant 0 : index
    %c0_28 = arith.constant 0 : index
    %23 = vector.load %arg8[%c0_27, %c0_28] : memref<16x320xf32, #tpu.memory_space<vmem>>, vector<1x4xf32>
    %24 = vector.broadcast %23 : vector<1x4xf32> to vector<2x4xf32>
    %25 = arith.addf %22, %24 : vector<2x4xf32>
    %cst = arith.constant 0.000000e+00 : f32
    %26 = vector.broadcast %cst : f32 to vector<2x4xf32>
    %27 = arith.maximumf %25, %26 : vector<2x4xf32>
    %c2 = arith.constant 2 : index
    %c0_29 = arith.constant 0 : index
    %28 = vector.load %arg8[%c2, %c0_29] : memref<16x320xf32, #tpu.memory_space<vmem>>, vector<1x320xf32>
    %29 = vector.broadcast %28 : vector<1x320xf32> to vector<10x320xf32>
    %30 = arith.addf %0, %29 : vector<10x320xf32>
    %cst_30 = arith.constant 0.000000e+00 : f32
    %31 = vector.broadcast %cst_30 : f32 to vector<10x320xf32>
    %32 = arith.maximumf %30, %31 : vector<10x320xf32>
    %cst_31 = arith.constant dense<0.000000e+00> : vector<10x160xf32>
    %33 = tpu.matmul %32, %2, %cst_31 {dimension_numbers = #tpu.dot_dimension_numbers<[1], [0], [0], [1], [0, 0, 1, 1], [], []>} : vector<10x320xf32>, vector<320x160xf32>, vector<10x160xf32> -> vector<10x160xf32>
    %c3 = arith.constant 3 : index
    %c0_32 = arith.constant 0 : index
    %34 = vector.load %arg8[%c3, %c0_32] : memref<16x320xf32, #tpu.memory_space<vmem>>, vector<1x160xf32>
    %35 = vector.broadcast %34 : vector<1x160xf32> to vector<10x160xf32>
    %36 = arith.addf %33, %35 : vector<10x160xf32>
    %cst_33 = arith.constant 0.000000e+00 : f32
    %37 = vector.broadcast %cst_33 : f32 to vector<10x160xf32>
    %38 = arith.maximumf %36, %37 : vector<10x160xf32>
    %cst_34 = arith.constant dense<0.000000e+00> : vector<10x16xf32>
    %39 = tpu.matmul %38, %6, %cst_34 {dimension_numbers = #tpu.dot_dimension_numbers<[1], [0], [0], [1], [0, 0, 1, 1], [], []>} : vector<10x160xf32>, vector<160x16xf32>, vector<10x16xf32> -> vector<10x16xf32>
    %c4 = arith.constant 4 : index
    %c0_35 = arith.constant 0 : index
    %40 = vector.load %arg8[%c4, %c0_35] : memref<16x320xf32, #tpu.memory_space<vmem>>, vector<1x16xf32>
    %41 = vector.broadcast %40 : vector<1x16xf32> to vector<10x16xf32>
    %42 = arith.addf %39, %41 : vector<10x16xf32>
    %cst_36 = arith.constant 0.000000e+00 : f32
    %43 = vector.broadcast %cst_36 : f32 to vector<10x16xf32>
    %44 = arith.maximumf %42, %43 : vector<10x16xf32>
    %45 = tpu.iota {dimensions = array<i32: 1>} : vector<2x10xi32>
    %46 = vector.extract_strided_slice %15 {offsets = [0, 0], sizes = [1, 4], strides = [1, 1]} : vector<4x4xf32> to vector<1x4xf32>
    %47 = vector.extract_strided_slice %15 {offsets = [1, 0], sizes = [1, 4], strides = [1, 1]} : vector<4x4xf32> to vector<1x4xf32>
    %48 = vector.extract_strided_slice %15 {offsets = [2, 0], sizes = [1, 4], strides = [1, 1]} : vector<4x4xf32> to vector<1x4xf32>
    %49 = vector.extract_strided_slice %15 {offsets = [3, 0], sizes = [1, 4], strides = [1, 1]} : vector<4x4xf32> to vector<1x4xf32>
    %cst_37 = arith.constant 0.000000e+00 : f32
    %50 = vector.broadcast %cst_37 : f32 to vector<2x10xf32>
    %c0_38 = arith.constant 0 : index
    %c0_39 = arith.constant 0 : index
    %51 = vector.load %arg0[%c0_38, %c0_39] : memref<2x8xi32, #tpu.memory_space<vmem>>, vector<2x1xi32>
    %52 = vector.broadcast %51 : vector<2x1xi32> to vector<2x10xi32>
    %53 = arith.cmpi eq, %52, %45 : vector<2x10xi32>
    %54 = arith.extui %53 : vector<2x10xi1> to vector<2x10xi32>
    %55 = arith.sitofp %54 : vector<2x10xi32> to vector<2x10xf32>
    %cst_40 = arith.constant dense<0.000000e+00> : vector<2x64xf32>
    %56 = tpu.matmul %55, %4, %cst_40 {dimension_numbers = #tpu.dot_dimension_numbers<[1], [0], [0], [1], [0, 0, 1, 1], [], []>} : vector<2x10xf32>, vector<10x64xf32>, vector<2x64xf32> -> vector<2x64xf32>
    %57 = vector.broadcast %16 : vector<1x64xf32> to vector<2x64xf32>
    %58 = arith.addf %56, %57 : vector<2x64xf32>
    %c0_41 = arith.constant 0 : index
    %c0_42 = arith.constant 0 : index
    %c0_43 = arith.constant 0 : index
    %59 = vector.load %arg1[%c0_41, %c0_42, %c0_43] : memref<8x2x4xf32, #tpu.memory_space<vmem>>, vector<1x2x4xf32>
    %60 = vector.shape_cast %59 : vector<1x2x4xf32> to vector<2x4xf32>
    %61 = vector.extract_strided_slice %60 {offsets = [0, 0], sizes = [2, 1], strides = [1, 1]} : vector<2x4xf32> to vector<2x1xf32>
    %62 = vector.broadcast %61 : vector<2x1xf32> to vector<2x4xf32>
    %63 = vector.broadcast %46 : vector<1x4xf32> to vector<2x4xf32>
    %64 = arith.mulf %62, %63 : vector<2x4xf32>
    %65 = vector.extract_strided_slice %60 {offsets = [0, 1], sizes = [2, 1], strides = [1, 1]} : vector<2x4xf32> to vector<2x1xf32>
    %66 = vector.broadcast %65 : vector<2x1xf32> to vector<2x4xf32>
    %67 = vector.broadcast %47 : vector<1x4xf32> to vector<2x4xf32>
    %68 = arith.mulf %66, %67 : vector<2x4xf32>
    %69 = arith.addf %64, %68 : vector<2x4xf32>
    %70 = vector.extract_strided_slice %60 {offsets = [0, 2], sizes = [2, 1], strides = [1, 1]} : vector<2x4xf32> to vector<2x1xf32>
    %71 = vector.broadcast %70 : vector<2x1xf32> to vector<2x4xf32>
    %72 = vector.broadcast %48 : vector<1x4xf32> to vector<2x4xf32>
    %73 = arith.mulf %71, %72 : vector<2x4xf32>
    %74 = arith.addf %69, %73 : vector<2x4xf32>
    %75 = vector.extract_strided_slice %60 {offsets = [0, 3], sizes = [2, 1], strides = [1, 1]} : vector<2x4xf32> to vector<2x1xf32>
    %76 = vector.broadcast %75 : vector<2x1xf32> to vector<2x4xf32>
    %77 = vector.broadcast %49 : vector<1x4xf32> to vector<2x4xf32>
    %78 = arith.mulf %76, %77 : vector<2x4xf32>
    %79 = arith.addf %74, %78 : vector<2x4xf32>
    %80 = vector.broadcast %17 : vector<1x4xf32> to vector<2x4xf32>
    %81 = arith.addf %79, %80 : vector<2x4xf32>
    %cst_44 = arith.constant 0.000000e+00 : f32
    %82 = vector.broadcast %cst_44 : f32 to vector<2x4xf32>
    %83 = arith.maximumf %81, %82 : vector<2x4xf32>
    %84 = arith.mulf %83, %27 : vector<2x4xf32>
    %cst_45 = arith.constant dense<0.000000e+00> : vector<2xf32>
    %85 = vector.multi_reduction <add>, %84, %cst_45 [1] : vector<2x4xf32> to vector<2xf32>
    %86 = vector.shape_cast %85 : vector<2xf32> to vector<2x1xf32>
    %cst_46 = arith.constant dense<0xFF800000> : vector<1xf32>
    %87 = vector.multi_reduction <maximumf>, %86, %cst_46 [0] : vector<2x1xf32> to vector<1xf32>
    %88 = vector.shape_cast %87 : vector<1xf32> to vector<1x1xf32>
    %89 = vector.broadcast %88 : vector<1x1xf32> to vector<2x1xf32>
    %90 = arith.subf %86, %89 : vector<2x1xf32>
    %91 = math.exp %90 : vector<2x1xf32>
    %cst_47 = arith.constant dense<0.000000e+00> : vector<1xf32>
    %92 = vector.multi_reduction <add>, %91, %cst_47 [0] : vector<2x1xf32> to vector<1xf32>
    %93 = vector.shape_cast %92 : vector<1xf32> to vector<1x1xf32>
    %94 = vector.broadcast %93 : vector<1x1xf32> to vector<2x1xf32>
    %95 = arith.divf %91, %94 : vector<2x1xf32>
    %96 = vector.broadcast %95 : vector<2x1xf32> to vector<2x10xf32>
    %97 = arith.mulf %96, %55 : vector<2x10xf32>
    %98 = arith.addf %50, %97 : vector<2x10xf32>
    %c0_48 = arith.constant 0 : index
    %c1_49 = arith.constant 1 : index
    %99 = vector.load %arg0[%c0_48, %c1_49] : memref<2x8xi32, #tpu.memory_space<vmem>>, vector<2x1xi32>
    %100 = vector.broadcast %99 : vector<2x1xi32> to vector<2x10xi32>
    %101 = arith.cmpi eq, %100, %45 : vector<2x10xi32>
    %102 = arith.extui %101 : vector<2x10xi1> to vector<2x10xi32>
    %103 = arith.sitofp %102 : vector<2x10xi32> to vector<2x10xf32>
    %cst_50 = arith.constant dense<0.000000e+00> : vector<2x64xf32>
    %104 = tpu.matmul %103, %4, %cst_50 {dimension_numbers = #tpu.dot_dimension_numbers<[1], [0], [0], [1], [0, 0, 1, 1], [], []>} : vector<2x10xf32>, vector<10x64xf32>, vector<2x64xf32> -> vector<2x64xf32>
    %105 = vector.broadcast %16 : vector<1x64xf32> to vector<2x64xf32>
    %106 = arith.addf %104, %105 : vector<2x64xf32>
    %c1_51 = arith.constant 1 : index
    %c0_52 = arith.constant 0 : index
    %c0_53 = arith.constant 0 : index
    %107 = vector.load %arg1[%c1_51, %c0_52, %c0_53] : memref<8x2x4xf32, #tpu.memory_space<vmem>>, vector<1x2x4xf32>
    %108 = vector.shape_cast %107 : vector<1x2x4xf32> to vector<2x4xf32>
    %109 = vector.extract_strided_slice %108 {offsets = [0, 0], sizes = [2, 1], strides = [1, 1]} : vector<2x4xf32> to vector<2x1xf32>
    %110 = vector.broadcast %109 : vector<2x1xf32> to vector<2x4xf32>
    %111 = vector.broadcast %46 : vector<1x4xf32> to vector<2x4xf32>
    %112 = arith.mulf %110, %111 : vector<2x4xf32>
    %113 = vector.extract_strided_slice %108 {offsets = [0, 1], sizes = [2, 1], strides = [1, 1]} : vector<2x4xf32> to vector<2x1xf32>
    %114 = vector.broadcast %113 : vector<2x1xf32> to vector<2x4xf32>
    %115 = vector.broadcast %47 : vector<1x4xf32> to vector<2x4xf32>
    %116 = arith.mulf %114, %115 : vector<2x4xf32>
    %117 = arith.addf %112, %116 : vector<2x4xf32>
    %118 = vector.extract_strided_slice %108 {offsets = [0, 2], sizes = [2, 1], strides = [1, 1]} : vector<2x4xf32> to vector<2x1xf32>
    %119 = vector.broadcast %118 : vector<2x1xf32> to vector<2x4xf32>
    %120 = vector.broadcast %48 : vector<1x4xf32> to vector<2x4xf32>
    %121 = arith.mulf %119, %120 : vector<2x4xf32>
    %122 = arith.addf %117, %121 : vector<2x4xf32>
    %123 = vector.extract_strided_slice %108 {offsets = [0, 3], sizes = [2, 1], strides = [1, 1]} : vector<2x4xf32> to vector<2x1xf32>
    %124 = vector.broadcast %123 : vector<2x1xf32> to vector<2x4xf32>
    %125 = vector.broadcast %49 : vector<1x4xf32> to vector<2x4xf32>
    %126 = arith.mulf %124, %125 : vector<2x4xf32>
    %127 = arith.addf %122, %126 : vector<2x4xf32>
    %128 = vector.broadcast %17 : vector<1x4xf32> to vector<2x4xf32>
    %129 = arith.addf %127, %128 : vector<2x4xf32>
    %cst_54 = arith.constant 0.000000e+00 : f32
    %130 = vector.broadcast %cst_54 : f32 to vector<2x4xf32>
    %131 = arith.maximumf %129, %130 : vector<2x4xf32>
    %132 = arith.mulf %131, %27 : vector<2x4xf32>
    %cst_55 = arith.constant dense<0.000000e+00> : vector<2xf32>
    %133 = vector.multi_reduction <add>, %132, %cst_55 [1] : vector<2x4xf32> to vector<2xf32>
    %134 = vector.shape_cast %133 : vector<2xf32> to vector<2x1xf32>
    %cst_56 = arith.constant dense<0xFF800000> : vector<1xf32>
    %135 = vector.multi_reduction <maximumf>, %134, %cst_56 [0] : vector<2x1xf32> to vector<1xf32>
    %136 = vector.shape_cast %135 : vector<1xf32> to vector<1x1xf32>
    %137 = vector.broadcast %136 : vector<1x1xf32> to vector<2x1xf32>
    %138 = arith.subf %134, %137 : vector<2x1xf32>
    %139 = math.exp %138 : vector<2x1xf32>
    %cst_57 = arith.constant dense<0.000000e+00> : vector<1xf32>
    %140 = vector.multi_reduction <add>, %139, %cst_57 [0] : vector<2x1xf32> to vector<1xf32>
    %141 = vector.shape_cast %140 : vector<1xf32> to vector<1x1xf32>
    %142 = vector.broadcast %141 : vector<1x1xf32> to vector<2x1xf32>
    %143 = arith.divf %139, %142 : vector<2x1xf32>
    %144 = vector.broadcast %143 : vector<2x1xf32> to vector<2x10xf32>
    %145 = arith.mulf %144, %103 : vector<2x10xf32>
    %146 = arith.addf %98, %145 : vector<2x10xf32>
    %c0_58 = arith.constant 0 : index
    %c2_59 = arith.constant 2 : index
    %147 = vector.load %arg0[%c0_58, %c2_59] : memref<2x8xi32, #tpu.memory_space<vmem>>, vector<2x1xi32>
    %148 = vector.broadcast %147 : vector<2x1xi32> to vector<2x10xi32>
    %149 = arith.cmpi eq, %148, %45 : vector<2x10xi32>
    %150 = arith.extui %149 : vector<2x10xi1> to vector<2x10xi32>
    %151 = arith.sitofp %150 : vector<2x10xi32> to vector<2x10xf32>
    %cst_60 = arith.constant dense<0.000000e+00> : vector<2x64xf32>
    %152 = tpu.matmul %151, %4, %cst_60 {dimension_numbers = #tpu.dot_dimension_numbers<[1], [0], [0], [1], [0, 0, 1, 1], [], []>} : vector<2x10xf32>, vector<10x64xf32>, vector<2x64xf32> -> vector<2x64xf32>
    %153 = vector.broadcast %16 : vector<1x64xf32> to vector<2x64xf32>
    %154 = arith.addf %152, %153 : vector<2x64xf32>
    %c2_61 = arith.constant 2 : index
    %c0_62 = arith.constant 0 : index
    %c0_63 = arith.constant 0 : index
    %155 = vector.load %arg1[%c2_61, %c0_62, %c0_63] : memref<8x2x4xf32, #tpu.memory_space<vmem>>, vector<1x2x4xf32>
    %156 = vector.shape_cast %155 : vector<1x2x4xf32> to vector<2x4xf32>
    %157 = vector.extract_strided_slice %156 {offsets = [0, 0], sizes = [2, 1], strides = [1, 1]} : vector<2x4xf32> to vector<2x1xf32>
    %158 = vector.broadcast %157 : vector<2x1xf32> to vector<2x4xf32>
    %159 = vector.broadcast %46 : vector<1x4xf32> to vector<2x4xf32>
    %160 = arith.mulf %158, %159 : vector<2x4xf32>
    %161 = vector.extract_strided_slice %156 {offsets = [0, 1], sizes = [2, 1], strides = [1, 1]} : vector<2x4xf32> to vector<2x1xf32>
    %162 = vector.broadcast %161 : vector<2x1xf32> to vector<2x4xf32>
    %163 = vector.broadcast %47 : vector<1x4xf32> to vector<2x4xf32>
    %164 = arith.mulf %162, %163 : vector<2x4xf32>
    %165 = arith.addf %160, %164 : vector<2x4xf32>
    %166 = vector.extract_strided_slice %156 {offsets = [0, 2], sizes = [2, 1], strides = [1, 1]} : vector<2x4xf32> to vector<2x1xf32>
    %167 = vector.broadcast %166 : vector<2x1xf32> to vector<2x4xf32>
    %168 = vector.broadcast %48 : vector<1x4xf32> to vector<2x4xf32>
    %169 = arith.mulf %167, %168 : vector<2x4xf32>
    %170 = arith.addf %165, %169 : vector<2x4xf32>
    %171 = vector.extract_strided_slice %156 {offsets = [0, 3], sizes = [2, 1], strides = [1, 1]} : vector<2x4xf32> to vector<2x1xf32>
    %172 = vector.broadcast %171 : vector<2x1xf32> to vector<2x4xf32>
    %173 = vector.broadcast %49 : vector<1x4xf32> to vector<2x4xf32>
    %174 = arith.mulf %172, %173 : vector<2x4xf32>
    %175 = arith.addf %170, %174 : vector<2x4xf32>
    %176 = vector.broadcast %17 : vector<1x4xf32> to vector<2x4xf32>
    %177 = arith.addf %175, %176 : vector<2x4xf32>
    %cst_64 = arith.constant 0.000000e+00 : f32
    %178 = vector.broadcast %cst_64 : f32 to vector<2x4xf32>
    %179 = arith.maximumf %177, %178 : vector<2x4xf32>
    %180 = arith.mulf %179, %27 : vector<2x4xf32>
    %cst_65 = arith.constant dense<0.000000e+00> : vector<2xf32>
    %181 = vector.multi_reduction <add>, %180, %cst_65 [1] : vector<2x4xf32> to vector<2xf32>
    %182 = vector.shape_cast %181 : vector<2xf32> to vector<2x1xf32>
    %cst_66 = arith.constant dense<0xFF800000> : vector<1xf32>
    %183 = vector.multi_reduction <maximumf>, %182, %cst_66 [0] : vector<2x1xf32> to vector<1xf32>
    %184 = vector.shape_cast %183 : vector<1xf32> to vector<1x1xf32>
    %185 = vector.broadcast %184 : vector<1x1xf32> to vector<2x1xf32>
    %186 = arith.subf %182, %185 : vector<2x1xf32>
    %187 = math.exp %186 : vector<2x1xf32>
    %cst_67 = arith.constant dense<0.000000e+00> : vector<1xf32>
    %188 = vector.multi_reduction <add>, %187, %cst_67 [0] : vector<2x1xf32> to vector<1xf32>
    %189 = vector.shape_cast %188 : vector<1xf32> to vector<1x1xf32>
    %190 = vector.broadcast %189 : vector<1x1xf32> to vector<2x1xf32>
    %191 = arith.divf %187, %190 : vector<2x1xf32>
    %192 = vector.broadcast %191 : vector<2x1xf32> to vector<2x10xf32>
    %193 = arith.mulf %192, %151 : vector<2x10xf32>
    %194 = arith.addf %146, %193 : vector<2x10xf32>
    %c0_68 = arith.constant 0 : index
    %c3_69 = arith.constant 3 : index
    %195 = vector.load %arg0[%c0_68, %c3_69] : memref<2x8xi32, #tpu.memory_space<vmem>>, vector<2x1xi32>
    %196 = vector.broadcast %195 : vector<2x1xi32> to vector<2x10xi32>
    %197 = arith.cmpi eq, %196, %45 : vector<2x10xi32>
    %198 = arith.extui %197 : vector<2x10xi1> to vector<2x10xi32>
    %199 = arith.sitofp %198 : vector<2x10xi32> to vector<2x10xf32>
    %cst_70 = arith.constant dense<0.000000e+00> : vector<2x64xf32>
    %200 = tpu.matmul %199, %4, %cst_70 {dimension_numbers = #tpu.dot_dimension_numbers<[1], [0], [0], [1], [0, 0, 1, 1], [], []>} : vector<2x10xf32>, vector<10x64xf32>, vector<2x64xf32> -> vector<2x64xf32>
    %201 = vector.broadcast %16 : vector<1x64xf32> to vector<2x64xf32>
    %202 = arith.addf %200, %201 : vector<2x64xf32>
    %c3_71 = arith.constant 3 : index
    %c0_72 = arith.constant 0 : index
    %c0_73 = arith.constant 0 : index
    %203 = vector.load %arg1[%c3_71, %c0_72, %c0_73] : memref<8x2x4xf32, #tpu.memory_space<vmem>>, vector<1x2x4xf32>
    %204 = vector.shape_cast %203 : vector<1x2x4xf32> to vector<2x4xf32>
    %205 = vector.extract_strided_slice %204 {offsets = [0, 0], sizes = [2, 1], strides = [1, 1]} : vector<2x4xf32> to vector<2x1xf32>
    %206 = vector.broadcast %205 : vector<2x1xf32> to vector<2x4xf32>
    %207 = vector.broadcast %46 : vector<1x4xf32> to vector<2x4xf32>
    %208 = arith.mulf %206, %207 : vector<2x4xf32>
    %209 = vector.extract_strided_slice %204 {offsets = [0, 1], sizes = [2, 1], strides = [1, 1]} : vector<2x4xf32> to vector<2x1xf32>
    %210 = vector.broadcast %209 : vector<2x1xf32> to vector<2x4xf32>
    %211 = vector.broadcast %47 : vector<1x4xf32> to vector<2x4xf32>
    %212 = arith.mulf %210, %211 : vector<2x4xf32>
    %213 = arith.addf %208, %212 : vector<2x4xf32>
    %214 = vector.extract_strided_slice %204 {offsets = [0, 2], sizes = [2, 1], strides = [1, 1]} : vector<2x4xf32> to vector<2x1xf32>
    %215 = vector.broadcast %214 : vector<2x1xf32> to vector<2x4xf32>
    %216 = vector.broadcast %48 : vector<1x4xf32> to vector<2x4xf32>
    %217 = arith.mulf %215, %216 : vector<2x4xf32>
    %218 = arith.addf %213, %217 : vector<2x4xf32>
    %219 = vector.extract_strided_slice %204 {offsets = [0, 3], sizes = [2, 1], strides = [1, 1]} : vector<2x4xf32> to vector<2x1xf32>
    %220 = vector.broadcast %219 : vector<2x1xf32> to vector<2x4xf32>
    %221 = vector.broadcast %49 : vector<1x4xf32> to vector<2x4xf32>
    %222 = arith.mulf %220, %221 : vector<2x4xf32>
    %223 = arith.addf %218, %222 : vector<2x4xf32>
    %224 = vector.broadcast %17 : vector<1x4xf32> to vector<2x4xf32>
    %225 = arith.addf %223, %224 : vector<2x4xf32>
    %cst_74 = arith.constant 0.000000e+00 : f32
    %226 = vector.broadcast %cst_74 : f32 to vector<2x4xf32>
    %227 = arith.maximumf %225, %226 : vector<2x4xf32>
    %228 = arith.mulf %227, %27 : vector<2x4xf32>
    %cst_75 = arith.constant dense<0.000000e+00> : vector<2xf32>
    %229 = vector.multi_reduction <add>, %228, %cst_75 [1] : vector<2x4xf32> to vector<2xf32>
    %230 = vector.shape_cast %229 : vector<2xf32> to vector<2x1xf32>
    %cst_76 = arith.constant dense<0xFF800000> : vector<1xf32>
    %231 = vector.multi_reduction <maximumf>, %230, %cst_76 [0] : vector<2x1xf32> to vector<1xf32>
    %232 = vector.shape_cast %231 : vector<1xf32> to vector<1x1xf32>
    %233 = vector.broadcast %232 : vector<1x1xf32> to vector<2x1xf32>
    %234 = arith.subf %230, %233 : vector<2x1xf32>
    %235 = math.exp %234 : vector<2x1xf32>
    %cst_77 = arith.constant dense<0.000000e+00> : vector<1xf32>
    %236 = vector.multi_reduction <add>, %235, %cst_77 [0] : vector<2x1xf32> to vector<1xf32>
    %237 = vector.shape_cast %236 : vector<1xf32> to vector<1x1xf32>
    %238 = vector.broadcast %237 : vector<1x1xf32> to vector<2x1xf32>
    %239 = arith.divf %235, %238 : vector<2x1xf32>
    %240 = vector.broadcast %239 : vector<2x1xf32> to vector<2x10xf32>
    %241 = arith.mulf %240, %199 : vector<2x10xf32>
    %242 = arith.addf %194, %241 : vector<2x10xf32>
    %c0_78 = arith.constant 0 : index
    %c4_79 = arith.constant 4 : index
    %243 = vector.load %arg0[%c0_78, %c4_79] : memref<2x8xi32, #tpu.memory_space<vmem>>, vector<2x1xi32>
    %244 = vector.broadcast %243 : vector<2x1xi32> to vector<2x10xi32>
    %245 = arith.cmpi eq, %244, %45 : vector<2x10xi32>
    %246 = arith.extui %245 : vector<2x10xi1> to vector<2x10xi32>
    %247 = arith.sitofp %246 : vector<2x10xi32> to vector<2x10xf32>
    %cst_80 = arith.constant dense<0.000000e+00> : vector<2x64xf32>
    %248 = tpu.matmul %247, %4, %cst_80 {dimension_numbers = #tpu.dot_dimension_numbers<[1], [0], [0], [1], [0, 0, 1, 1], [], []>} : vector<2x10xf32>, vector<10x64xf32>, vector<2x64xf32> -> vector<2x64xf32>
    %249 = vector.broadcast %16 : vector<1x64xf32> to vector<2x64xf32>
    %250 = arith.addf %248, %249 : vector<2x64xf32>
    %c4_81 = arith.constant 4 : index
    %c0_82 = arith.constant 0 : index
    %c0_83 = arith.constant 0 : index
    %251 = vector.load %arg1[%c4_81, %c0_82, %c0_83] : memref<8x2x4xf32, #tpu.memory_space<vmem>>, vector<1x2x4xf32>
    %252 = vector.shape_cast %251 : vector<1x2x4xf32> to vector<2x4xf32>
    %253 = vector.extract_strided_slice %252 {offsets = [0, 0], sizes = [2, 1], strides = [1, 1]} : vector<2x4xf32> to vector<2x1xf32>
    %254 = vector.broadcast %253 : vector<2x1xf32> to vector<2x4xf32>
    %255 = vector.broadcast %46 : vector<1x4xf32> to vector<2x4xf32>
    %256 = arith.mulf %254, %255 : vector<2x4xf32>
    %257 = vector.extract_strided_slice %252 {offsets = [0, 1], sizes = [2, 1], strides = [1, 1]} : vector<2x4xf32> to vector<2x1xf32>
    %258 = vector.broadcast %257 : vector<2x1xf32> to vector<2x4xf32>
    %259 = vector.broadcast %47 : vector<1x4xf32> to vector<2x4xf32>
    %260 = arith.mulf %258, %259 : vector<2x4xf32>
    %261 = arith.addf %256, %260 : vector<2x4xf32>
    %262 = vector.extract_strided_slice %252 {offsets = [0, 2], sizes = [2, 1], strides = [1, 1]} : vector<2x4xf32> to vector<2x1xf32>
    %263 = vector.broadcast %262 : vector<2x1xf32> to vector<2x4xf32>
    %264 = vector.broadcast %48 : vector<1x4xf32> to vector<2x4xf32>
    %265 = arith.mulf %263, %264 : vector<2x4xf32>
    %266 = arith.addf %261, %265 : vector<2x4xf32>
    %267 = vector.extract_strided_slice %252 {offsets = [0, 3], sizes = [2, 1], strides = [1, 1]} : vector<2x4xf32> to vector<2x1xf32>
    %268 = vector.broadcast %267 : vector<2x1xf32> to vector<2x4xf32>
    %269 = vector.broadcast %49 : vector<1x4xf32> to vector<2x4xf32>
    %270 = arith.mulf %268, %269 : vector<2x4xf32>
    %271 = arith.addf %266, %270 : vector<2x4xf32>
    %272 = vector.broadcast %17 : vector<1x4xf32> to vector<2x4xf32>
    %273 = arith.addf %271, %272 : vector<2x4xf32>
    %cst_84 = arith.constant 0.000000e+00 : f32
    %274 = vector.broadcast %cst_84 : f32 to vector<2x4xf32>
    %275 = arith.maximumf %273, %274 : vector<2x4xf32>
    %276 = arith.mulf %275, %27 : vector<2x4xf32>
    %cst_85 = arith.constant dense<0.000000e+00> : vector<2xf32>
    %277 = vector.multi_reduction <add>, %276, %cst_85 [1] : vector<2x4xf32> to vector<2xf32>
    %278 = vector.shape_cast %277 : vector<2xf32> to vector<2x1xf32>
    %cst_86 = arith.constant dense<0xFF800000> : vector<1xf32>
    %279 = vector.multi_reduction <maximumf>, %278, %cst_86 [0] : vector<2x1xf32> to vector<1xf32>
    %280 = vector.shape_cast %279 : vector<1xf32> to vector<1x1xf32>
    %281 = vector.broadcast %280 : vector<1x1xf32> to vector<2x1xf32>
    %282 = arith.subf %278, %281 : vector<2x1xf32>
    %283 = math.exp %282 : vector<2x1xf32>
    %cst_87 = arith.constant dense<0.000000e+00> : vector<1xf32>
    %284 = vector.multi_reduction <add>, %283, %cst_87 [0] : vector<2x1xf32> to vector<1xf32>
    %285 = vector.shape_cast %284 : vector<1xf32> to vector<1x1xf32>
    %286 = vector.broadcast %285 : vector<1x1xf32> to vector<2x1xf32>
    %287 = arith.divf %283, %286 : vector<2x1xf32>
    %288 = vector.broadcast %287 : vector<2x1xf32> to vector<2x10xf32>
    %289 = arith.mulf %288, %247 : vector<2x10xf32>
    %290 = arith.addf %242, %289 : vector<2x10xf32>
    %c0_88 = arith.constant 0 : index
    %c5 = arith.constant 5 : index
    %291 = vector.load %arg0[%c0_88, %c5] : memref<2x8xi32, #tpu.memory_space<vmem>>, vector<2x1xi32>
    %292 = vector.broadcast %291 : vector<2x1xi32> to vector<2x10xi32>
    %293 = arith.cmpi eq, %292, %45 : vector<2x10xi32>
    %294 = arith.extui %293 : vector<2x10xi1> to vector<2x10xi32>
    %295 = arith.sitofp %294 : vector<2x10xi32> to vector<2x10xf32>
    %cst_89 = arith.constant dense<0.000000e+00> : vector<2x64xf32>
    %296 = tpu.matmul %295, %4, %cst_89 {dimension_numbers = #tpu.dot_dimension_numbers<[1], [0], [0], [1], [0, 0, 1, 1], [], []>} : vector<2x10xf32>, vector<10x64xf32>, vector<2x64xf32> -> vector<2x64xf32>
    %297 = vector.broadcast %16 : vector<1x64xf32> to vector<2x64xf32>
    %298 = arith.addf %296, %297 : vector<2x64xf32>
    %c5_90 = arith.constant 5 : index
    %c0_91 = arith.constant 0 : index
    %c0_92 = arith.constant 0 : index
    %299 = vector.load %arg1[%c5_90, %c0_91, %c0_92] : memref<8x2x4xf32, #tpu.memory_space<vmem>>, vector<1x2x4xf32>
    %300 = vector.shape_cast %299 : vector<1x2x4xf32> to vector<2x4xf32>
    %301 = vector.extract_strided_slice %300 {offsets = [0, 0], sizes = [2, 1], strides = [1, 1]} : vector<2x4xf32> to vector<2x1xf32>
    %302 = vector.broadcast %301 : vector<2x1xf32> to vector<2x4xf32>
    %303 = vector.broadcast %46 : vector<1x4xf32> to vector<2x4xf32>
    %304 = arith.mulf %302, %303 : vector<2x4xf32>
    %305 = vector.extract_strided_slice %300 {offsets = [0, 1], sizes = [2, 1], strides = [1, 1]} : vector<2x4xf32> to vector<2x1xf32>
    %306 = vector.broadcast %305 : vector<2x1xf32> to vector<2x4xf32>
    %307 = vector.broadcast %47 : vector<1x4xf32> to vector<2x4xf32>
    %308 = arith.mulf %306, %307 : vector<2x4xf32>
    %309 = arith.addf %304, %308 : vector<2x4xf32>
    %310 = vector.extract_strided_slice %300 {offsets = [0, 2], sizes = [2, 1], strides = [1, 1]} : vector<2x4xf32> to vector<2x1xf32>
    %311 = vector.broadcast %310 : vector<2x1xf32> to vector<2x4xf32>
    %312 = vector.broadcast %48 : vector<1x4xf32> to vector<2x4xf32>
    %313 = arith.mulf %311, %312 : vector<2x4xf32>
    %314 = arith.addf %309, %313 : vector<2x4xf32>
    %315 = vector.extract_strided_slice %300 {offsets = [0, 3], sizes = [2, 1], strides = [1, 1]} : vector<2x4xf32> to vector<2x1xf32>
    %316 = vector.broadcast %315 : vector<2x1xf32> to vector<2x4xf32>
    %317 = vector.broadcast %49 : vector<1x4xf32> to vector<2x4xf32>
    %318 = arith.mulf %316, %317 : vector<2x4xf32>
    %319 = arith.addf %314, %318 : vector<2x4xf32>
    %320 = vector.broadcast %17 : vector<1x4xf32> to vector<2x4xf32>
    %321 = arith.addf %319, %320 : vector<2x4xf32>
    %cst_93 = arith.constant 0.000000e+00 : f32
    %322 = vector.broadcast %cst_93 : f32 to vector<2x4xf32>
    %323 = arith.maximumf %321, %322 : vector<2x4xf32>
    %324 = arith.mulf %323, %27 : vector<2x4xf32>
    %cst_94 = arith.constant dense<0.000000e+00> : vector<2xf32>
    %325 = vector.multi_reduction <add>, %324, %cst_94 [1] : vector<2x4xf32> to vector<2xf32>
    %326 = vector.shape_cast %325 : vector<2xf32> to vector<2x1xf32>
    %cst_95 = arith.constant dense<0xFF800000> : vector<1xf32>
    %327 = vector.multi_reduction <maximumf>, %326, %cst_95 [0] : vector<2x1xf32> to vector<1xf32>
    %328 = vector.shape_cast %327 : vector<1xf32> to vector<1x1xf32>
    %329 = vector.broadcast %328 : vector<1x1xf32> to vector<2x1xf32>
    %330 = arith.subf %326, %329 : vector<2x1xf32>
    %331 = math.exp %330 : vector<2x1xf32>
    %cst_96 = arith.constant dense<0.000000e+00> : vector<1xf32>
    %332 = vector.multi_reduction <add>, %331, %cst_96 [0] : vector<2x1xf32> to vector<1xf32>
    %333 = vector.shape_cast %332 : vector<1xf32> to vector<1x1xf32>
    %334 = vector.broadcast %333 : vector<1x1xf32> to vector<2x1xf32>
    %335 = arith.divf %331, %334 : vector<2x1xf32>
    %336 = vector.broadcast %335 : vector<2x1xf32> to vector<2x10xf32>
    %337 = arith.mulf %336, %295 : vector<2x10xf32>
    %338 = arith.addf %290, %337 : vector<2x10xf32>
    %c0_97 = arith.constant 0 : index
    %c6 = arith.constant 6 : index
    %339 = vector.load %arg0[%c0_97, %c6] : memref<2x8xi32, #tpu.memory_space<vmem>>, vector<2x1xi32>
    %340 = vector.broadcast %339 : vector<2x1xi32> to vector<2x10xi32>
    %341 = arith.cmpi eq, %340, %45 : vector<2x10xi32>
    %342 = arith.extui %341 : vector<2x10xi1> to vector<2x10xi32>
    %343 = arith.sitofp %342 : vector<2x10xi32> to vector<2x10xf32>
    %cst_98 = arith.constant dense<0.000000e+00> : vector<2x64xf32>
    %344 = tpu.matmul %343, %4, %cst_98 {dimension_numbers = #tpu.dot_dimension_numbers<[1], [0], [0], [1], [0, 0, 1, 1], [], []>} : vector<2x10xf32>, vector<10x64xf32>, vector<2x64xf32> -> vector<2x64xf32>
    %345 = vector.broadcast %16 : vector<1x64xf32> to vector<2x64xf32>
    %346 = arith.addf %344, %345 : vector<2x64xf32>
    %c6_99 = arith.constant 6 : index
    %c0_100 = arith.constant 0 : index
    %c0_101 = arith.constant 0 : index
    %347 = vector.load %arg1[%c6_99, %c0_100, %c0_101] : memref<8x2x4xf32, #tpu.memory_space<vmem>>, vector<1x2x4xf32>
    %348 = vector.shape_cast %347 : vector<1x2x4xf32> to vector<2x4xf32>
    %349 = vector.extract_strided_slice %348 {offsets = [0, 0], sizes = [2, 1], strides = [1, 1]} : vector<2x4xf32> to vector<2x1xf32>
    %350 = vector.broadcast %349 : vector<2x1xf32> to vector<2x4xf32>
    %351 = vector.broadcast %46 : vector<1x4xf32> to vector<2x4xf32>
    %352 = arith.mulf %350, %351 : vector<2x4xf32>
    %353 = vector.extract_strided_slice %348 {offsets = [0, 1], sizes = [2, 1], strides = [1, 1]} : vector<2x4xf32> to vector<2x1xf32>
    %354 = vector.broadcast %353 : vector<2x1xf32> to vector<2x4xf32>
    %355 = vector.broadcast %47 : vector<1x4xf32> to vector<2x4xf32>
    %356 = arith.mulf %354, %355 : vector<2x4xf32>
    %357 = arith.addf %352, %356 : vector<2x4xf32>
    %358 = vector.extract_strided_slice %348 {offsets = [0, 2], sizes = [2, 1], strides = [1, 1]} : vector<2x4xf32> to vector<2x1xf32>
    %359 = vector.broadcast %358 : vector<2x1xf32> to vector<2x4xf32>
    %360 = vector.broadcast %48 : vector<1x4xf32> to vector<2x4xf32>
    %361 = arith.mulf %359, %360 : vector<2x4xf32>
    %362 = arith.addf %357, %361 : vector<2x4xf32>
    %363 = vector.extract_strided_slice %348 {offsets = [0, 3], sizes = [2, 1], strides = [1, 1]} : vector<2x4xf32> to vector<2x1xf32>
    %364 = vector.broadcast %363 : vector<2x1xf32> to vector<2x4xf32>
    %365 = vector.broadcast %49 : vector<1x4xf32> to vector<2x4xf32>
    %366 = arith.mulf %364, %365 : vector<2x4xf32>
    %367 = arith.addf %362, %366 : vector<2x4xf32>
    %368 = vector.broadcast %17 : vector<1x4xf32> to vector<2x4xf32>
    %369 = arith.addf %367, %368 : vector<2x4xf32>
    %cst_102 = arith.constant 0.000000e+00 : f32
    %370 = vector.broadcast %cst_102 : f32 to vector<2x4xf32>
    %371 = arith.maximumf %369, %370 : vector<2x4xf32>
    %372 = arith.mulf %371, %27 : vector<2x4xf32>
    %cst_103 = arith.constant dense<0.000000e+00> : vector<2xf32>
    %373 = vector.multi_reduction <add>, %372, %cst_103 [1] : vector<2x4xf32> to vector<2xf32>
    %374 = vector.shape_cast %373 : vector<2xf32> to vector<2x1xf32>
    %cst_104 = arith.constant dense<0xFF800000> : vector<1xf32>
    %375 = vector.multi_reduction <maximumf>, %374, %cst_104 [0] : vector<2x1xf32> to vector<1xf32>
    %376 = vector.shape_cast %375 : vector<1xf32> to vector<1x1xf32>
    %377 = vector.broadcast %376 : vector<1x1xf32> to vector<2x1xf32>
    %378 = arith.subf %374, %377 : vector<2x1xf32>
    %379 = math.exp %378 : vector<2x1xf32>
    %cst_105 = arith.constant dense<0.000000e+00> : vector<1xf32>
    %380 = vector.multi_reduction <add>, %379, %cst_105 [0] : vector<2x1xf32> to vector<1xf32>
    %381 = vector.shape_cast %380 : vector<1xf32> to vector<1x1xf32>
    %382 = vector.broadcast %381 : vector<1x1xf32> to vector<2x1xf32>
    %383 = arith.divf %379, %382 : vector<2x1xf32>
    %384 = vector.broadcast %383 : vector<2x1xf32> to vector<2x10xf32>
    %385 = arith.mulf %384, %343 : vector<2x10xf32>
    %386 = arith.addf %338, %385 : vector<2x10xf32>
    %c0_106 = arith.constant 0 : index
    %c7 = arith.constant 7 : index
    %387 = vector.load %arg0[%c0_106, %c7] : memref<2x8xi32, #tpu.memory_space<vmem>>, vector<2x1xi32>
    %388 = vector.broadcast %387 : vector<2x1xi32> to vector<2x10xi32>
    %389 = arith.cmpi eq, %388, %45 : vector<2x10xi32>
    %390 = arith.extui %389 : vector<2x10xi1> to vector<2x10xi32>
    %391 = arith.sitofp %390 : vector<2x10xi32> to vector<2x10xf32>
    %cst_107 = arith.constant dense<0.000000e+00> : vector<2x64xf32>
    %392 = tpu.matmul %391, %4, %cst_107 {dimension_numbers = #tpu.dot_dimension_numbers<[1], [0], [0], [1], [0, 0, 1, 1], [], []>} : vector<2x10xf32>, vector<10x64xf32>, vector<2x64xf32> -> vector<2x64xf32>
    %393 = vector.broadcast %16 : vector<1x64xf32> to vector<2x64xf32>
    %394 = arith.addf %392, %393 : vector<2x64xf32>
    %c7_108 = arith.constant 7 : index
    %c0_109 = arith.constant 0 : index
    %c0_110 = arith.constant 0 : index
    %395 = vector.load %arg1[%c7_108, %c0_109, %c0_110] : memref<8x2x4xf32, #tpu.memory_space<vmem>>, vector<1x2x4xf32>
    %396 = vector.shape_cast %395 : vector<1x2x4xf32> to vector<2x4xf32>
    %397 = vector.extract_strided_slice %396 {offsets = [0, 0], sizes = [2, 1], strides = [1, 1]} : vector<2x4xf32> to vector<2x1xf32>
    %398 = vector.broadcast %397 : vector<2x1xf32> to vector<2x4xf32>
    %399 = vector.broadcast %46 : vector<1x4xf32> to vector<2x4xf32>
    %400 = arith.mulf %398, %399 : vector<2x4xf32>
    %401 = vector.extract_strided_slice %396 {offsets = [0, 1], sizes = [2, 1], strides = [1, 1]} : vector<2x4xf32> to vector<2x1xf32>
    %402 = vector.broadcast %401 : vector<2x1xf32> to vector<2x4xf32>
    %403 = vector.broadcast %47 : vector<1x4xf32> to vector<2x4xf32>
    %404 = arith.mulf %402, %403 : vector<2x4xf32>
    %405 = arith.addf %400, %404 : vector<2x4xf32>
    %406 = vector.extract_strided_slice %396 {offsets = [0, 2], sizes = [2, 1], strides = [1, 1]} : vector<2x4xf32> to vector<2x1xf32>
    %407 = vector.broadcast %406 : vector<2x1xf32> to vector<2x4xf32>
    %408 = vector.broadcast %48 : vector<1x4xf32> to vector<2x4xf32>
    %409 = arith.mulf %407, %408 : vector<2x4xf32>
    %410 = arith.addf %405, %409 : vector<2x4xf32>
    %411 = vector.extract_strided_slice %396 {offsets = [0, 3], sizes = [2, 1], strides = [1, 1]} : vector<2x4xf32> to vector<2x1xf32>
    %412 = vector.broadcast %411 : vector<2x1xf32> to vector<2x4xf32>
    %413 = vector.broadcast %49 : vector<1x4xf32> to vector<2x4xf32>
    %414 = arith.mulf %412, %413 : vector<2x4xf32>
    %415 = arith.addf %410, %414 : vector<2x4xf32>
    %416 = vector.broadcast %17 : vector<1x4xf32> to vector<2x4xf32>
    %417 = arith.addf %415, %416 : vector<2x4xf32>
    %cst_111 = arith.constant 0.000000e+00 : f32
    %418 = vector.broadcast %cst_111 : f32 to vector<2x4xf32>
    %419 = arith.maximumf %417, %418 : vector<2x4xf32>
    %420 = arith.mulf %419, %27 : vector<2x4xf32>
    %cst_112 = arith.constant dense<0.000000e+00> : vector<2xf32>
    %421 = vector.multi_reduction <add>, %420, %cst_112 [1] : vector<2x4xf32> to vector<2xf32>
    %422 = vector.shape_cast %421 : vector<2xf32> to vector<2x1xf32>
    %cst_113 = arith.constant dense<0xFF800000> : vector<1xf32>
    %423 = vector.multi_reduction <maximumf>, %422, %cst_113 [0] : vector<2x1xf32> to vector<1xf32>
    %424 = vector.shape_cast %423 : vector<1xf32> to vector<1x1xf32>
    %425 = vector.broadcast %424 : vector<1x1xf32> to vector<2x1xf32>
    %426 = arith.subf %422, %425 : vector<2x1xf32>
    %427 = math.exp %426 : vector<2x1xf32>
    %cst_114 = arith.constant dense<0.000000e+00> : vector<1xf32>
    %428 = vector.multi_reduction <add>, %427, %cst_114 [0] : vector<2x1xf32> to vector<1xf32>
    %429 = vector.shape_cast %428 : vector<1xf32> to vector<1x1xf32>
    %430 = vector.broadcast %429 : vector<1x1xf32> to vector<2x1xf32>
    %431 = arith.divf %427, %430 : vector<2x1xf32>
    %432 = vector.broadcast %431 : vector<2x1xf32> to vector<2x10xf32>
    %433 = arith.mulf %432, %391 : vector<2x10xf32>
    %434 = arith.addf %386, %433 : vector<2x10xf32>
    %cst_115 = arith.constant dense<0.000000e+00> : vector<2x16xf32>
    %435 = tpu.matmul %434, %44, %cst_115 {dimension_numbers = #tpu.dot_dimension_numbers<[1], [0], [0], [1], [0, 0, 1, 1], [], []>} : vector<2x10xf32>, vector<10x16xf32>, vector<2x16xf32> -> vector<2x16xf32>
    %cst_116 = arith.constant 0.000000e+00 : f32
    %436 = vector.broadcast %cst_116 : f32 to vector<2x16xf32>
    %cst_117 = arith.constant 0.000000e+00 : f32
    %437 = vector.broadcast %cst_117 : f32 to vector<2x16xf32>
    %cst_118 = arith.constant dense<0.000000e+00> : vector<2x64xf32>
    %438 = tpu.matmul %436, %5, %cst_118 {dimension_numbers = #tpu.dot_dimension_numbers<[1], [0], [0], [1], [0, 0, 1, 1], [], []>} : vector<2x16xf32>, vector<16x64xf32>, vector<2x64xf32> -> vector<2x64xf32>
    %439 = arith.addf %58, %438 : vector<2x64xf32>
    %440 = vector.extract_strided_slice %439 {offsets = [0, 0], sizes = [2, 48], strides = [1, 1]} : vector<2x64xf32> to vector<2x48xf32>
    %441 = arith.negf %440 : vector<2x48xf32>
    %442 = math.exp %441 : vector<2x48xf32>
    %cst_119 = arith.constant 1.000000e+00 : f32
    %443 = vector.broadcast %cst_119 : f32 to vector<2x48xf32>
    %444 = arith.addf %443, %442 : vector<2x48xf32>
    %445 = arith.divf %443, %444 : vector<2x48xf32>
    %446 = vector.extract_strided_slice %445 {offsets = [0, 0], sizes = [2, 16], strides = [1, 1]} : vector<2x48xf32> to vector<2x16xf32>
    %447 = vector.extract_strided_slice %445 {offsets = [0, 16], sizes = [2, 16], strides = [1, 1]} : vector<2x48xf32> to vector<2x16xf32>
    %448 = vector.extract_strided_slice %445 {offsets = [0, 32], sizes = [2, 16], strides = [1, 1]} : vector<2x48xf32> to vector<2x16xf32>
    %449 = vector.extract_strided_slice %439 {offsets = [0, 48], sizes = [2, 16], strides = [1, 1]} : vector<2x64xf32> to vector<2x16xf32>
    %450 = math.tanh %449 : vector<2x16xf32>
    %451 = arith.mulf %447, %437 : vector<2x16xf32>
    %452 = arith.mulf %446, %450 : vector<2x16xf32>
    %453 = arith.addf %451, %452 : vector<2x16xf32>
    %454 = math.tanh %453 : vector<2x16xf32>
    %455 = arith.mulf %448, %454 : vector<2x16xf32>
    %cst_120 = arith.constant dense<0.000000e+00> : vector<2x64xf32>
    %456 = tpu.matmul %455, %5, %cst_120 {dimension_numbers = #tpu.dot_dimension_numbers<[1], [0], [0], [1], [0, 0, 1, 1], [], []>} : vector<2x16xf32>, vector<16x64xf32>, vector<2x64xf32> -> vector<2x64xf32>
    %457 = arith.addf %106, %456 : vector<2x64xf32>
    %458 = vector.extract_strided_slice %457 {offsets = [0, 0], sizes = [2, 48], strides = [1, 1]} : vector<2x64xf32> to vector<2x48xf32>
    %459 = arith.negf %458 : vector<2x48xf32>
    %460 = math.exp %459 : vector<2x48xf32>
    %cst_121 = arith.constant 1.000000e+00 : f32
    %461 = vector.broadcast %cst_121 : f32 to vector<2x48xf32>
    %462 = arith.addf %461, %460 : vector<2x48xf32>
    %463 = arith.divf %461, %462 : vector<2x48xf32>
    %464 = vector.extract_strided_slice %463 {offsets = [0, 0], sizes = [2, 16], strides = [1, 1]} : vector<2x48xf32> to vector<2x16xf32>
    %465 = vector.extract_strided_slice %463 {offsets = [0, 16], sizes = [2, 16], strides = [1, 1]} : vector<2x48xf32> to vector<2x16xf32>
    %466 = vector.extract_strided_slice %463 {offsets = [0, 32], sizes = [2, 16], strides = [1, 1]} : vector<2x48xf32> to vector<2x16xf32>
    %467 = vector.extract_strided_slice %457 {offsets = [0, 48], sizes = [2, 16], strides = [1, 1]} : vector<2x64xf32> to vector<2x16xf32>
    %468 = math.tanh %467 : vector<2x16xf32>
    %469 = arith.mulf %465, %453 : vector<2x16xf32>
    %470 = arith.mulf %464, %468 : vector<2x16xf32>
    %471 = arith.addf %469, %470 : vector<2x16xf32>
    %472 = math.tanh %471 : vector<2x16xf32>
    %473 = arith.mulf %466, %472 : vector<2x16xf32>
    %cst_122 = arith.constant dense<0.000000e+00> : vector<2x64xf32>
    %474 = tpu.matmul %473, %5, %cst_122 {dimension_numbers = #tpu.dot_dimension_numbers<[1], [0], [0], [1], [0, 0, 1, 1], [], []>} : vector<2x16xf32>, vector<16x64xf32>, vector<2x64xf32> -> vector<2x64xf32>
    %475 = arith.addf %154, %474 : vector<2x64xf32>
    %476 = vector.extract_strided_slice %475 {offsets = [0, 0], sizes = [2, 48], strides = [1, 1]} : vector<2x64xf32> to vector<2x48xf32>
    %477 = arith.negf %476 : vector<2x48xf32>
    %478 = math.exp %477 : vector<2x48xf32>
    %cst_123 = arith.constant 1.000000e+00 : f32
    %479 = vector.broadcast %cst_123 : f32 to vector<2x48xf32>
    %480 = arith.addf %479, %478 : vector<2x48xf32>
    %481 = arith.divf %479, %480 : vector<2x48xf32>
    %482 = vector.extract_strided_slice %481 {offsets = [0, 0], sizes = [2, 16], strides = [1, 1]} : vector<2x48xf32> to vector<2x16xf32>
    %483 = vector.extract_strided_slice %481 {offsets = [0, 16], sizes = [2, 16], strides = [1, 1]} : vector<2x48xf32> to vector<2x16xf32>
    %484 = vector.extract_strided_slice %481 {offsets = [0, 32], sizes = [2, 16], strides = [1, 1]} : vector<2x48xf32> to vector<2x16xf32>
    %485 = vector.extract_strided_slice %475 {offsets = [0, 48], sizes = [2, 16], strides = [1, 1]} : vector<2x64xf32> to vector<2x16xf32>
    %486 = math.tanh %485 : vector<2x16xf32>
    %487 = arith.mulf %483, %471 : vector<2x16xf32>
    %488 = arith.mulf %482, %486 : vector<2x16xf32>
    %489 = arith.addf %487, %488 : vector<2x16xf32>
    %490 = math.tanh %489 : vector<2x16xf32>
    %491 = arith.mulf %484, %490 : vector<2x16xf32>
    %cst_124 = arith.constant dense<0.000000e+00> : vector<2x64xf32>
    %492 = tpu.matmul %491, %5, %cst_124 {dimension_numbers = #tpu.dot_dimension_numbers<[1], [0], [0], [1], [0, 0, 1, 1], [], []>} : vector<2x16xf32>, vector<16x64xf32>, vector<2x64xf32> -> vector<2x64xf32>
    %493 = arith.addf %202, %492 : vector<2x64xf32>
    %494 = vector.extract_strided_slice %493 {offsets = [0, 0], sizes = [2, 48], strides = [1, 1]} : vector<2x64xf32> to vector<2x48xf32>
    %495 = arith.negf %494 : vector<2x48xf32>
    %496 = math.exp %495 : vector<2x48xf32>
    %cst_125 = arith.constant 1.000000e+00 : f32
    %497 = vector.broadcast %cst_125 : f32 to vector<2x48xf32>
    %498 = arith.addf %497, %496 : vector<2x48xf32>
    %499 = arith.divf %497, %498 : vector<2x48xf32>
    %500 = vector.extract_strided_slice %499 {offsets = [0, 0], sizes = [2, 16], strides = [1, 1]} : vector<2x48xf32> to vector<2x16xf32>
    %501 = vector.extract_strided_slice %499 {offsets = [0, 16], sizes = [2, 16], strides = [1, 1]} : vector<2x48xf32> to vector<2x16xf32>
    %502 = vector.extract_strided_slice %499 {offsets = [0, 32], sizes = [2, 16], strides = [1, 1]} : vector<2x48xf32> to vector<2x16xf32>
    %503 = vector.extract_strided_slice %493 {offsets = [0, 48], sizes = [2, 16], strides = [1, 1]} : vector<2x64xf32> to vector<2x16xf32>
    %504 = math.tanh %503 : vector<2x16xf32>
    %505 = arith.mulf %501, %489 : vector<2x16xf32>
    %506 = arith.mulf %500, %504 : vector<2x16xf32>
    %507 = arith.addf %505, %506 : vector<2x16xf32>
    %508 = math.tanh %507 : vector<2x16xf32>
    %509 = arith.mulf %502, %508 : vector<2x16xf32>
    %cst_126 = arith.constant dense<0.000000e+00> : vector<2x64xf32>
    %510 = tpu.matmul %509, %5, %cst_126 {dimension_numbers = #tpu.dot_dimension_numbers<[1], [0], [0], [1], [0, 0, 1, 1], [], []>} : vector<2x16xf32>, vector<16x64xf32>, vector<2x64xf32> -> vector<2x64xf32>
    %511 = arith.addf %250, %510 : vector<2x64xf32>
    %512 = vector.extract_strided_slice %511 {offsets = [0, 0], sizes = [2, 48], strides = [1, 1]} : vector<2x64xf32> to vector<2x48xf32>
    %513 = arith.negf %512 : vector<2x48xf32>
    %514 = math.exp %513 : vector<2x48xf32>
    %cst_127 = arith.constant 1.000000e+00 : f32
    %515 = vector.broadcast %cst_127 : f32 to vector<2x48xf32>
    %516 = arith.addf %515, %514 : vector<2x48xf32>
    %517 = arith.divf %515, %516 : vector<2x48xf32>
    %518 = vector.extract_strided_slice %517 {offsets = [0, 0], sizes = [2, 16], strides = [1, 1]} : vector<2x48xf32> to vector<2x16xf32>
    %519 = vector.extract_strided_slice %517 {offsets = [0, 16], sizes = [2, 16], strides = [1, 1]} : vector<2x48xf32> to vector<2x16xf32>
    %520 = vector.extract_strided_slice %517 {offsets = [0, 32], sizes = [2, 16], strides = [1, 1]} : vector<2x48xf32> to vector<2x16xf32>
    %521 = vector.extract_strided_slice %511 {offsets = [0, 48], sizes = [2, 16], strides = [1, 1]} : vector<2x64xf32> to vector<2x16xf32>
    %522 = math.tanh %521 : vector<2x16xf32>
    %523 = arith.mulf %519, %507 : vector<2x16xf32>
    %524 = arith.mulf %518, %522 : vector<2x16xf32>
    %525 = arith.addf %523, %524 : vector<2x16xf32>
    %526 = math.tanh %525 : vector<2x16xf32>
    %527 = arith.mulf %520, %526 : vector<2x16xf32>
    %cst_128 = arith.constant dense<0.000000e+00> : vector<2x64xf32>
    %528 = tpu.matmul %527, %5, %cst_128 {dimension_numbers = #tpu.dot_dimension_numbers<[1], [0], [0], [1], [0, 0, 1, 1], [], []>} : vector<2x16xf32>, vector<16x64xf32>, vector<2x64xf32> -> vector<2x64xf32>
    %529 = arith.addf %298, %528 : vector<2x64xf32>
    %530 = vector.extract_strided_slice %529 {offsets = [0, 0], sizes = [2, 48], strides = [1, 1]} : vector<2x64xf32> to vector<2x48xf32>
    %531 = arith.negf %530 : vector<2x48xf32>
    %532 = math.exp %531 : vector<2x48xf32>
    %cst_129 = arith.constant 1.000000e+00 : f32
    %533 = vector.broadcast %cst_129 : f32 to vector<2x48xf32>
    %534 = arith.addf %533, %532 : vector<2x48xf32>
    %535 = arith.divf %533, %534 : vector<2x48xf32>
    %536 = vector.extract_strided_slice %535 {offsets = [0, 0], sizes = [2, 16], strides = [1, 1]} : vector<2x48xf32> to vector<2x16xf32>
    %537 = vector.extract_strided_slice %535 {offsets = [0, 16], sizes = [2, 16], strides = [1, 1]} : vector<2x48xf32> to vector<2x16xf32>
    %538 = vector.extract_strided_slice %535 {offsets = [0, 32], sizes = [2, 16], strides = [1, 1]} : vector<2x48xf32> to vector<2x16xf32>
    %539 = vector.extract_strided_slice %529 {offsets = [0, 48], sizes = [2, 16], strides = [1, 1]} : vector<2x64xf32> to vector<2x16xf32>
    %540 = math.tanh %539 : vector<2x16xf32>
    %541 = arith.mulf %537, %525 : vector<2x16xf32>
    %542 = arith.mulf %536, %540 : vector<2x16xf32>
    %543 = arith.addf %541, %542 : vector<2x16xf32>
    %544 = math.tanh %543 : vector<2x16xf32>
    %545 = arith.mulf %538, %544 : vector<2x16xf32>
    %cst_130 = arith.constant dense<0.000000e+00> : vector<2x64xf32>
    %546 = tpu.matmul %545, %5, %cst_130 {dimension_numbers = #tpu.dot_dimension_numbers<[1], [0], [0], [1], [0, 0, 1, 1], [], []>} : vector<2x16xf32>, vector<16x64xf32>, vector<2x64xf32> -> vector<2x64xf32>
    %547 = arith.addf %346, %546 : vector<2x64xf32>
    %548 = vector.extract_strided_slice %547 {offsets = [0, 0], sizes = [2, 48], strides = [1, 1]} : vector<2x64xf32> to vector<2x48xf32>
    %549 = arith.negf %548 : vector<2x48xf32>
    %550 = math.exp %549 : vector<2x48xf32>
    %cst_131 = arith.constant 1.000000e+00 : f32
    %551 = vector.broadcast %cst_131 : f32 to vector<2x48xf32>
    %552 = arith.addf %551, %550 : vector<2x48xf32>
    %553 = arith.divf %551, %552 : vector<2x48xf32>
    %554 = vector.extract_strided_slice %553 {offsets = [0, 0], sizes = [2, 16], strides = [1, 1]} : vector<2x48xf32> to vector<2x16xf32>
    %555 = vector.extract_strided_slice %553 {offsets = [0, 16], sizes = [2, 16], strides = [1, 1]} : vector<2x48xf32> to vector<2x16xf32>
    %556 = vector.extract_strided_slice %553 {offsets = [0, 32], sizes = [2, 16], strides = [1, 1]} : vector<2x48xf32> to vector<2x16xf32>
    %557 = vector.extract_strided_slice %547 {offsets = [0, 48], sizes = [2, 16], strides = [1, 1]} : vector<2x64xf32> to vector<2x16xf32>
    %558 = math.tanh %557 : vector<2x16xf32>
    %559 = arith.mulf %555, %543 : vector<2x16xf32>
    %560 = arith.mulf %554, %558 : vector<2x16xf32>
    %561 = arith.addf %559, %560 : vector<2x16xf32>
    %562 = math.tanh %561 : vector<2x16xf32>
    %563 = arith.mulf %556, %562 : vector<2x16xf32>
    %cst_132 = arith.constant dense<0.000000e+00> : vector<2x64xf32>
    %564 = tpu.matmul %563, %5, %cst_132 {dimension_numbers = #tpu.dot_dimension_numbers<[1], [0], [0], [1], [0, 0, 1, 1], [], []>} : vector<2x16xf32>, vector<16x64xf32>, vector<2x64xf32> -> vector<2x64xf32>
    %565 = arith.addf %394, %564 : vector<2x64xf32>
    %566 = vector.extract_strided_slice %565 {offsets = [0, 0], sizes = [2, 48], strides = [1, 1]} : vector<2x64xf32> to vector<2x48xf32>
    %567 = arith.negf %566 : vector<2x48xf32>
    %568 = math.exp %567 : vector<2x48xf32>
    %cst_133 = arith.constant 1.000000e+00 : f32
    %569 = vector.broadcast %cst_133 : f32 to vector<2x48xf32>
    %570 = arith.addf %569, %568 : vector<2x48xf32>
    %571 = arith.divf %569, %570 : vector<2x48xf32>
    %572 = vector.extract_strided_slice %571 {offsets = [0, 0], sizes = [2, 16], strides = [1, 1]} : vector<2x48xf32> to vector<2x16xf32>
    %573 = vector.extract_strided_slice %571 {offsets = [0, 16], sizes = [2, 16], strides = [1, 1]} : vector<2x48xf32> to vector<2x16xf32>
    %574 = vector.extract_strided_slice %571 {offsets = [0, 32], sizes = [2, 16], strides = [1, 1]} : vector<2x48xf32> to vector<2x16xf32>
    %575 = vector.extract_strided_slice %565 {offsets = [0, 48], sizes = [2, 16], strides = [1, 1]} : vector<2x64xf32> to vector<2x16xf32>
    %576 = math.tanh %575 : vector<2x16xf32>
    %577 = arith.mulf %573, %561 : vector<2x16xf32>
    %578 = arith.mulf %572, %576 : vector<2x16xf32>
    %579 = arith.addf %577, %578 : vector<2x16xf32>
    %580 = math.tanh %579 : vector<2x16xf32>
    %581 = arith.mulf %574, %580 : vector<2x16xf32>
    %582 = vector.broadcast %19 : vector<2x1xf32> to vector<2x16xf32>
    %583 = vector.broadcast %7 : vector<1x16xf32> to vector<2x16xf32>
    %584 = arith.mulf %582, %583 : vector<2x16xf32>
    %c5_134 = arith.constant 5 : index
    %c0_135 = arith.constant 0 : index
    %585 = vector.load %arg8[%c5_134, %c0_135] : memref<16x320xf32, #tpu.memory_space<vmem>>, vector<1x16xf32>
    %586 = vector.broadcast %585 : vector<1x16xf32> to vector<2x16xf32>
    %587 = arith.addf %584, %586 : vector<2x16xf32>
    %cst_136 = arith.constant 0.000000e+00 : f32
    %588 = vector.broadcast %cst_136 : f32 to vector<2x16xf32>
    %589 = arith.maximumf %587, %588 : vector<2x16xf32>
    %590 = arith.addf %589, %435 : vector<2x16xf32>
    %591 = arith.addf %590, %581 : vector<2x16xf32>
    %cst_137 = arith.constant dense<0.000000e+00> : vector<2x64xf32>
    %592 = tpu.matmul %591, %3, %cst_137 {dimension_numbers = #tpu.dot_dimension_numbers<[1], [0], [0], [1], [0, 0, 1, 1], [], []>} : vector<2x16xf32>, vector<16x64xf32>, vector<2x64xf32> -> vector<2x64xf32>
    %c6_138 = arith.constant 6 : index
    %c0_139 = arith.constant 0 : index
    %593 = vector.load %arg8[%c6_138, %c0_139] : memref<16x320xf32, #tpu.memory_space<vmem>>, vector<1x64xf32>
    %594 = vector.broadcast %593 : vector<1x64xf32> to vector<2x64xf32>
    %595 = arith.addf %592, %594 : vector<2x64xf32>
    %cst_140 = arith.constant 0.000000e+00 : f32
    %596 = vector.broadcast %cst_140 : f32 to vector<2x64xf32>
    %597 = arith.maximumf %595, %596 : vector<2x64xf32>
    %cst_141 = arith.constant dense<0.000000e+00> : vector<2x320xf32>
    %598 = tpu.matmul %597, %1, %cst_141 {dimension_numbers = #tpu.dot_dimension_numbers<[1], [0], [0], [1], [0, 0, 1, 1], [], []>} : vector<2x64xf32>, vector<64x320xf32>, vector<2x320xf32> -> vector<2x320xf32>
    %c7_142 = arith.constant 7 : index
    %c0_143 = arith.constant 0 : index
    %599 = vector.load %arg8[%c7_142, %c0_143] : memref<16x320xf32, #tpu.memory_space<vmem>>, vector<1x320xf32>
    %600 = vector.broadcast %599 : vector<1x320xf32> to vector<2x320xf32>
    %601 = arith.addf %598, %600 : vector<2x320xf32>
    %cst_144 = arith.constant 0.000000e+00 : f32
    %602 = vector.broadcast %cst_144 : f32 to vector<2x320xf32>
    %603 = arith.maximumf %601, %602 : vector<2x320xf32>
    %cst_145 = arith.constant dense<0.000000e+00> : vector<2x10xf32>
    %604 = tpu.matmul %603, %11, %cst_145 {dimension_numbers = #tpu.dot_dimension_numbers<[1], [0], [0], [1], [0, 0, 1, 1], [], []>} : vector<2x320xf32>, vector<320x10xf32>, vector<2x10xf32> -> vector<2x10xf32>
    %c8 = arith.constant 8 : index
    %c0_146 = arith.constant 0 : index
    %605 = vector.load %arg8[%c8, %c0_146] : memref<16x320xf32, #tpu.memory_space<vmem>>, vector<1x10xf32>
    %606 = vector.broadcast %605 : vector<1x10xf32> to vector<2x10xf32>
    %607 = arith.addf %604, %606 : vector<2x10xf32>
    %cst_147 = arith.constant 0.000000e+00 : f32
    %608 = vector.broadcast %cst_147 : f32 to vector<2x10xf32>
    %609 = arith.maximumf %607, %608 : vector<2x10xf32>
    %cst_148 = arith.constant dense<0xFF800000> : vector<2xf32>
    %610 = vector.multi_reduction <maximumf>, %609, %cst_148 [1] : vector<2x10xf32> to vector<2xf32>
    %611 = vector.shape_cast %610 : vector<2xf32> to vector<2x1xf32>
    %612 = vector.broadcast %611 : vector<2x1xf32> to vector<2x10xf32>
    %613 = arith.subf %609, %612 : vector<2x10xf32>
    %614 = math.exp %613 : vector<2x10xf32>
    %cst_149 = arith.constant dense<0.000000e+00> : vector<2xf32>
    %615 = vector.multi_reduction <add>, %614, %cst_149 [1] : vector<2x10xf32> to vector<2xf32>
    %616 = vector.shape_cast %615 : vector<2xf32> to vector<2x1xf32>
    %617 = math.log %616 : vector<2x1xf32>
    %618 = vector.broadcast %617 : vector<2x1xf32> to vector<2x10xf32>
    %619 = arith.subf %613, %618 : vector<2x10xf32>
    %c0_150 = arith.constant 0 : index
    %c0_151 = arith.constant 0 : index
    %620 = vector.load %arg9[%c0_150, %c0_151] : memref<2x10xf32, #tpu.memory_space<vmem>>, vector<2x10xf32>
    tpu.vector_store %arg9[%c0_150, %c0_151], %619 {strides = array<i32>} : memref<2x10xf32, #tpu.memory_space<vmem>>, vector<2x10xf32>,
    %621 = arith.sitofp %45 : vector<2x10xi32> to vector<2x10xf32>
    %622 = vector.broadcast %611 : vector<2x1xf32> to vector<2x10xf32>
    %623 = arith.cmpf oeq, %609, %622 : vector<2x10xf32>
    %cst_152 = arith.constant 1.000000e+01 : f32
    %624 = vector.broadcast %cst_152 : f32 to vector<2x10xf32>
    %625 = arith.select %623, %621, %624 : vector<2x10xi1>, vector<2x10xf32>
    %cst_153 = arith.constant dense<0x7F800000> : vector<2xf32>
    %626 = vector.multi_reduction <minimumf>, %625, %cst_153 [1] : vector<2x10xf32> to vector<2xf32>
    %627 = vector.shape_cast %626 : vector<2xf32> to vector<2x1xf32>
    %628 = vector.broadcast %627 : vector<2x1xf32> to vector<2x10xf32>
    %629 = arith.cmpf oeq, %621, %628 : vector<2x10xf32>
    %630 = arith.extui %629 : vector<2x10xi1> to vector<2x10xi32>
    %631 = arith.sitofp %630 : vector<2x10xi32> to vector<2x10xf32>
    %cst_154 = arith.constant dense<0.000000e+00> : vector<2x16xf32>
    %632 = tpu.matmul %631, %44, %cst_154 {dimension_numbers = #tpu.dot_dimension_numbers<[1], [0], [0], [1], [0, 0, 1, 1], [], []>} : vector<2x10xf32>, vector<10x16xf32>, vector<2x16xf32> -> vector<2x16xf32>
    %633 = vector.extract_strided_slice %18 {offsets = [0, 0], sizes = [2, 1], strides = [1, 1]} : vector<2x4xf32> to vector<2x1xf32>
    %634 = vector.broadcast %633 : vector<2x1xf32> to vector<2x16xf32>
    %635 = vector.broadcast %8 : vector<1x16xf32> to vector<2x16xf32>
    %636 = arith.mulf %634, %635 : vector<2x16xf32>
    %637 = vector.extract_strided_slice %18 {offsets = [0, 2], sizes = [2, 1], strides = [1, 1]} : vector<2x4xf32> to vector<2x1xf32>
    %638 = vector.broadcast %637 : vector<2x1xf32> to vector<2x16xf32>
    %639 = vector.broadcast %9 : vector<1x16xf32> to vector<2x16xf32>
    %640 = arith.mulf %638, %639 : vector<2x16xf32>
    %641 = arith.addf %636, %640 : vector<2x16xf32>
    %642 = vector.extract_strided_slice %18 {offsets = [0, 3], sizes = [2, 1], strides = [1, 1]} : vector<2x4xf32> to vector<2x1xf32>
    %643 = vector.broadcast %642 : vector<2x1xf32> to vector<2x16xf32>
    %644 = vector.broadcast %10 : vector<1x16xf32> to vector<2x16xf32>
    %645 = arith.mulf %643, %644 : vector<2x16xf32>
    %646 = arith.addf %641, %645 : vector<2x16xf32>
    %c9 = arith.constant 9 : index
    %c0_155 = arith.constant 0 : index
    %647 = vector.load %arg8[%c9, %c0_155] : memref<16x320xf32, #tpu.memory_space<vmem>>, vector<1x16xf32>
    %648 = vector.broadcast %647 : vector<1x16xf32> to vector<2x16xf32>
    %649 = arith.addf %646, %648 : vector<2x16xf32>
    %cst_156 = arith.constant 0.000000e+00 : f32
    %650 = vector.broadcast %cst_156 : f32 to vector<2x16xf32>
    %651 = arith.maximumf %649, %650 : vector<2x16xf32>
    %652 = arith.addf %435, %632 : vector<2x16xf32>
    %653 = arith.addf %651, %652 : vector<2x16xf32>
    %654 = arith.addf %653, %581 : vector<2x16xf32>
    %cst_157 = arith.constant dense<0.000000e+00> : vector<2x8xf32>
    %655 = tpu.matmul %654, %12, %cst_157 {dimension_numbers = #tpu.dot_dimension_numbers<[1], [0], [0], [1], [0, 0, 1, 1], [], []>} : vector<2x16xf32>, vector<16x8xf32>, vector<2x8xf32> -> vector<2x8xf32>
    %c10 = arith.constant 10 : index
    %c0_158 = arith.constant 0 : index
    %656 = vector.load %arg8[%c10, %c0_158] : memref<16x320xf32, #tpu.memory_space<vmem>>, vector<1x8xf32>
    %657 = vector.broadcast %656 : vector<1x8xf32> to vector<2x8xf32>
    %658 = arith.addf %655, %657 : vector<2x8xf32>
    %cst_159 = arith.constant 0.000000e+00 : f32
    %659 = vector.broadcast %cst_159 : f32 to vector<2x8xf32>
    %660 = arith.maximumf %658, %659 : vector<2x8xf32>
    %661 = vector.broadcast %13 : vector<1x8xf32> to vector<2x8xf32>
    %662 = arith.mulf %660, %661 : vector<2x8xf32>
    %cst_160 = arith.constant dense<0.000000e+00> : vector<2xf32>
    %663 = vector.multi_reduction <add>, %662, %cst_160 [1] : vector<2x8xf32> to vector<2xf32>
    %664 = vector.shape_cast %663 : vector<2xf32> to vector<2x1xf32>
    %c11 = arith.constant 11 : index
    %c0_161 = arith.constant 0 : index
    %665 = vector.load %arg8[%c11, %c0_161] : memref<16x320xf32, #tpu.memory_space<vmem>>, vector<1x1xf32>
    %666 = vector.broadcast %665 : vector<1x1xf32> to vector<2x1xf32>
    %667 = arith.addf %664, %666 : vector<2x1xf32>
    %cst_162 = arith.constant 0.000000e+00 : f32
    %668 = vector.broadcast %cst_162 : f32 to vector<2x1xf32>
    %669 = arith.maximumf %667, %668 : vector<2x1xf32>
    %c0_163 = arith.constant 0 : index
    %c0_164 = arith.constant 0 : index
    %670 = vector.load %arg10[%c0_163, %c0_164] : memref<2x1xf32, #tpu.memory_space<vmem>>, vector<2x1xf32>
    tpu.vector_store %arg10[%c0_163, %c0_164], %669 {strides = array<i32>} : memref<2x1xf32, #tpu.memory_space<vmem>>, vector<2x1xf32>,
    return
  }
}

</mosaic_0001>

<llo_original>
// kernel: seqattn_forward.1
$region0: #{seqattn_forward.1}
  #allocation0 [shape = 'u32[]', space=smem, size = 0x4, offset = 0x4, fixed_abs, tag = 'smem constant byte address 0x4 - core index']
  #allocation1 [shape = 'u32[144,128]{1,0:T(1,128)}', space=vmem, size = 0x12000, scoped, tag = 'internal scratch']
  %s0 = inlined_call_operand.vmem [shape: s32[2,8], index: 0, kind: input, shape index: {}]
  %s1 = inlined_call_operand.vmem [shape: f32[8,2,4], index: 1, kind: input, shape index: {}]
  %s2 = inlined_call_operand.vmem [shape: f32[2,4], index: 2, kind: input, shape index: {}]
  %s3 = inlined_call_operand.vmem [shape: f32[80,320], index: 3, kind: input, shape index: {}]
  %s4 = inlined_call_operand.vmem [shape: f32[320,160], index: 4, kind: input, shape index: {}]
  %s5 = inlined_call_operand.vmem [shape: f32[48,64], index: 5, kind: input, shape index: {}]
  %s6 = inlined_call_operand.vmem [shape: f32[496,16], index: 6, kind: input, shape index: {}]
  %s7 = inlined_call_operand.vmem [shape: f32[40,8], index: 7, kind: input, shape index: {}]
  %s8 = inlined_call_operand.vmem [shape: f32[16,320], index: 8, kind: input, shape index: {}]
  %s9 = inlined_call_operand.hbm [shape: f32[2,10], index: 9, kind: output, shape index: {0}]
  %s10 = inlined_call_operand.vmem [shape: f32[2,1], index: 10, kind: output, shape index: {1}]
  %11 = xla_tuple %s9, %s10
  %s12 = sld [smem:[#allocation0]]
  $region54: #{seqattn_forward.1} parent=0
    _
  %s14 = ssub.s32 1, %s12
  %s15 = scalar_select 0, %s14, %s12
  $region1: #{seqattn_forward.1} parent=0
    #allocation2 [shape = 'u8[1024]{0}', space=vmem, size = 0x400, scoped, tag = 'output window, operand 0, single buffered']
    #allocation3 [shape = 's32[1]{0}', space=sflag, size = 0x4, scoped, tag = 'scoped memory for seqattn_forward.1']
    %16 = vsyncpa [#allocation3], 0
    // Predicated region
    $region2: #{seqattn_forward.1} parent=1 // pred_check
      _
    $region3: #{seqattn_forward.1} parent=1 // pred_check_branch
      %18 = sbr.rel (0) target = $region5
    $region4: #{seqattn_forward.1} parent=1 // pred_region
      _
    $region5: #{seqattn_forward.1} parent=1 // pred_fallthru
      _
    // Predicated region
    $region6: #{seqattn_forward.1} parent=1 // pred_check
      _
    $region7: #{seqattn_forward.1} parent=1 // pred_check_branch
      %20 = sbr.rel (0) target = $region9
    $region8: #{seqattn_forward.1} parent=1 // pred_region
      _
    $region9: #{seqattn_forward.1} parent=1 // pred_fallthru
      _
    // Predicated region
    $region10: #{seqattn_forward.1} parent=1 // pred_check
      _
    $region11: #{seqattn_forward.1} parent=1 // pred_check_branch
      %22 = sbr.rel (0) target = $region13
    $region12: #{seqattn_forward.1} parent=1 // pred_region
      _
    $region13: #{seqattn_forward.1} parent=1 // pred_fallthru
      _
    // Predicated region
    $region14: #{seqattn_forward.1} parent=1 // pred_check
      _
    $region15: #{seqattn_forward.1} parent=1 // pred_check_branch
      %24 = sbr.rel (0) target = $region17
    $region16: #{seqattn_forward.1} parent=1 // pred_region
      _
    $region17: #{seqattn_forward.1} parent=1 // pred_fallthru
      _
    // Predicated region
    $region18: #{seqattn_forward.1} parent=1 // pred_check
      _
    $region19: #{seqattn_forward.1} parent=1 // pred_check_branch
      %26 = sbr.rel (0) target = $region21
    $region20: #{seqattn_forward.1} parent=1 // pred_region
      _
    $region21: #{seqattn_forward.1} parent=1 // pred_fallthru
      _
    // Predicated region
    $region22: #{seqattn_forward.1} parent=1 // pred_check
      _
    $region23: #{seqattn_forward.1} parent=1 // pred_check_branch
      %28 = sbr.rel (0) target = $region25
    $region24: #{seqattn_forward.1} parent=1 // pred_region
      _
    $region25: #{seqattn_forward.1} parent=1 // pred_fallthru
      _
    // Predicated region
    $region26: #{seqattn_forward.1} parent=1 // pred_check
      _
    $region27: #{seqattn_forward.1} parent=1 // pred_check_branch
      %30 = sbr.rel (0) target = $region29
    $region28: #{seqattn_forward.1} parent=1 // pred_region
      _
    $region29: #{seqattn_forward.1} parent=1 // pred_fallthru
      _
    // Predicated region
    $region30: #{seqattn_forward.1} parent=1 // pred_check
      _
    $region31: #{seqattn_forward.1} parent=1 // pred_check_branch
      %32 = sbr.rel (0) target = $region33
    $region32: #{seqattn_forward.1} parent=1 // pred_region
      _
    $region33: #{seqattn_forward.1} parent=1 // pred_fallthru
      _
    // Predicated region
    $region34: #{seqattn_forward.1} parent=1 // pred_check
      _
    $region35: #{seqattn_forward.1} parent=1 // pred_check_branch
      %34 = sbr.rel (0) target = $region37
    $region36: #{seqattn_forward.1} parent=1 // pred_region
      _
    $region37: #{seqattn_forward.1} parent=1 // pred_fallthru
      _
    %v35 = vld [vmem:[%s3] sm:$0xff]
    %v36 = vld [vmem:[%s3 + $0x8] sm:$0xff]
    %v37 = vld [vmem:[%s3 + $0x10] sm:$0xff]
    %v38 = vld [vmem:[%s3 + $0x18] sm:$0x3]
    %v39 = vld [vmem:[%s3 + $0x20] sm:$0x3]
    %v40 = vld [vmem:[%s3 + $0x28] sm:$0x3]
    %v41 = vld [vmem:[%s3 + $0x30] sm:$0xff]
    %v42 = vld [vmem:[%s3 + $0x38] sm:$0xff]
    %v43 = vld [vmem:[%s3 + $0x40] sm:$0xff]
    %v44 = vld [vmem:[%s3 + $0x48] sm:$0xff]
    %v45 = vld [vmem:[%s3 + $0x50] sm:$0xff]
    %v46 = vld [vmem:[%s3 + $0x58] sm:$0xff]
    %v47 = vld [vmem:[%s3 + $0x60] sm:$0xff]
    %v48 = vld [vmem:[%s3 + $0x68] sm:$0xff]
    %v49 = vld [vmem:[%s3 + $0x70] sm:$0xff]
    %v50 = vld [vmem:[%s3 + $0x78] sm:$0xff]
    %v51 = vld [vmem:[%s3 + $0x80] sm:$0xff]
    %v52 = vld [vmem:[%s3 + $0x88] sm:$0xff]
    %v53 = vld [vmem:[%s3 + $0x90] sm:$0xff]
    %v54 = vld [vmem:[%s3 + $0x98] sm:$0xff]
    %v55 = vld [vmem:[%s3 + $0xa0] sm:$0xff]
    %v56 = vld [vmem:[%s3 + $0xa8] sm:$0xff]
    %v57 = vld [vmem:[%s3 + $0xb0] sm:$0xff]
    %v58 = vld [vmem:[%s3 + $0xb8] sm:$0xff]
    %v59 = vld [vmem:[%s3 + $0xc0] sm:$0xff]
    %v60 = vld [vmem:[%s3 + $0xc8] sm:$0xff]
    %v61 = vld [vmem:[%s3 + $0xd0] sm:$0xff]
    %v62 = vld [vmem:[%s3 + $0xd8] sm:$0xff]
    %v63 = vld [vmem:[%s3 + $0xe0] sm:$0xff]
    %v64 = vld [vmem:[%s3 + $0xe8] sm:$0xff]
    %v65 = vld [vmem:[%s4] sm:$0xff]
    %v66 = vld [vmem:[%s4 + $0x8] sm:$0xff]
    %v67 = vld [vmem:[%s4 + $0x10] sm:$0xff]
    %v68 = vld [vmem:[%s4 + $0x18] sm:$0xff]
    %v69 = vld [vmem:[%s4 + $0x20] sm:$0xff]
    %v70 = vld [vmem:[%s4 + $0x28] sm:$0xff]
    %v71 = vld [vmem:[%s4 + $0x30] sm:$0xff]
    %v72 = vld [vmem:[%s4 + $0x38] sm:$0xff]
    %v73 = vld [vmem:[%s4 + $0x40] sm:$0xff]
    %v74 = vld [vmem:[%s4 + $0x48] sm:$0xff]
    %v75 = vld [vmem:[%s4 + $0x50] sm:$0xff]
    %v76 = vld [vmem:[%s4 + $0x58] sm:$0xff]
    %v77 = vld [vmem:[%s4 + $0x60] sm:$0xff]
    %v78 = vld [vmem:[%s4 + $0x68] sm:$0xff]
    %v79 = vld [vmem:[%s4 + $0x70] sm:$0xff]
    %v80 = vld [vmem:[%s4 + $0x78] sm:$0xff]
    %v81 = vld [vmem:[%s4 + $0x80] sm:$0xff]
    %v82 = vld [vmem:[%s4 + $0x88] sm:$0xff]
    %v83 = vld [vmem:[%s4 + $0x90] sm:$0xff]
    %v84 = vld [vmem:[%s4 + $0x98] sm:$0xff]
    %v85 = vld [vmem:[%s4 + $0xa0] sm:$0xff]
    %v86 = vld [vmem:[%s4 + $0xa8] sm:$0xff]
    %v87 = vld [vmem:[%s4 + $0xb0] sm:$0xff]
    %v88 = vld [vmem:[%s4 + $0xb8] sm:$0xff]
    %v89 = vld [vmem:[%s4 + $0xc0] sm:$0xff]
    %v90 = vld [vmem:[%s4 + $0xc8] sm:$0xff]
    %v91 = vld [vmem:[%s4 + $0xd0] sm:$0xff]
    %v92 = vld [vmem:[%s4 + $0xd8] sm:$0xff]
    %v93 = vld [vmem:[%s4 + $0xe0] sm:$0xff]
    %v94 = vld [vmem:[%s4 + $0xe8] sm:$0xff]
    %v95 = vld [vmem:[%s4 + $0xf0] sm:$0xff]
    %v96 = vld [vmem:[%s4 + $0xf8] sm:$0xff]
    %v97 = vld [vmem:[%s4 + $0x100] sm:$0xff]
    %v98 = vld [vmem:[%s4 + $0x108] sm:$0xff]
    %v99 = vld [vmem:[%s4 + $0x110] sm:$0xff]
    %v100 = vld [vmem:[%s4 + $0x118] sm:$0xff]
    %v101 = vld [vmem:[%s4 + $0x120] sm:$0xff]
    %v102 = vld [vmem:[%s4 + $0x128] sm:$0xff]
    %v103 = vld [vmem:[%s4 + $0x130] sm:$0xff]
    %v104 = vld [vmem:[%s4 + $0x138] sm:$0xff]
    %v105 = vld [vmem:[%s4 + $0x140] sm:$0xff]
    %v106 = vld [vmem:[%s4 + $0x148] sm:$0xff]
    %v107 = vld [vmem:[%s4 + $0x150] sm:$0xff]
    %v108 = vld [vmem:[%s4 + $0x158] sm:$0xff]
    %v109 = vld [vmem:[%s4 + $0x160] sm:$0xff]
    %v110 = vld [vmem:[%s4 + $0x168] sm:$0xff]
    %v111 = vld [vmem:[%s4 + $0x170] sm:$0xff]
    %v112 = vld [vmem:[%s4 + $0x178] sm:$0xff]
    %v113 = vld [vmem:[%s4 + $0x180] sm:$0xff]
    %v114 = vld [vmem:[%s4 + $0x188] sm:$0xff]
    %v115 = vld [vmem:[%s4 + $0x190] sm:$0xff]
    %v116 = vld [vmem:[%s4 + $0x198] sm:$0xff]
    %v117 = vld [vmem:[%s4 + $0x1a0] sm:$0xff]
    %v118 = vld [vmem:[%s4 + $0x1a8] sm:$0xff]
    %v119 = vld [vmem:[%s4 + $0x1b0] sm:$0xff]
    %v120 = vld [vmem:[%s4 + $0x1b8] sm:$0xff]
    %v121 = vld [vmem:[%s4 + $0x1c0] sm:$0xff]
    %v122 = vld [vmem:[%s4 + $0x1c8] sm:$0xff]
    %v123 = vld [vmem:[%s4 + $0x1d0] sm:$0xff]
    %v124 = vld [vmem:[%s4 + $0x1d8] sm:$0xff]
    %v125 = vld [vmem:[%s4 + $0x1e0] sm:$0xff]
    %v126 = vld [vmem:[%s4 + $0x1e8] sm:$0xff]
    %v127 = vld [vmem:[%s4 + $0x1f0] sm:$0xff]
    %v128 = vld [vmem:[%s4 + $0x1f8] sm:$0xff]
    %v129 = vld [vmem:[%s4 + $0x200] sm:$0xff]
    %v130 = vld [vmem:[%s4 + $0x208] sm:$0xff]
    %v131 = vld [vmem:[%s4 + $0x210] sm:$0xff]
    %v132 = vld [vmem:[%s4 + $0x218] sm:$0xff]
    %v133 = vld [vmem:[%s4 + $0x220] sm:$0xff]
    %v134 = vld [vmem:[%s4 + $0x228] sm:$0xff]
    %v135 = vld [vmem:[%s4 + $0x230] sm:$0xff]
    %v136 = vld [vmem:[%s4 + $0x238] sm:$0xff]
    %v137 = vld [vmem:[%s4 + $0x240] sm:$0xff]
    %v138 = vld [vmem:[%s4 + $0x248] sm:$0xff]
    %v139 = vld [vmem:[%s4 + $0x250] sm:$0xff]
    %v140 = vld [vmem:[%s4 + $0x258] sm:$0xff]
    %v141 = vld [vmem:[%s4 + $0x260] sm:$0xff]
    %v142 = vld [vmem:[%s4 + $0x268] sm:$0xff]
    %v143 = vld [vmem:[%s4 + $0x270] sm:$0xff]
    %v144 = vld [vmem:[%s4 + $0x278] sm:$0xff]
    %v145 = vld [vmem:[%s5] sm:$0xff]
    %v146 = vld [vmem:[%s5 + $0x8] sm:$0xff]
    %v147 = vld [vmem:[%s5 + $0x10] sm:$0xff]
    %v148 = vld [vmem:[%s5 + $0x18] sm:$0x3]
    %v149 = vld [vmem:[%s5 + $0x20] sm:$0xff]
    %v150 = vld [vmem:[%s5 + $0x28] sm:$0xff]
    %v151 = vld [vmem:[%s6] sm:$0xff]
    %v152 = vld [vmem:[%s6 + $0x8] sm:$0xff]
    %v153 = vld [vmem:[%s6 + $0x10] sm:$0xff]
    %v154 = vld [vmem:[%s6 + $0x18] sm:$0xff]
    %v155 = vld [vmem:[%s6 + $0x20] sm:$0xff]
    %v156 = vld [vmem:[%s6 + $0x28] sm:$0xff]
    %v157 = vld [vmem:[%s6 + $0x30] sm:$0xff]
    %v158 = vld [vmem:[%s6 + $0x38] sm:$0xff]
    %v159 = vld [vmem:[%s6 + $0x40] sm:$0xff]
    %v160 = vld [vmem:[%s6 + $0x48] sm:$0xff]
    %v161 = vld [vmem:[%s6 + $0x50] sm:$0xff]
    %v162 = vld [vmem:[%s6 + $0x58] sm:$0xff]
    %v163 = vld [vmem:[%s6 + $0x60] sm:$0xff]
    %v164 = vld [vmem:[%s6 + $0x68] sm:$0xff]
    %v165 = vld [vmem:[%s6 + $0x70] sm:$0xff]
    %v166 = vld [vmem:[%s6 + $0x78] sm:$0xff]
    %v167 = vld [vmem:[%s6 + $0x80] sm:$0xff]
    %v168 = vld [vmem:[%s6 + $0x88] sm:$0xff]
    %v169 = vld [vmem:[%s6 + $0x90] sm:$0xff]
    %v170 = vld [vmem:[%s6 + $0x98] sm:$0xff]
    %v171 = vld [vmem:[%s6 + $0xa0] sm:$0x1]
    %v172 = vld [vmem:[%s6 + $0xa8] sm:$0x1]
    %v173 = vld [vmem:[%s6 + $0xa9] sm:$0x1]
    %v174 = vld [vmem:[%s6 + $0xaa] sm:$0x1]
    %v175 = vld [vmem:[%s6 + $0xb0] sm:$0xff]
    %v176 = vld [vmem:[%s6 + $0xb8] sm:$0xff]
    %v177 = vld [vmem:[%s6 + $0xc0] sm:$0xff]
    %v178 = vld [vmem:[%s6 + $0xc8] sm:$0xff]
    %v179 = vld [vmem:[%s6 + $0xd0] sm:$0xff]
    %v180 = vld [vmem:[%s6 + $0xd8] sm:$0xff]
    %v181 = vld [vmem:[%s6 + $0xe0] sm:$0xff]
    %v182 = vld [vmem:[%s6 + $0xe8] sm:$0xff]
    %v183 = vld [vmem:[%s6 + $0xf0] sm:$0xff]
    %v184 = vld [vmem:[%s6 + $0xf8] sm:$0xff]
    %v185 = vld [vmem:[%s6 + $0x100] sm:$0xff]
    %v186 = vld [vmem:[%s6 + $0x108] sm:$0xff]
    %v187 = vld [vmem:[%s6 + $0x110] sm:$0xff]
    %v188 = vld [vmem:[%s6 + $0x118] sm:$0xff]
    %v189 = vld [vmem:[%s6 + $0x120] sm:$0xff]
    %v190 = vld [vmem:[%s6 + $0x128] sm:$0xff]
    %v191 = vld [vmem:[%s6 + $0x130] sm:$0xff]
    %v192 = vld [vmem:[%s6 + $0x138] sm:$0xff]
    %v193 = vld [vmem:[%s6 + $0x140] sm:$0xff]
    %v194 = vld [vmem:[%s6 + $0x148] sm:$0xff]
    %v195 = vld [vmem:[%s6 + $0x150] sm:$0xff]
    %v196 = vld [vmem:[%s6 + $0x158] sm:$0xff]
    %v197 = vld [vmem:[%s6 + $0x160] sm:$0xff]
    %v198 = vld [vmem:[%s6 + $0x168] sm:$0xff]
    %v199 = vld [vmem:[%s6 + $0x170] sm:$0xff]
    %v200 = vld [vmem:[%s6 + $0x178] sm:$0xff]
    %v201 = vld [vmem:[%s6 + $0x180] sm:$0xff]
    %v202 = vld [vmem:[%s6 + $0x188] sm:$0xff]
    %v203 = vld [vmem:[%s6 + $0x190] sm:$0xff]
    %v204 = vld [vmem:[%s6 + $0x198] sm:$0xff]
    %v205 = vld [vmem:[%s6 + $0x1a0] sm:$0xff]
    %v206 = vld [vmem:[%s6 + $0x1a8] sm:$0xff]
    %v207 = vld [vmem:[%s6 + $0x1b0] sm:$0xff]
    %v208 = vld [vmem:[%s6 + $0x1b8] sm:$0xff]
    %v209 = vld [vmem:[%s6 + $0x1c0] sm:$0xff]
    %v210 = vld [vmem:[%s6 + $0x1c8] sm:$0xff]
    %v211 = vld [vmem:[%s6 + $0x1d0] sm:$0xff]
    %v212 = vld [vmem:[%s6 + $0x1d8] sm:$0xff]
    %v213 = vld [vmem:[%s6 + $0x1e0] sm:$0xff]
    %v214 = vld [vmem:[%s6 + $0x1e8] sm:$0xff]
    %v215 = vld [vmem:[%s7] sm:$0xff]
    %v216 = vld [vmem:[%s7 + $0x8] sm:$0xff]
    %v217 = vld [vmem:[%s7 + $0x10] sm:$0x1]
    %v218 = vld [vmem:[%s7 + $0x18] sm:$0x1]
    %v219 = vld [vmem:[%s7 + $0x20] sm:$0xf]
    %v220 = vld [vmem:[%s8 + $0x1c] ss:$0 sm:$0xff]
    %v221 = vld [vmem:[%s8 + $0x1] ss:$0 sm:$0xff]
    %v222 = vld [vmem:[%s2] sm:$0x3]
    %224 = vset.pattern.permute.xlu0 0
    %225 = vperm.xlu0 %224, %v222
    %v226 = vpop.permute.xlu0 %225
    %v228 = vlaneseq
    %v229 = vshrl.u32 %v228, 7
    %v230 = vsub.s32 0, %v229
    %v231 = vrot.slane %v218, %v230
    %v232 = vmul.f32 %v226, %v231
    %v233 = vld [vmem:[%s8] ss:$0 sm:$0xff]
    %v234 = vadd.f32 %v232, %v233
    %v235 = vmax.f32 %v234, 0.0
    %s236 = scalar_lea.vmem %s8, 2
    %v237 = vld [vmem:[%s236] ss:$8 sm:$0x7]
    %v239 = vlaneseq
    %v240 = vshrl.u32 %v239, 7
    %v241 = vsub.s32 0, %v240
    %v242 = vrot.slane %v237, %v241
    %v243 = vlaneseq
    %v244 = vshrl.u32 %v243, 7
    %v245 = vsub.s32 1, %v244
    %v246 = vrot.slane %v237, %v245
    %v247 = vlaneseq
    %v248 = vshrl.u32 %v247, 7
    %v249 = vsub.s32 2, %v248
    %v250 = vrot.slane %v237, %v249
    %v254 = vadd.f32 %v35, %v242
    %v255 = vadd.f32 %v36, %v246
    %v256 = vadd.f32 %v37, %v250
    %v257 = vadd.f32 %v38, %v242
    %v258 = vadd.f32 %v39, %v246
    %v259 = vadd.f32 %v40, %v250
    %v260 = vmax.f32 %v254, 0.0
    %v261 = vmax.f32 %v255, 0.0
    %v262 = vmax.f32 %v256, 0.0
    %v263 = vmax.f32 %v257, 0.0
    %v264 = vmax.f32 %v258, 0.0
    %v265 = vmax.f32 %v259, 0.0
    %s266 = scalar_lea.vmem %s8, 3
    %v267 = vld [vmem:[%s266] ss:$8 sm:$0x3]
    %v269 = vlaneseq
    %v270 = vshrl.u32 %v269, 7
    %v271 = vsub.s32 0, %v270
    %v272 = vrot.slane %v267, %v271
    %v273 = vlaneseq
    %v274 = vshrl.u32 %v273, 7
    %v275 = vsub.s32 1, %v274
    %v276 = vrot.slane %v267, %v275
    %vm279 = vcmask 523264
    %v281 = vsel %vm279, %v262, 0
    %v284 = vsel %vm279, %v265, 0
    %286 = vmatprep.subr.mxu0 %v96
    %287 = vmatpush1.msra.mxu0 %v95
    %288 = vmatprep.subr.mxu0 %v94
    %289 = vmatpush1.msra.mxu0 %v93
    %290 = vmatprep.subr.mxu0 %v92
    %291 = vmatpush1.msra.mxu0 %v91
    %292 = vmatprep.subr.mxu0 %v90
    %293 = vmatpush1.msra.mxu0 %v89
    %294 = vmatprep.subr.mxu0 %v88
    %295 = vmatpush1.msra.mxu0 %v87
    %296 = vmatprep.subr.mxu0 %v86
    %297 = vmatpush1.msra.mxu0 %v85
    %298 = vmatprep.subr.mxu0 %v84
    %299 = vmatpush1.msra.mxu0 %v83
    %300 = vmatprep.subr.mxu0 %v82
    %301 = vmatpush1.msra.mxu0 %v81
    %302 = vmatprep.subr.mxu0 %v80
    %303 = vmatpush1.msra.mxu0 %v79
    %304 = vmatprep.subr.mxu0 %v78
    %305 = vmatpush1.msra.mxu0 %v77
    %306 = vmatprep.subr.mxu0 %v76
    %307 = vmatpush1.msra.mxu0 %v75
    %308 = vmatprep.subr.mxu0 %v74
    %309 = vmatpush1.msra.mxu0 %v73
    %310 = vmatprep.subr.mxu0 %v72
    %311 = vmatpush1.msra.mxu0 %v71
    %312 = vmatprep.subr.mxu0 %v70
    %313 = vmatpush1.msra.mxu0 %v69
    %314 = vmatprep.subr.mxu0 %v68
    %315 = vmatpush1.msra.mxu0 %v67
    %316 = vmatprep.subr.mxu0 %v66
    %317 = vmatpush1.msra.mxu0 %v65
    %318 = vmatprep.subr.mxu0 %v128
    %319 = vmatpush2.msra.mxu0 %v127
    %320 = vmatprep.subr.mxu0 %v126
    %321 = vmatpush2.msra.mxu0 %v125
    %322 = vmatprep.subr.mxu0 %v124
    %323 = vmatpush2.msra.mxu0 %v123
    %324 = vmatprep.subr.mxu0 %v122
    %325 = vmatpush2.msra.mxu0 %v121
    %326 = vmatprep.subr.mxu0 %v120
    %327 = vmatpush2.msra.mxu0 %v119
    %328 = vmatprep.subr.mxu0 %v118
    %329 = vmatpush2.msra.mxu0 %v117
    %330 = vmatprep.subr.mxu0 %v116
    %331 = vmatpush2.msra.mxu0 %v115
    %332 = vmatprep.subr.mxu0 %v114
    %333 = vmatpush2.msra.mxu0 %v113
    %334 = vmatprep.subr.mxu0 %v112
    %335 = vmatpush2.msra.mxu0 %v111
    %336 = vmatprep.subr.mxu0 %v110
    %337 = vmatpush2.msra.mxu0 %v109
    %338 = vmatprep.subr.mxu0 %v108
    %339 = vmatpush2.msra.mxu0 %v107
    %340 = vmatprep.subr.mxu0 %v106
    %341 = vmatpush2.msra.mxu0 %v105
    %342 = vmatprep.subr.mxu0 %v104
    %343 = vmatpush2.msra.mxu0 %v103
    %344 = vmatprep.subr.mxu0 %v102
    %345 = vmatpush2.msra.mxu0 %v101
    %346 = vmatprep.subr.mxu0 %v100
    %347 = vmatpush2.msra.mxu0 %v99
    %348 = vmatprep.subr.mxu0 %v98
    %349 = vmatpush2.msra.mxu0 %v97
    %350 = vmatprep.mubr.f32.mxu0 %v261
    %351 = vmatmul.mubr.f32.gmra.mxu0 %v260
    %v352 = vpop.f32.mrf.mxu0
    %v353 = vadd.f32 %v272, %v352
    %v354 = vpop.f32.mrf.mxu0
    %v355 = vadd.f32 %v276, %v354
    %356 = vmatprep.mubr.f32.mxu0 %v264
    %357 = vmatmul.mubr.f32.gmra.mxu0 %v263
    %v358 = vpop.f32.mrf.mxu0
    %v359 = vadd.f32 %v272, %v358
    %v360 = vpop.f32.mrf.mxu0
    %v361 = vadd.f32 %v276, %v360
    %362 = vdwg.mxu0
    %363 = vmatprep.subr.mxu0 0.0
    %364 = vmatpush1.msra.mxu0 0.0
    %365 = vmatprep.subr.mxu0 0.0
    %366 = vmatpush1.msra.mxu0 0.0
    %367 = vmatprep.subr.mxu0 0.0
    %368 = vmatpush1.msra.mxu0 0.0
    %369 = vmatprep.subr.mxu0 0.0
    %370 = vmatpush1.msra.mxu0 0.0
    %371 = vmatprep.subr.mxu0 0.0
    %372 = vmatpush1.msra.mxu0 0.0
    %373 = vmatprep.subr.mxu0 0.0
    %374 = vmatpush1.msra.mxu0 0.0
    %375 = vmatprep.subr.mxu0 0.0
    %376 = vmatpush1.msra.mxu0 0.0
    %377 = vmatprep.subr.mxu0 0.0
    %378 = vmatpush1.msra.mxu0 0.0
    %379 = vmatprep.subr.mxu0 %v144
    %380 = vmatpush1.msra.mxu0 %v143
    %381 = vmatprep.subr.mxu0 %v142
    %382 = vmatpush1.msra.mxu0 %v141
    %383 = vmatprep.subr.mxu0 %v140
    %384 = vmatpush1.msra.mxu0 %v139
    %385 = vmatprep.subr.mxu0 %v138
    %386 = vmatpush1.msra.mxu0 %v137
    %387 = vmatprep.subr.mxu0 %v136
    %388 = vmatpush1.msra.mxu0 %v135
    %389 = vmatprep.subr.mxu0 %v134
    %390 = vmatpush1.msra.mxu0 %v133
    %391 = vmatprep.subr.mxu0 %v132
    %392 = vmatpush1.msra.mxu0 %v131
    %393 = vmatprep.subr.mxu0 %v130
    %394 = vmatpush1.msra.mxu0 %v129
    %395 = vmatprep.subr.mxu0 0.0
    %396 = vmatpush2.msra.mxu0 0.0
    %397 = vmatprep.subr.mxu0 0.0
    %398 = vmatpush2.msra.mxu0 0.0
    %399 = vmatprep.subr.mxu0 0.0
    %400 = vmatpush2.msra.mxu0 0.0
    %401 = vmatprep.subr.mxu0 0.0
    %402 = vmatpush2.msra.mxu0 0.0
    %403 = vmatprep.subr.mxu0 0.0
    %404 = vmatpush2.msra.mxu0 0.0
    %405 = vmatprep.subr.mxu0 0.0
    %406 = vmatpush2.msra.mxu0 0.0
    %407 = vmatprep.subr.mxu0 0.0
    %408 = vmatpush2.msra.mxu0 0.0
    %409 = vmatprep.subr.mxu0 0.0
    %410 = vmatpush2.msra.mxu0 0.0
    %411 = vmatprep.subr.mxu0 0.0
    %412 = vmatpush2.msra.mxu0 0.0
    %413 = vmatprep.subr.mxu0 0.0
    %414 = vmatpush2.msra.mxu0 0.0
    %415 = vmatprep.subr.mxu0 0.0
    %416 = vmatpush2.msra.mxu0 0.0
    %417 = vmatprep.subr.mxu0 0.0
    %418 = vmatpush2.msra.mxu0 0.0
    %419 = vmatprep.subr.mxu0 0.0
    %420 = vmatpush2.msra.mxu0 0.0
    %421 = vmatprep.subr.mxu0 0.0
    %422 = vmatpush2.msra.mxu0 0.0
    %423 = vmatprep.subr.mxu0 0.0
    %424 = vmatpush2.msra.mxu0 0.0
    %425 = vmatprep.subr.mxu0 0.0
    %426 = vmatpush2.msra.mxu0 0.0
    %427 = vmatprep.mubr.f32.mxu0 0.0
    %428 = vmatmul.mubr.f32.gmra.mxu0 %v281
    %v429 = vpop.f32.mrf.mxu0
    %v430 = vadd.f32 %v353, %v429
    %v431 = vpop.f32.mrf.mxu0
    %v432 = vadd.f32 %v355, %v431
    %433 = vmatprep.mubr.f32.mxu0 0.0
    %434 = vmatmul.mubr.f32.gmra.mxu0 %v284
    %v435 = vpop.f32.mrf.mxu0
    %v436 = vadd.f32 %v359, %v435
    %v437 = vpop.f32.mrf.mxu0
    %v438 = vadd.f32 %v361, %v437
    %439 = vdwg.mxu0
    %v440 = vmax.f32 %v430, 0.0
    %v441 = vmax.f32 %v432, 0.0
    %v442 = vmax.f32 %v436, 0.0
    %v443 = vmax.f32 %v438, 0.0
    %v444 = vld [vmem:[%s8 + $0x4] ss:$0 sm:$0xff]
    %vm445 = vcmask 261120
    %v447 = vsel %vm445, %v441, 0
    %v450 = vsel %vm445, %v443, 0
    %452 = vmatprep.subr.mxu0 0.0
    %453 = vmatpush1.msra.mxu0 %v166
    %454 = vmatprep.subr.mxu0 0.0
    %455 = vmatpush1.msra.mxu0 %v165
    %456 = vmatprep.subr.mxu0 0.0
    %457 = vmatpush1.msra.mxu0 %v164
    %458 = vmatprep.subr.mxu0 0.0
    %459 = vmatpush1.msra.mxu0 %v163
    %460 = vmatprep.subr.mxu0 0.0
    %461 = vmatpush1.msra.mxu0 %v162
    %462 = vmatprep.subr.mxu0 0.0
    %463 = vmatpush1.msra.mxu0 %v161
    %464 = vmatprep.subr.mxu0 0.0
    %465 = vmatpush1.msra.mxu0 %v160
    %466 = vmatprep.subr.mxu0 0.0
    %467 = vmatpush1.msra.mxu0 %v159
    %468 = vmatprep.subr.mxu0 0.0
    %469 = vmatpush1.msra.mxu0 %v158
    %470 = vmatprep.subr.mxu0 0.0
    %471 = vmatpush1.msra.mxu0 %v157
    %472 = vmatprep.subr.mxu0 0.0
    %473 = vmatpush1.msra.mxu0 %v156
    %474 = vmatprep.subr.mxu0 0.0
    %475 = vmatpush1.msra.mxu0 %v155
    %476 = vmatprep.subr.mxu0 0.0
    %477 = vmatpush1.msra.mxu0 %v154
    %478 = vmatprep.subr.mxu0 0.0
    %479 = vmatpush1.msra.mxu0 %v153
    %480 = vmatprep.subr.mxu0 0.0
    %481 = vmatpush1.msra.mxu0 %v152
    %482 = vmatprep.subr.mxu0 0.0
    %483 = vmatpush1.msra.mxu0 %v151
    %484 = vmatprep.subr.mxu0 0.0
    %485 = vmatpush2.msra.mxu0 0.0
    %486 = vmatprep.subr.mxu0 0.0
    %487 = vmatpush2.msra.mxu0 0.0
    %488 = vmatprep.subr.mxu0 0.0
    %489 = vmatpush2.msra.mxu0 0.0
    %490 = vmatprep.subr.mxu0 0.0
    %491 = vmatpush2.msra.mxu0 0.0
    %492 = vmatprep.subr.mxu0 0.0
    %493 = vmatpush2.msra.mxu0 0.0
    %494 = vmatprep.subr.mxu0 0.0
    %495 = vmatpush2.msra.mxu0 0.0
    %496 = vmatprep.subr.mxu0 0.0
    %497 = vmatpush2.msra.mxu0 0.0
    %498 = vmatprep.subr.mxu0 0.0
    %499 = vmatpush2.msra.mxu0 0.0
    %500 = vmatprep.subr.mxu0 0.0
    %501 = vmatpush2.msra.mxu0 0.0
    %502 = vmatprep.subr.mxu0 0.0
    %503 = vmatpush2.msra.mxu0 0.0
    %504 = vmatprep.subr.mxu0 0.0
    %505 = vmatpush2.msra.mxu0 0.0
    %506 = vmatprep.subr.mxu0 0.0
    %507 = vmatpush2.msra.mxu0 0.0
    %508 = vmatprep.subr.mxu0 0.0
    %509 = vmatpush2.msra.mxu0 %v170
    %510 = vmatprep.subr.mxu0 0.0
    %511 = vmatpush2.msra.mxu0 %v169
    %512 = vmatprep.subr.mxu0 0.0
    %513 = vmatpush2.msra.mxu0 %v168
    %514 = vmatprep.subr.mxu0 0.0
    %515 = vmatpush2.msra.mxu0 %v167
    %516 = vmatprep.mubr.f32.mxu0 %v447
    %517 = vmatmul.mubr.f32.gmra.mxu0 %v440
    %v518 = vpop.f32.mrf.mxu0
    %v519 = vadd.f32 %v444, %v518
    %v520 = vpop.f32.mrf.mxu0
    %521 = vmatprep.mubr.f32.mxu0 %v450
    %522 = vmatmul.mubr.f32.gmra.mxu0 %v442
    %v523 = vpop.f32.mrf.mxu0
    %v524 = vadd.f32 %v444, %v523
    %v525 = vpop.f32.mrf.mxu0
    %526 = vdwg.mxu0
    %v527 = vmax.f32 %v519, 0.0
    %v528 = vmax.f32 %v524, 0.0
    %v529 = vlaneseq
    %v530 = vand.u32 %v529, 127
    %v531 = vld [vmem:[%s0] sm:$0x3]
    %532 = vset.pattern.permute.xlu0 0
    %533 = vperm.xlu0 %532, %v531
    %v534 = vpop.permute.xlu0 %533
    %vm535 = vcmp.eq.s32.totalorder %v534, %v530
    %v536 = vsel %vm535, 1, 0
    %v537 = vcvt.s32.f32 %v536
    %vm538 = vcmask 80896
    %v540 = vsel %vm538, %v537, 0
    %vm542 = vcmask 1041408
    %v544 = vsel %vm542, %v148, 0
    %546 = vmatprep.subr.mxu0 0.0
    %547 = vmatpush1.msra.mxu0 0.0
    %548 = vmatprep.subr.mxu0 0.0
    %549 = vmatpush1.msra.mxu0 0.0
    %550 = vmatprep.subr.mxu0 0.0
    %551 = vmatpush1.msra.mxu0 0.0
    %552 = vmatprep.subr.mxu0 0.0
    %553 = vmatpush1.msra.mxu0 0.0
    %554 = vmatprep.subr.mxu0 0.0
    %555 = vmatpush1.msra.mxu0 0.0
    %556 = vmatprep.subr.mxu0 0.0
    %557 = vmatpush1.msra.mxu0 0.0
    %558 = vmatprep.subr.mxu0 0.0
    %559 = vmatpush1.msra.mxu0 0.0
    %560 = vmatprep.subr.mxu0 0.0
    %561 = vmatpush1.msra.mxu0 0.0
    %562 = vmatprep.subr.mxu0 0.0
    %563 = vmatpush1.msra.mxu0 0.0
    %564 = vmatprep.subr.mxu0 0.0
    %565 = vmatpush1.msra.mxu0 0.0
    %566 = vmatprep.subr.mxu0 0.0
    %567 = vmatpush1.msra.mxu0 0.0
    %568 = vmatprep.subr.mxu0 0.0
    %569 = vmatpush1.msra.mxu0 0.0
    %570 = vmatprep.subr.mxu0 0.0
    %571 = vmatpush1.msra.mxu0 0.0
    %572 = vmatprep.subr.mxu0 0.0
    %573 = vmatpush1.msra.mxu0 0.0
    %574 = vmatprep.subr.mxu0 0.0
    %575 = vmatpush1.msra.mxu0 %v544
    %576 = vmatprep.subr.mxu0 0.0
    %577 = vmatpush1.msra.mxu0 %v147
    %578 = vmatprep.subr.mxu0 0.0
    %579 = vmatpush2.msra.mxu0 0.0
    %580 = vmatprep.subr.mxu0 0.0
    %581 = vmatpush2.msra.mxu0 0.0
    %582 = vmatprep.subr.mxu0 0.0
    %583 = vmatpush2.msra.mxu0 0.0
    %584 = vmatprep.subr.mxu0 0.0
    %585 = vmatpush2.msra.mxu0 0.0
    %586 = vmatprep.subr.mxu0 0.0
    %587 = vmatpush2.msra.mxu0 0.0
    %588 = vmatprep.subr.mxu0 0.0
    %589 = vmatpush2.msra.mxu0 0.0
    %590 = vmatprep.subr.mxu0 0.0
    %591 = vmatpush2.msra.mxu0 0.0
    %592 = vmatprep.subr.mxu0 0.0
    %593 = vmatpush2.msra.mxu0 0.0
    %594 = vmatprep.subr.mxu0 0.0
    %595 = vmatpush2.msra.mxu0 0.0
    %596 = vmatprep.subr.mxu0 0.0
    %597 = vmatpush2.msra.mxu0 0.0
    %598 = vmatprep.subr.mxu0 0.0
    %599 = vmatpush2.msra.mxu0 0.0
    %600 = vmatprep.subr.mxu0 0.0
    %601 = vmatpush2.msra.mxu0 0.0
    %602 = vmatprep.subr.mxu0 0.0
    %603 = vmatpush2.msra.mxu0 0.0
    %604 = vmatprep.subr.mxu0 0.0
    %605 = vmatpush2.msra.mxu0 0.0
    %606 = vmatprep.subr.mxu0 0.0
    %607 = vmatpush2.msra.mxu0 0.0
    %608 = vmatprep.subr.mxu0 0.0
    %609 = vmatpush2.msra.mxu0 0.0
    %610 = vmatprep.mubr.f32.mxu0 0.0
    %611 = vmatmul.mubr.f32.gmra.mxu0 %v540
    %v612 = vpop.f32.mrf.mxu0
    %v613 = vadd.f32 %v220, %v612
    %v614 = vpop.f32.mrf.mxu0
    %615 = vdwg.mxu0
    %v616 = vld [vmem:[%s1] sm:$0x3]
    %618 = vset.pattern.permute.xlu0 0
    %619 = vperm.xlu0 %618, %v616
    %v620 = vpop.permute.xlu0 %619
    %v622 = vlaneseq
    %v623 = vshrl.u32 %v622, 7
    %v624 = vsub.s32 0, %v623
    %v625 = vrot.slane %v219, %v624
    %v626 = vmul.f32 %v620, %v625
    %627 = vset.pattern.permute.xlu0 1
    %628 = vperm.xlu0 %627, %v616
    %v629 = vpop.permute.xlu0 %628
    %v631 = vlaneseq
    %v632 = vshrl.u32 %v631, 7
    %v633 = vsub.s32 1, %v632
    %v634 = vrot.slane %v219, %v633
    %v635 = vmul.f32 %v629, %v634
    %v636 = vadd.f32 %v626, %v635
    %637 = vset.pattern.permute.xlu0 2
    %638 = vperm.xlu0 %637, %v616
    %v639 = vpop.permute.xlu0 %638
    %v641 = vlaneseq
    %v642 = vshrl.u32 %v641, 7
    %v643 = vsub.s32 2, %v642
    %v644 = vrot.slane %v219, %v643
    %v645 = vmul.f32 %v639, %v644
    %v646 = vadd.f32 %v636, %v645
    %647 = vset.pattern.permute.xlu0 3
    %648 = vperm.xlu0 %647, %v616
    %v649 = vpop.permute.xlu0 %648
    %v651 = vlaneseq
    %v652 = vshrl.u32 %v651, 7
    %v653 = vsub.s32 3, %v652
    %v654 = vrot.slane %v219, %v653
    %v655 = vmul.f32 %v649, %v654
    %v656 = vadd.f32 %v646, %v655
    %v657 = vadd.f32 %v656, %v221
    %v658 = vmax.f32 %v657, 0.0
    %v659 = vmul.f32 %v658, %v235
    %vm660 = vcmask 25600
    %v661 = vsel %vm660, %v659, 0.0
    %662 = vadd.xlane.f32.xlu0 %v661
    %v663 = vpop.xlane.xlu0 %662
    %v664 = vsel %vm542, %v663, -inf
    %v665 = vrot.slane %v664, 4
    %v666 = vmax.f32 %v664, %v665
    %v667 = vrot.slane %v666, 2
    %v668 = vmax.f32 %v666, %v667
    %v669 = vrot.slane %v668, 1
    %v670 = vmax.f32 %v668, %v669
    %v671 = vsub.f32 %v663, %v670
    %v672 = vmul.f32 %v671, 1.442695
    %v673 = vpow.pop %v672
    %v674 = vsel %vm542, %v673, 0.0
    %v675 = vrot.slane %v674, 4
    %v676 = vadd.f32 %v674, %v675
    %v677 = vrot.slane %v676, 2
    %v678 = vadd.f32 %v676, %v677
    %v679 = vrot.slane %v678, 1
    %v680 = vadd.f32 %v678, %v679
    %v681 = vrcp.pop %v680
    %v682 = vmul.f32 %v673, %v681
    %v683 = vmul.f32 %v682, %v537
    %v684 = vadd.f32 %v683, 0.0
    %685 = vset.pattern.permute.xlu0 1
    %686 = vperm.xlu0 %685, %v531
    %v687 = vpop.permute.xlu0 %686
    %vm688 = vcmp.eq.s32.totalorder %v687, %v530
    %v689 = vsel %vm688, 1, 0
    %v690 = vcvt.s32.f32 %v689
    %v692 = vsel %vm538, %v690, 0
    %694 = vmatprep.subr.mxu0 0.0
    %695 = vmatpush1.msra.mxu0 0.0
    %696 = vmatprep.subr.mxu0 0.0
    %697 = vmatpush1.msra.mxu0 0.0
    %698 = vmatprep.subr.mxu0 0.0
    %699 = vmatpush1.msra.mxu0 0.0
    %700 = vmatprep.subr.mxu0 0.0
    %701 = vmatpush1.msra.mxu0 0.0
    %702 = vmatprep.subr.mxu0 0.0
    %703 = vmatpush1.msra.mxu0 0.0
    %704 = vmatprep.subr.mxu0 0.0
    %705 = vmatpush1.msra.mxu0 0.0
    %706 = vmatprep.subr.mxu0 0.0
    %707 = vmatpush1.msra.mxu0 0.0
    %708 = vmatprep.subr.mxu0 0.0
    %709 = vmatpush1.msra.mxu0 0.0
    %710 = vmatprep.subr.mxu0 0.0
    %711 = vmatpush1.msra.mxu0 0.0
    %712 = vmatprep.subr.mxu0 0.0
    %713 = vmatpush1.msra.mxu0 0.0
    %714 = vmatprep.subr.mxu0 0.0
    %715 = vmatpush1.msra.mxu0 0.0
    %716 = vmatprep.subr.mxu0 0.0
    %717 = vmatpush1.msra.mxu0 0.0
    %718 = vmatprep.subr.mxu0 0.0
    %719 = vmatpush1.msra.mxu0 0.0
    %720 = vmatprep.subr.mxu0 0.0
    %721 = vmatpush1.msra.mxu0 0.0
    %722 = vmatprep.subr.mxu0 0.0
    %723 = vmatpush1.msra.mxu0 %v544
    %724 = vmatprep.subr.mxu0 0.0
    %725 = vmatpush1.msra.mxu0 %v147
    %726 = vmatprep.subr.mxu0 0.0
    %727 = vmatpush2.msra.mxu0 0.0
    %728 = vmatprep.subr.mxu0 0.0
    %729 = vmatpush2.msra.mxu0 0.0
    %730 = vmatprep.subr.mxu0 0.0
    %731 = vmatpush2.msra.mxu0 0.0
    %732 = vmatprep.subr.mxu0 0.0
    %733 = vmatpush2.msra.mxu0 0.0
    %734 = vmatprep.subr.mxu0 0.0
    %735 = vmatpush2.msra.mxu0 0.0
    %736 = vmatprep.subr.mxu0 0.0
    %737 = vmatpush2.msra.mxu0 0.0
    %738 = vmatprep.subr.mxu0 0.0
    %739 = vmatpush2.msra.mxu0 0.0
    %740 = vmatprep.subr.mxu0 0.0
    %741 = vmatpush2.msra.mxu0 0.0
    %742 = vmatprep.subr.mxu0 0.0
    %743 = vmatpush2.msra.mxu0 0.0
    %744 = vmatprep.subr.mxu0 0.0
    %745 = vmatpush2.msra.mxu0 0.0
    %746 = vmatprep.subr.mxu0 0.0
    %747 = vmatpush2.msra.mxu0 0.0
    %748 = vmatprep.subr.mxu0 0.0
    %749 = vmatpush2.msra.mxu0 0.0
    %750 = vmatprep.subr.mxu0 0.0
    %751 = vmatpush2.msra.mxu0 0.0
    %752 = vmatprep.subr.mxu0 0.0
    %753 = vmatpush2.msra.mxu0 0.0
    %754 = vmatprep.subr.mxu0 0.0
    %755 = vmatpush2.msra.mxu0 0.0
    %756 = vmatprep.subr.mxu0 0.0
    %757 = vmatpush2.msra.mxu0 0.0
    %758 = vmatprep.mubr.f32.mxu0 0.0
    %759 = vmatmul.mubr.f32.gmra.mxu0 %v692
    %v760 = vpop.f32.mrf.mxu0
    %v761 = vadd.f32 %v220, %v760
    %v762 = vpop.f32.mrf.mxu0
    %763 = vdwg.mxu0
    %s764 = scalar_lea.vmem %s1, 2
    %v765 = vld [vmem:[%s764] sm:$0x3]
    %767 = vset.pattern.permute.xlu0 0
    %768 = vperm.xlu0 %767, %v765
    %v769 = vpop.permute.xlu0 %768
    %v771 = vmul.f32 %v769, %v625
    %772 = vset.pattern.permute.xlu0 1
    %773 = vperm.xlu0 %772, %v765
    %v774 = vpop.permute.xlu0 %773
    %v776 = vmul.f32 %v774, %v634
    %v777 = vadd.f32 %v771, %v776
    %778 = vset.pattern.permute.xlu0 2
    %779 = vperm.xlu0 %778, %v765
    %v780 = vpop.permute.xlu0 %779
    %v782 = vmul.f32 %v780, %v644
    %v783 = vadd.f32 %v777, %v782
    %784 = vset.pattern.permute.xlu0 3
    %785 = vperm.xlu0 %784, %v765
    %v786 = vpop.permute.xlu0 %785
    %v788 = vmul.f32 %v786, %v654
    %v789 = vadd.f32 %v783, %v788
    %v790 = vadd.f32 %v789, %v221
    %v791 = vmax.f32 %v790, 0.0
    %v792 = vmul.f32 %v791, %v235
    %v793 = vsel %vm660, %v792, 0.0
    %794 = vadd.xlane.f32.xlu0 %v793
    %v795 = vpop.xlane.xlu0 %794
    %v796 = vsel %vm542, %v795, -inf
    %v797 = vrot.slane %v796, 4
    %v798 = vmax.f32 %v796, %v797
    %v799 = vrot.slane %v798, 2
    %v800 = vmax.f32 %v798, %v799
    %v801 = vrot.slane %v800, 1
    %v802 = vmax.f32 %v800, %v801
    %v803 = vsub.f32 %v795, %v802
    %v804 = vmul.f32 %v803, 1.442695
    %v805 = vpow.pop %v804
    %v806 = vsel %vm542, %v805, 0.0
    %v807 = vrot.slane %v806, 4
    %v808 = vadd.f32 %v806, %v807
    %v809 = vrot.slane %v808, 2
    %v810 = vadd.f32 %v808, %v809
    %v811 = vrot.slane %v810, 1
    %v812 = vadd.f32 %v810, %v811
    %v813 = vrcp.pop %v812
    %v814 = vmul.f32 %v805, %v813
    %v815 = vmul.f32 %v814, %v690
    %v816 = vadd.f32 %v684, %v815
    %817 = vset.pattern.permute.xlu0 2
    %818 = vperm.xlu0 %817, %v531
    %v819 = vpop.permute.xlu0 %818
    %vm820 = vcmp.eq.s32.totalorder %v819, %v530
    %v821 = vsel %vm820, 1, 0
    %v822 = vcvt.s32.f32 %v821
    %v824 = vsel %vm538, %v822, 0
    %826 = vmatprep.subr.mxu0 0.0
    %827 = vmatpush1.msra.mxu0 0.0
    %828 = vmatprep.subr.mxu0 0.0
    %829 = vmatpush1.msra.mxu0 0.0
    %830 = vmatprep.subr.mxu0 0.0
    %831 = vmatpush1.msra.mxu0 0.0
    %832 = vmatprep.subr.mxu0 0.0
    %833 = vmatpush1.msra.mxu0 0.0
    %834 = vmatprep.subr.mxu0 0.0
    %835 = vmatpush1.msra.mxu0 0.0
    %836 = vmatprep.subr.mxu0 0.0
    %837 = vmatpush1.msra.mxu0 0.0
    %838 = vmatprep.subr.mxu0 0.0
    %839 = vmatpush1.msra.mxu0 0.0
    %840 = vmatprep.subr.mxu0 0.0
    %841 = vmatpush1.msra.mxu0 0.0
    %842 = vmatprep.subr.mxu0 0.0
    %843 = vmatpush1.msra.mxu0 0.0
    %844 = vmatprep.subr.mxu0 0.0
    %845 = vmatpush1.msra.mxu0 0.0
    %846 = vmatprep.subr.mxu0 0.0
    %847 = vmatpush1.msra.mxu0 0.0
    %848 = vmatprep.subr.mxu0 0.0
    %849 = vmatpush1.msra.mxu0 0.0
    %850 = vmatprep.subr.mxu0 0.0
    %851 = vmatpush1.msra.mxu0 0.0
    %852 = vmatprep.subr.mxu0 0.0
    %853 = vmatpush1.msra.mxu0 0.0
    %854 = vmatprep.subr.mxu0 0.0
    %855 = vmatpush1.msra.mxu0 %v544
    %856 = vmatprep.subr.mxu0 0.0
    %857 = vmatpush1.msra.mxu0 %v147
    %858 = vmatprep.subr.mxu0 0.0
    %859 = vmatpush2.msra.mxu0 0.0
    %860 = vmatprep.subr.mxu0 0.0
    %861 = vmatpush2.msra.mxu0 0.0
    %862 = vmatprep.subr.mxu0 0.0
    %863 = vmatpush2.msra.mxu0 0.0
    %864 = vmatprep.subr.mxu0 0.0
    %865 = vmatpush2.msra.mxu0 0.0
    %866 = vmatprep.subr.mxu0 0.0
    %867 = vmatpush2.msra.mxu0 0.0
    %868 = vmatprep.subr.mxu0 0.0
    %869 = vmatpush2.msra.mxu0 0.0
    %870 = vmatprep.subr.mxu0 0.0
    %871 = vmatpush2.msra.mxu0 0.0
    %872 = vmatprep.subr.mxu0 0.0
    %873 = vmatpush2.msra.mxu0 0.0
    %874 = vmatprep.subr.mxu0 0.0
    %875 = vmatpush2.msra.mxu0 0.0
    %876 = vmatprep.subr.mxu0 0.0
    %877 = vmatpush2.msra.mxu0 0.0
    %878 = vmatprep.subr.mxu0 0.0
    %879 = vmatpush2.msra.mxu0 0.0
    %880 = vmatprep.subr.mxu0 0.0
    %881 = vmatpush2.msra.mxu0 0.0
    %882 = vmatprep.subr.mxu0 0.0
    %883 = vmatpush2.msra.mxu0 0.0
    %884 = vmatprep.subr.mxu0 0.0
    %885 = vmatpush2.msra.mxu0 0.0
    %886 = vmatprep.subr.mxu0 0.0
    %887 = vmatpush2.msra.mxu0 0.0
    %888 = vmatprep.subr.mxu0 0.0
    %889 = vmatpush2.msra.mxu0 0.0
    %890 = vmatprep.mubr.f32.mxu0 0.0
    %891 = vmatmul.mubr.f32.gmra.mxu0 %v824
    %v892 = vpop.f32.mrf.mxu0
    %v893 = vadd.f32 %v220, %v892
    %v894 = vpop.f32.mrf.mxu0
    %895 = vdwg.mxu0
    %s896 = scalar_lea.vmem %s1, 4
    %v897 = vld [vmem:[%s896] sm:$0x3]
    %899 = vset.pattern.permute.xlu0 0
    %900 = vperm.xlu0 %899, %v897
    %v901 = vpop.permute.xlu0 %900
    %v903 = vmul.f32 %v901, %v625
    %904 = vset.pattern.permute.xlu0 1
    %905 = vperm.xlu0 %904, %v897
    %v906 = vpop.permute.xlu0 %905
    %v908 = vmul.f32 %v906, %v634
    %v909 = vadd.f32 %v903, %v908
    %910 = vset.pattern.permute.xlu0 2
    %911 = vperm.xlu0 %910, %v897
    %v912 = vpop.permute.xlu0 %911
    %v914 = vmul.f32 %v912, %v644
    %v915 = vadd.f32 %v909, %v914
    %916 = vset.pattern.permute.xlu0 3
    %917 = vperm.xlu0 %916, %v897
    %v918 = vpop.permute.xlu0 %917
    %v920 = vmul.f32 %v918, %v654
    %v921 = vadd.f32 %v915, %v920
    %v922 = vadd.f32 %v921, %v221
    %v923 = vmax.f32 %v922, 0.0
    %v924 = vmul.f32 %v923, %v235
    %v925 = vsel %vm660, %v924, 0.0
    %926 = vadd.xlane.f32.xlu0 %v925
    %v927 = vpop.xlane.xlu0 %926
    %v928 = vsel %vm542, %v927, -inf
    %v929 = vrot.slane %v928, 4
    %v930 = vmax.f32 %v928, %v929
    %v931 = vrot.slane %v930, 2
    %v932 = vmax.f32 %v930, %v931
    %v933 = vrot.slane %v932, 1
    %v934 = vmax.f32 %v932, %v933
    %v935 = vsub.f32 %v927, %v934
    %v936 = vmul.f32 %v935, 1.442695
    %v937 = vpow.pop %v936
    %v938 = vsel %vm542, %v937, 0.0
    %v939 = vrot.slane %v938, 4
    %v940 = vadd.f32 %v938, %v939
    %v941 = vrot.slane %v940, 2
    %v942 = vadd.f32 %v940, %v941
    %v943 = vrot.slane %v942, 1
    %v944 = vadd.f32 %v942, %v943
    %v945 = vrcp.pop %v944
    %v946 = vmul.f32 %v937, %v945
    %v947 = vmul.f32 %v946, %v822
    %v948 = vadd.f32 %v816, %v947
    %949 = vset.pattern.permute.xlu0 3
    %950 = vperm.xlu0 %949, %v531
    %v951 = vpop.permute.xlu0 %950
    %vm952 = vcmp.eq.s32.totalorder %v951, %v530
    %v953 = vsel %vm952, 1, 0
    %v954 = vcvt.s32.f32 %v953
    %v956 = vsel %vm538, %v954, 0
    %958 = vmatprep.subr.mxu0 0.0
    %959 = vmatpush1.msra.mxu0 0.0
    %960 = vmatprep.subr.mxu0 0.0
    %961 = vmatpush1.msra.mxu0 0.0
    %962 = vmatprep.subr.mxu0 0.0
    %963 = vmatpush1.msra.mxu0 0.0
    %964 = vmatprep.subr.mxu0 0.0
    %965 = vmatpush1.msra.mxu0 0.0
    %966 = vmatprep.subr.mxu0 0.0
    %967 = vmatpush1.msra.mxu0 0.0
    %968 = vmatprep.subr.mxu0 0.0
    %969 = vmatpush1.msra.mxu0 0.0
    %970 = vmatprep.subr.mxu0 0.0
    %971 = vmatpush1.msra.mxu0 0.0
    %972 = vmatprep.subr.mxu0 0.0
    %973 = vmatpush1.msra.mxu0 0.0
    %974 = vmatprep.subr.mxu0 0.0
    %975 = vmatpush1.msra.mxu0 0.0
    %976 = vmatprep.subr.mxu0 0.0
    %977 = vmatpush1.msra.mxu0 0.0
    %978 = vmatprep.subr.mxu0 0.0
    %979 = vmatpush1.msra.mxu0 0.0
    %980 = vmatprep.subr.mxu0 0.0
    %981 = vmatpush1.msra.mxu0 0.0
    %982 = vmatprep.subr.mxu0 0.0
    %983 = vmatpush1.msra.mxu0 0.0
    %984 = vmatprep.subr.mxu0 0.0
    %985 = vmatpush1.msra.mxu0 0.0
    %986 = vmatprep.subr.mxu0 0.0
    %987 = vmatpush1.msra.mxu0 %v544
    %988 = vmatprep.subr.mxu0 0.0
    %989 = vmatpush1.msra.mxu0 %v147
    %990 = vmatprep.subr.mxu0 0.0
    %991 = vmatpush2.msra.mxu0 0.0
    %992 = vmatprep.subr.mxu0 0.0
    %993 = vmatpush2.msra.mxu0 0.0
    %994 = vmatprep.subr.mxu0 0.0
    %995 = vmatpush2.msra.mxu0 0.0
    %996 = vmatprep.subr.mxu0 0.0
    %997 = vmatpush2.msra.mxu0 0.0
    %998 = vmatprep.subr.mxu0 0.0
    %999 = vmatpush2.msra.mxu0 0.0
    %1000 = vmatprep.subr.mxu0 0.0
    %1001 = vmatpush2.msra.mxu0 0.0
    %1002 = vmatprep.subr.mxu0 0.0
    %1003 = vmatpush2.msra.mxu0 0.0
    %1004 = vmatprep.subr.mxu0 0.0
    %1005 = vmatpush2.msra.mxu0 0.0
    %1006 = vmatprep.subr.mxu0 0.0
    %1007 = vmatpush2.msra.mxu0 0.0
    %1008 = vmatprep.subr.mxu0 0.0
    %1009 = vmatpush2.msra.mxu0 0.0
    %1010 = vmatprep.subr.mxu0 0.0
    %1011 = vmatpush2.msra.mxu0 0.0
    %1012 = vmatprep.subr.mxu0 0.0
    %1013 = vmatpush2.msra.mxu0 0.0
    %1014 = vmatprep.subr.mxu0 0.0
    %1015 = vmatpush2.msra.mxu0 0.0
    %1016 = vmatprep.subr.mxu0 0.0
    %1017 = vmatpush2.msra.mxu0 0.0
    %1018 = vmatprep.subr.mxu0 0.0
    %1019 = vmatpush2.msra.mxu0 0.0
    %1020 = vmatprep.subr.mxu0 0.0
    %1021 = vmatpush2.msra.mxu0 0.0
    %1022 = vmatprep.mubr.f32.mxu0 0.0
    %1023 = vmatmul.mubr.f32.gmra.mxu0 %v956
    %v1024 = vpop.f32.mrf.mxu0
    %v1025 = vadd.f32 %v220, %v1024
    %v1026 = vpop.f32.mrf.mxu0
    %1027 = vdwg.mxu0
    %s1028 = scalar_lea.vmem %s1, 6
    %v1029 = vld [vmem:[%s1028] sm:$0x3]
    %1031 = vset.pattern.permute.xlu0 0
    %1032 = vperm.xlu0 %1031, %v1029
    %v1033 = vpop.permute.xlu0 %1032
    %v1035 = vmul.f32 %v1033, %v625
    %1036 = vset.pattern.permute.xlu0 1
    %1037 = vperm.xlu0 %1036, %v1029
    %v1038 = vpop.permute.xlu0 %1037
    %v1040 = vmul.f32 %v1038, %v634
    %v1041 = vadd.f32 %v1035, %v1040
    %1042 = vset.pattern.permute.xlu0 2
    %1043 = vperm.xlu0 %1042, %v1029
    %v1044 = vpop.permute.xlu0 %1043
    %v1046 = vmul.f32 %v1044, %v644
    %v1047 = vadd.f32 %v1041, %v1046
    %1048 = vset.pattern.permute.xlu0 3
    %1049 = vperm.xlu0 %1048, %v1029
    %v1050 = vpop.permute.xlu0 %1049
    %v1052 = vmul.f32 %v1050, %v654
    %v1053 = vadd.f32 %v1047, %v1052
    %v1054 = vadd.f32 %v1053, %v221
    %v1055 = vmax.f32 %v1054, 0.0
    %v1056 = vmul.f32 %v1055, %v235
    %v1057 = vsel %vm660, %v1056, 0.0
    %1058 = vadd.xlane.f32.xlu0 %v1057
    %v1059 = vpop.xlane.xlu0 %1058
    %v1060 = vsel %vm542, %v1059, -inf
    %v1061 = vrot.slane %v1060, 4
    %v1062 = vmax.f32 %v1060, %v1061
    %v1063 = vrot.slane %v1062, 2
    %v1064 = vmax.f32 %v1062, %v1063
    %v1065 = vrot.slane %v1064, 1
    %v1066 = vmax.f32 %v1064, %v1065
    %v1067 = vsub.f32 %v1059, %v1066
    %v1068 = vmul.f32 %v1067, 1.442695
    %v1069 = vpow.pop %v1068
    %v1070 = vsel %vm542, %v1069, 0.0
    %v1071 = vrot.slane %v1070, 4
    %v1072 = vadd.f32 %v1070, %v1071
    %v1073 = vrot.slane %v1072, 2
    %v1074 = vadd.f32 %v1072, %v1073
    %v1075 = vrot.slane %v1074, 1
    %v1076 = vadd.f32 %v1074, %v1075
    %v1077 = vrcp.pop %v1076
    %v1078 = vmul.f32 %v1069, %v1077
    %v1079 = vmul.f32 %v1078, %v954
    %v1080 = vadd.f32 %v948, %v1079
    %1081 = vset.pattern.permute.xlu0 4
    %1082 = vperm.xlu0 %1081, %v531
    %v1083 = vpop.permute.xlu0 %1082
    %vm1084 = vcmp.eq.s32.totalorder %v1083, %v530
    %v1085 = vsel %vm1084, 1, 0
    %v1086 = vcvt.s32.f32 %v1085
    %v1088 = vsel %vm538, %v1086, 0
    %1090 = vmatprep.subr.mxu0 0.0
    %1091 = vmatpush1.msra.mxu0 0.0
    %1092 = vmatprep.subr.mxu0 0.0
    %1093 = vmatpush1.msra.mxu0 0.0
    %1094 = vmatprep.subr.mxu0 0.0
    %1095 = vmatpush1.msra.mxu0 0.0
    %1096 = vmatprep.subr.mxu0 0.0
    %1097 = vmatpush1.msra.mxu0 0.0
    %1098 = vmatprep.subr.mxu0 0.0
    %1099 = vmatpush1.msra.mxu0 0.0
    %1100 = vmatprep.subr.mxu0 0.0
    %1101 = vmatpush1.msra.mxu0 0.0
    %1102 = vmatprep.subr.mxu0 0.0
    %1103 = vmatpush1.msra.mxu0 0.0
    %1104 = vmatprep.subr.mxu0 0.0
    %1105 = vmatpush1.msra.mxu0 0.0
    %1106 = vmatprep.subr.mxu0 0.0
    %1107 = vmatpush1.msra.mxu0 0.0
    %1108 = vmatprep.subr.mxu0 0.0
    %1109 = vmatpush1.msra.mxu0 0.0
    %1110 = vmatprep.subr.mxu0 0.0
    %1111 = vmatpush1.msra.mxu0 0.0
    %1112 = vmatprep.subr.mxu0 0.0
    %1113 = vmatpush1.msra.mxu0 0.0
    %1114 = vmatprep.subr.mxu0 0.0
    %1115 = vmatpush1.msra.mxu0 0.0
    %1116 = vmatprep.subr.mxu0 0.0
    %1117 = vmatpush1.msra.mxu0 0.0
    %1118 = vmatprep.subr.mxu0 0.0
    %1119 = vmatpush1.msra.mxu0 %v544
    %1120 = vmatprep.subr.mxu0 0.0
    %1121 = vmatpush1.msra.mxu0 %v147
    %1122 = vmatprep.subr.mxu0 0.0
    %1123 = vmatpush2.msra.mxu0 0.0
    %1124 = vmatprep.subr.mxu0 0.0
    %1125 = vmatpush2.msra.mxu0 0.0
    %1126 = vmatprep.subr.mxu0 0.0
    %1127 = vmatpush2.msra.mxu0 0.0
    %1128 = vmatprep.subr.mxu0 0.0
    %1129 = vmatpush2.msra.mxu0 0.0
    %1130 = vmatprep.subr.mxu0 0.0
    %1131 = vmatpush2.msra.mxu0 0.0
    %1132 = vmatprep.subr.mxu0 0.0
    %1133 = vmatpush2.msra.mxu0 0.0
    %1134 = vmatprep.subr.mxu0 0.0
    %1135 = vmatpush2.msra.mxu0 0.0
    %1136 = vmatprep.subr.mxu0 0.0
    %1137 = vmatpush2.msra.mxu0 0.0
    %1138 = vmatprep.subr.mxu0 0.0
    %1139 = vmatpush2.msra.mxu0 0.0
    %1140 = vmatprep.subr.mxu0 0.0
    %1141 = vmatpush2.msra.mxu0 0.0
    %1142 = vmatprep.subr.mxu0 0.0
    %1143 = vmatpush2.msra.mxu0 0.0
    %1144 = vmatprep.subr.mxu0 0.0
    %1145 = vmatpush2.msra.mxu0 0.0
    %1146 = vmatprep.subr.mxu0 0.0
    %1147 = vmatpush2.msra.mxu0 0.0
    %1148 = vmatprep.subr.mxu0 0.0
    %1149 = vmatpush2.msra.mxu0 0.0
    %1150 = vmatprep.subr.mxu0 0.0
    %1151 = vmatpush2.msra.mxu0 0.0
    %1152 = vmatprep.subr.mxu0 0.0
    %1153 = vmatpush2.msra.mxu0 0.0
    %1154 = vmatprep.mubr.f32.mxu0 0.0
    %1155 = vmatmul.mubr.f32.gmra.mxu0 %v1088
    %v1156 = vpop.f32.mrf.mxu0
    %v1157 = vadd.f32 %v220, %v1156
    %v1158 = vpop.f32.mrf.mxu0
    %1159 = vdwg.mxu0
    %s1160 = scalar_lea.vmem %s1, 8
    %v1161 = vld [vmem:[%s1160] sm:$0x3]
    %1163 = vset.pattern.permute.xlu0 0
    %1164 = vperm.xlu0 %1163, %v1161
    %v1165 = vpop.permute.xlu0 %1164
    %v1167 = vmul.f32 %v1165, %v625
    %1168 = vset.pattern.permute.xlu0 1
    %1169 = vperm.xlu0 %1168, %v1161
    %v1170 = vpop.permute.xlu0 %1169
    %v1172 = vmul.f32 %v1170, %v634
    %v1173 = vadd.f32 %v1167, %v1172
    %1174 = vset.pattern.permute.xlu0 2
    %1175 = vperm.xlu0 %1174, %v1161
    %v1176 = vpop.permute.xlu0 %1175
    %v1178 = vmul.f32 %v1176, %v644
    %v1179 = vadd.f32 %v1173, %v1178
    %1180 = vset.pattern.permute.xlu0 3
    %1181 = vperm.xlu0 %1180, %v1161
    %v1182 = vpop.permute.xlu0 %1181
    %v1184 = vmul.f32 %v1182, %v654
    %v1185 = vadd.f32 %v1179, %v1184
    %v1186 = vadd.f32 %v1185, %v221
    %v1187 = vmax.f32 %v1186, 0.0
    %v1188 = vmul.f32 %v1187, %v235
    %v1189 = vsel %vm660, %v1188, 0.0
    %1190 = vadd.xlane.f32.xlu0 %v1189
    %v1191 = vpop.xlane.xlu0 %1190
    %v1192 = vsel %vm542, %v1191, -inf
    %v1193 = vrot.slane %v1192, 4
    %v1194 = vmax.f32 %v1192, %v1193
    %v1195 = vrot.slane %v1194, 2
    %v1196 = vmax.f32 %v1194, %v1195
    %v1197 = vrot.slane %v1196, 1
    %v1198 = vmax.f32 %v1196, %v1197
    %v1199 = vsub.f32 %v1191, %v1198
    %v1200 = vmul.f32 %v1199, 1.442695
    %v1201 = vpow.pop %v1200
    %v1202 = vsel %vm542, %v1201, 0.0
    %v1203 = vrot.slane %v1202, 4
    %v1204 = vadd.f32 %v1202, %v1203
    %v1205 = vrot.slane %v1204, 2
    %v1206 = vadd.f32 %v1204, %v1205
    %v1207 = vrot.slane %v1206, 1
    %v1208 = vadd.f32 %v1206, %v1207
    %v1209 = vrcp.pop %v1208
    %v1210 = vmul.f32 %v1201, %v1209
    %v1211 = vmul.f32 %v1210, %v1086
    %v1212 = vadd.f32 %v1080, %v1211
    %1213 = vset.pattern.permute.xlu0 5
    %1214 = vperm.xlu0 %1213, %v531
    %v1215 = vpop.permute.xlu0 %1214
    %vm1216 = vcmp.eq.s32.totalorder %v1215, %v530
    %v1217 = vsel %vm1216, 1, 0
    %v1218 = vcvt.s32.f32 %v1217
    %v1220 = vsel %vm538, %v1218, 0
    %1222 = vmatprep.subr.mxu0 0.0
    %1223 = vmatpush1.msra.mxu0 0.0
    %1224 = vmatprep.subr.mxu0 0.0
    %1225 = vmatpush1.msra.mxu0 0.0
    %1226 = vmatprep.subr.mxu0 0.0
    %1227 = vmatpush1.msra.mxu0 0.0
    %1228 = vmatprep.subr.mxu0 0.0
    %1229 = vmatpush1.msra.mxu0 0.0
    %1230 = vmatprep.subr.mxu0 0.0
    %1231 = vmatpush1.msra.mxu0 0.0
    %1232 = vmatprep.subr.mxu0 0.0
    %1233 = vmatpush1.msra.mxu0 0.0
    %1234 = vmatprep.subr.mxu0 0.0
    %1235 = vmatpush1.msra.mxu0 0.0
    %1236 = vmatprep.subr.mxu0 0.0
    %1237 = vmatpush1.msra.mxu0 0.0
    %1238 = vmatprep.subr.mxu0 0.0
    %1239 = vmatpush1.msra.mxu0 0.0
    %1240 = vmatprep.subr.mxu0 0.0
    %1241 = vmatpush1.msra.mxu0 0.0
    %1242 = vmatprep.subr.mxu0 0.0
    %1243 = vmatpush1.msra.mxu0 0.0
    %1244 = vmatprep.subr.mxu0 0.0
    %1245 = vmatpush1.msra.mxu0 0.0
    %1246 = vmatprep.subr.mxu0 0.0
    %1247 = vmatpush1.msra.mxu0 0.0
    %1248 = vmatprep.subr.mxu0 0.0
    %1249 = vmatpush1.msra.mxu0 0.0
    %1250 = vmatprep.subr.mxu0 0.0
    %1251 = vmatpush1.msra.mxu0 %v544
    %1252 = vmatprep.subr.mxu0 0.0
    %1253 = vmatpush1.msra.mxu0 %v147
    %1254 = vmatprep.subr.mxu0 0.0
    %1255 = vmatpush2.msra.mxu0 0.0
    %1256 = vmatprep.subr.mxu0 0.0
    %1257 = vmatpush2.msra.mxu0 0.0
    %1258 = vmatprep.subr.mxu0 0.0
    %1259 = vmatpush2.msra.mxu0 0.0
    %1260 = vmatprep.subr.mxu0 0.0
    %1261 = vmatpush2.msra.mxu0 0.0
    %1262 = vmatprep.subr.mxu0 0.0
    %1263 = vmatpush2.msra.mxu0 0.0
    %1264 = vmatprep.subr.mxu0 0.0
    %1265 = vmatpush2.msra.mxu0 0.0
    %1266 = vmatprep.subr.mxu0 0.0
    %1267 = vmatpush2.msra.mxu0 0.0
    %1268 = vmatprep.subr.mxu0 0.0
    %1269 = vmatpush2.msra.mxu0 0.0
    %1270 = vmatprep.subr.mxu0 0.0
    %1271 = vmatpush2.msra.mxu0 0.0
    %1272 = vmatprep.subr.mxu0 0.0
    %1273 = vmatpush2.msra.mxu0 0.0
    %1274 = vmatprep.subr.mxu0 0.0
    %1275 = vmatpush2.msra.mxu0 0.0
    %1276 = vmatprep.subr.mxu0 0.0
    %1277 = vmatpush2.msra.mxu0 0.0
    %1278 = vmatprep.subr.mxu0 0.0
    %1279 = vmatpush2.msra.mxu0 0.0
    %1280 = vmatprep.subr.mxu0 0.0
    %1281 = vmatpush2.msra.mxu0 0.0
    %1282 = vmatprep.subr.mxu0 0.0
    %1283 = vmatpush2.msra.mxu0 0.0
    %1284 = vmatprep.subr.mxu0 0.0
    %1285 = vmatpush2.msra.mxu0 0.0
    %1286 = vmatprep.mubr.f32.mxu0 0.0
    %1287 = vmatmul.mubr.f32.gmra.mxu0 %v1220
    %v1288 = vpop.f32.mrf.mxu0
    %v1289 = vadd.f32 %v220, %v1288
    %v1290 = vpop.f32.mrf.mxu0
    %1291 = vdwg.mxu0
    %s1292 = scalar_lea.vmem %s1, 10
    %v1293 = vld [vmem:[%s1292] sm:$0x3]
    %1295 = vset.pattern.permute.xlu0 0
    %1296 = vperm.xlu0 %1295, %v1293
    %v1297 = vpop.permute.xlu0 %1296
    %v1299 = vmul.f32 %v1297, %v625
    %1300 = vset.pattern.permute.xlu0 1
    %1301 = vperm.xlu0 %1300, %v1293
    %v1302 = vpop.permute.xlu0 %1301
    %v1304 = vmul.f32 %v1302, %v634
    %v1305 = vadd.f32 %v1299, %v1304
    %1306 = vset.pattern.permute.xlu0 2
    %1307 = vperm.xlu0 %1306, %v1293
    %v1308 = vpop.permute.xlu0 %1307
    %v1310 = vmul.f32 %v1308, %v644
    %v1311 = vadd.f32 %v1305, %v1310
    %1312 = vset.pattern.permute.xlu0 3
    %1313 = vperm.xlu0 %1312, %v1293
    %v1314 = vpop.permute.xlu0 %1313
    %v1316 = vmul.f32 %v1314, %v654
    %v1317 = vadd.f32 %v1311, %v1316
    %v1318 = vadd.f32 %v1317, %v221
    %v1319 = vmax.f32 %v1318, 0.0
    %v1320 = vmul.f32 %v1319, %v235
    %v1321 = vsel %vm660, %v1320, 0.0
    %1322 = vadd.xlane.f32.xlu0 %v1321
    %v1323 = vpop.xlane.xlu0 %1322
    %v1324 = vsel %vm542, %v1323, -inf
    %v1325 = vrot.slane %v1324, 4
    %v1326 = vmax.f32 %v1324, %v1325
    %v1327 = vrot.slane %v1326, 2
    %v1328 = vmax.f32 %v1326, %v1327
    %v1329 = vrot.slane %v1328, 1
    %v1330 = vmax.f32 %v1328, %v1329
    %v1331 = vsub.f32 %v1323, %v1330
    %v1332 = vmul.f32 %v1331, 1.442695
    %v1333 = vpow.pop %v1332
    %v1334 = vsel %vm542, %v1333, 0.0
    %v1335 = vrot.slane %v1334, 4
    %v1336 = vadd.f32 %v1334, %v1335
    %v1337 = vrot.slane %v1336, 2
    %v1338 = vadd.f32 %v1336, %v1337
    %v1339 = vrot.slane %v1338, 1
    %v1340 = vadd.f32 %v1338, %v1339
    %v1341 = vrcp.pop %v1340
    %v1342 = vmul.f32 %v1333, %v1341
    %v1343 = vmul.f32 %v1342, %v1218
    %v1344 = vadd.f32 %v1212, %v1343
    %1345 = vset.pattern.permute.xlu0 6
    %1346 = vperm.xlu0 %1345, %v531
    %v1347 = vpop.permute.xlu0 %1346
    %vm1348 = vcmp.eq.s32.totalorder %v1347, %v530
    %v1349 = vsel %vm1348, 1, 0
    %v1350 = vcvt.s32.f32 %v1349
    %v1352 = vsel %vm538, %v1350, 0
    %1354 = vmatprep.subr.mxu0 0.0
    %1355 = vmatpush1.msra.mxu0 0.0
    %1356 = vmatprep.subr.mxu0 0.0
    %1357 = vmatpush1.msra.mxu0 0.0
    %1358 = vmatprep.subr.mxu0 0.0
    %1359 = vmatpush1.msra.mxu0 0.0
    %1360 = vmatprep.subr.mxu0 0.0
    %1361 = vmatpush1.msra.mxu0 0.0
    %1362 = vmatprep.subr.mxu0 0.0
    %1363 = vmatpush1.msra.mxu0 0.0
    %1364 = vmatprep.subr.mxu0 0.0
    %1365 = vmatpush1.msra.mxu0 0.0
    %1366 = vmatprep.subr.mxu0 0.0
    %1367 = vmatpush1.msra.mxu0 0.0
    %1368 = vmatprep.subr.mxu0 0.0
    %1369 = vmatpush1.msra.mxu0 0.0
    %1370 = vmatprep.subr.mxu0 0.0
    %1371 = vmatpush1.msra.mxu0 0.0
    %1372 = vmatprep.subr.mxu0 0.0
    %1373 = vmatpush1.msra.mxu0 0.0
    %1374 = vmatprep.subr.mxu0 0.0
    %1375 = vmatpush1.msra.mxu0 0.0
    %1376 = vmatprep.subr.mxu0 0.0
    %1377 = vmatpush1.msra.mxu0 0.0
    %1378 = vmatprep.subr.mxu0 0.0
    %1379 = vmatpush1.msra.mxu0 0.0
    %1380 = vmatprep.subr.mxu0 0.0
    %1381 = vmatpush1.msra.mxu0 0.0
    %1382 = vmatprep.subr.mxu0 0.0
    %1383 = vmatpush1.msra.mxu0 %v544
    %1384 = vmatprep.subr.mxu0 0.0
    %1385 = vmatpush1.msra.mxu0 %v147
    %1386 = vmatprep.subr.mxu0 0.0
    %1387 = vmatpush2.msra.mxu0 0.0
    %1388 = vmatprep.subr.mxu0 0.0
    %1389 = vmatpush2.msra.mxu0 0.0
    %1390 = vmatprep.subr.mxu0 0.0
    %1391 = vmatpush2.msra.mxu0 0.0
    %1392 = vmatprep.subr.mxu0 0.0
    %1393 = vmatpush2.msra.mxu0 0.0
    %1394 = vmatprep.subr.mxu0 0.0
    %1395 = vmatpush2.msra.mxu0 0.0
    %1396 = vmatprep.subr.mxu0 0.0
    %1397 = vmatpush2.msra.mxu0 0.0
    %1398 = vmatprep.subr.mxu0 0.0
    %1399 = vmatpush2.msra.mxu0 0.0
    %1400 = vmatprep.subr.mxu0 0.0
    %1401 = vmatpush2.msra.mxu0 0.0
    %1402 = vmatprep.subr.mxu0 0.0
    %1403 = vmatpush2.msra.mxu0 0.0
    %1404 = vmatprep.subr.mxu0 0.0
    %1405 = vmatpush2.msra.mxu0 0.0
    %1406 = vmatprep.subr.mxu0 0.0
    %1407 = vmatpush2.msra.mxu0 0.0
    %1408 = vmatprep.subr.mxu0 0.0
    %1409 = vmatpush2.msra.mxu0 0.0
    %1410 = vmatprep.subr.mxu0 0.0
    %1411 = vmatpush2.msra.mxu0 0.0
    %1412 = vmatprep.subr.mxu0 0.0
    %1413 = vmatpush2.msra.mxu0 0.0
    %1414 = vmatprep.subr.mxu0 0.0
    %1415 = vmatpush2.msra.mxu0 0.0
    %1416 = vmatprep.subr.mxu0 0.0
    %1417 = vmatpush2.msra.mxu0 0.0
    %1418 = vmatprep.mubr.f32.mxu0 0.0
    %1419 = vmatmul.mubr.f32.gmra.mxu0 %v1352
    %v1420 = vpop.f32.mrf.mxu0
    %v1421 = vadd.f32 %v220, %v1420
    %v1422 = vpop.f32.mrf.mxu0
    %1423 = vdwg.mxu0
    %s1424 = scalar_lea.vmem %s1, 12
    %v1425 = vld [vmem:[%s1424] sm:$0x3]
    %1427 = vset.pattern.permute.xlu0 0
    %1428 = vperm.xlu0 %1427, %v1425
    %v1429 = vpop.permute.xlu0 %1428
    %v1431 = vmul.f32 %v1429, %v625
    %1432 = vset.pattern.permute.xlu0 1
    %1433 = vperm.xlu0 %1432, %v1425
    %v1434 = vpop.permute.xlu0 %1433
    %v1436 = vmul.f32 %v1434, %v634
    %v1437 = vadd.f32 %v1431, %v1436
    %1438 = vset.pattern.permute.xlu0 2
    %1439 = vperm.xlu0 %1438, %v1425
    %v1440 = vpop.permute.xlu0 %1439
    %v1442 = vmul.f32 %v1440, %v644
    %v1443 = vadd.f32 %v1437, %v1442
    %1444 = vset.pattern.permute.xlu0 3
    %1445 = vperm.xlu0 %1444, %v1425
    %v1446 = vpop.permute.xlu0 %1445
    %v1448 = vmul.f32 %v1446, %v654
    %v1449 = vadd.f32 %v1443, %v1448
    %v1450 = vadd.f32 %v1449, %v221
    %v1451 = vmax.f32 %v1450, 0.0
    %v1452 = vmul.f32 %v1451, %v235
    %v1453 = vsel %vm660, %v1452, 0.0
    %1454 = vadd.xlane.f32.xlu0 %v1453
    %v1455 = vpop.xlane.xlu0 %1454
    %v1456 = vsel %vm542, %v1455, -inf
    %v1457 = vrot.slane %v1456, 4
    %v1458 = vmax.f32 %v1456, %v1457
    %v1459 = vrot.slane %v1458, 2
    %v1460 = vmax.f32 %v1458, %v1459
    %v1461 = vrot.slane %v1460, 1
    %v1462 = vmax.f32 %v1460, %v1461
    %v1463 = vsub.f32 %v1455, %v1462
    %v1464 = vmul.f32 %v1463, 1.442695
    %v1465 = vpow.pop %v1464
    %v1466 = vsel %vm542, %v1465, 0.0
    %v1467 = vrot.slane %v1466, 4
    %v1468 = vadd.f32 %v1466, %v1467
    %v1469 = vrot.slane %v1468, 2
    %v1470 = vadd.f32 %v1468, %v1469
    %v1471 = vrot.slane %v1470, 1
    %v1472 = vadd.f32 %v1470, %v1471
    %v1473 = vrcp.pop %v1472
    %v1474 = vmul.f32 %v1465, %v1473
    %v1475 = vmul.f32 %v1474, %v1350
    %v1476 = vadd.f32 %v1344, %v1475
    %1477 = vset.pattern.permute.xlu0 7
    %1478 = vperm.xlu0 %1477, %v531
    %v1479 = vpop.permute.xlu0 %1478
    %vm1480 = vcmp.eq.s32.totalorder %v1479, %v530
    %v1481 = vsel %vm1480, 1, 0
    %v1482 = vcvt.s32.f32 %v1481
    %v1484 = vsel %vm538, %v1482, 0
    %1486 = vmatprep.subr.mxu0 0.0
    %1487 = vmatpush1.msra.mxu0 0.0
    %1488 = vmatprep.subr.mxu0 0.0
    %1489 = vmatpush1.msra.mxu0 0.0
    %1490 = vmatprep.subr.mxu0 0.0
    %1491 = vmatpush1.msra.mxu0 0.0
    %1492 = vmatprep.subr.mxu0 0.0
    %1493 = vmatpush1.msra.mxu0 0.0
    %1494 = vmatprep.subr.mxu0 0.0
    %1495 = vmatpush1.msra.mxu0 0.0
    %1496 = vmatprep.subr.mxu0 0.0
    %1497 = vmatpush1.msra.mxu0 0.0
    %1498 = vmatprep.subr.mxu0 0.0
    %1499 = vmatpush1.msra.mxu0 0.0
    %1500 = vmatprep.subr.mxu0 0.0
    %1501 = vmatpush1.msra.mxu0 0.0
    %1502 = vmatprep.subr.mxu0 0.0
    %1503 = vmatpush1.msra.mxu0 0.0
    %1504 = vmatprep.subr.mxu0 0.0
    %1505 = vmatpush1.msra.mxu0 0.0
    %1506 = vmatprep.subr.mxu0 0.0
    %1507 = vmatpush1.msra.mxu0 0.0
    %1508 = vmatprep.subr.mxu0 0.0
    %1509 = vmatpush1.msra.mxu0 0.0
    %1510 = vmatprep.subr.mxu0 0.0
    %1511 = vmatpush1.msra.mxu0 0.0
    %1512 = vmatprep.subr.mxu0 0.0
    %1513 = vmatpush1.msra.mxu0 0.0
    %1514 = vmatprep.subr.mxu0 0.0
    %1515 = vmatpush1.msra.mxu0 %v544
    %1516 = vmatprep.subr.mxu0 0.0
    %1517 = vmatpush1.msra.mxu0 %v147
    %1518 = vmatprep.subr.mxu0 0.0
    %1519 = vmatpush2.msra.mxu0 0.0
    %1520 = vmatprep.subr.mxu0 0.0
    %1521 = vmatpush2.msra.mxu0 0.0
    %1522 = vmatprep.subr.mxu0 0.0
    %1523 = vmatpush2.msra.mxu0 0.0
    %1524 = vmatprep.subr.mxu0 0.0
    %1525 = vmatpush2.msra.mxu0 0.0
    %1526 = vmatprep.subr.mxu0 0.0
    %1527 = vmatpush2.msra.mxu0 0.0
    %1528 = vmatprep.subr.mxu0 0.0
    %1529 = vmatpush2.msra.mxu0 0.0
    %1530 = vmatprep.subr.mxu0 0.0
    %1531 = vmatpush2.msra.mxu0 0.0
    %1532 = vmatprep.subr.mxu0 0.0
    %1533 = vmatpush2.msra.mxu0 0.0
    %1534 = vmatprep.subr.mxu0 0.0
    %1535 = vmatpush2.msra.mxu0 0.0
    %1536 = vmatprep.subr.mxu0 0.0
    %1537 = vmatpush2.msra.mxu0 0.0
    %1538 = vmatprep.subr.mxu0 0.0
    %1539 = vmatpush2.msra.mxu0 0.0
    %1540 = vmatprep.subr.mxu0 0.0
    %1541 = vmatpush2.msra.mxu0 0.0
    %1542 = vmatprep.subr.mxu0 0.0
    %1543 = vmatpush2.msra.mxu0 0.0
    %1544 = vmatprep.subr.mxu0 0.0
    %1545 = vmatpush2.msra.mxu0 0.0
    %1546 = vmatprep.subr.mxu0 0.0
    %1547 = vmatpush2.msra.mxu0 0.0
    %1548 = vmatprep.subr.mxu0 0.0
    %1549 = vmatpush2.msra.mxu0 0.0
    %1550 = vmatprep.mubr.f32.mxu0 0.0
    %1551 = vmatmul.mubr.f32.gmra.mxu0 %v1484
    %v1552 = vpop.f32.mrf.mxu0
    %v1553 = vadd.f32 %v220, %v1552
    %v1554 = vpop.f32.mrf.mxu0
    %1555 = vdwg.mxu0
    %s1556 = scalar_lea.vmem %s1, 14
    %v1557 = vld [vmem:[%s1556] sm:$0x3]
    %1559 = vset.pattern.permute.xlu0 0
    %1560 = vperm.xlu0 %1559, %v1557
    %v1561 = vpop.permute.xlu0 %1560
    %v1563 = vmul.f32 %v1561, %v625
    %1564 = vset.pattern.permute.xlu0 1
    %1565 = vperm.xlu0 %1564, %v1557
    %v1566 = vpop.permute.xlu0 %1565
    %v1568 = vmul.f32 %v1566, %v634
    %v1569 = vadd.f32 %v1563, %v1568
    %1570 = vset.pattern.permute.xlu0 2
    %1571 = vperm.xlu0 %1570, %v1557
    %v1572 = vpop.permute.xlu0 %1571
    %v1574 = vmul.f32 %v1572, %v644
    %v1575 = vadd.f32 %v1569, %v1574
    %1576 = vset.pattern.permute.xlu0 3
    %1577 = vperm.xlu0 %1576, %v1557
    %v1578 = vpop.permute.xlu0 %1577
    %v1580 = vmul.f32 %v1578, %v654
    %v1581 = vadd.f32 %v1575, %v1580
    %v1582 = vadd.f32 %v1581, %v221
    %v1583 = vmax.f32 %v1582, 0.0
    %v1584 = vmul.f32 %v1583, %v235
    %v1585 = vsel %vm660, %v1584, 0.0
    %1586 = vadd.xlane.f32.xlu0 %v1585
    %v1587 = vpop.xlane.xlu0 %1586
    %v1588 = vsel %vm542, %v1587, -inf
    %v1589 = vrot.slane %v1588, 4
    %v1590 = vmax.f32 %v1588, %v1589
    %v1591 = vrot.slane %v1590, 2
    %v1592 = vmax.f32 %v1590, %v1591
    %v1593 = vrot.slane %v1592, 1
    %v1594 = vmax.f32 %v1592, %v1593
    %v1595 = vsub.f32 %v1587, %v1594
    %v1596 = vmul.f32 %v1595, 1.442695
    %v1597 = vpow.pop %v1596
    %v1598 = vsel %vm542, %v1597, 0.0
    %v1599 = vrot.slane %v1598, 4
    %v1600 = vadd.f32 %v1598, %v1599
    %v1601 = vrot.slane %v1600, 2
    %v1602 = vadd.f32 %v1600, %v1601
    %v1603 = vrot.slane %v1602, 1
    %v1604 = vadd.f32 %v1602, %v1603
    %v1605 = vrcp.pop %v1604
    %v1606 = vmul.f32 %v1597, %v1605
    %v1607 = vmul.f32 %v1606, %v1482
    %v1608 = vadd.f32 %v1476, %v1607
    %v1610 = vsel %vm538, %v1608, 0
    %v1613 = vsel %vm542, %v528, 0
    %1615 = vmatprep.subr.mxu0 0.0
    %1616 = vmatpush1.msra.mxu0 0.0
    %1617 = vmatprep.subr.mxu0 0.0
    %1618 = vmatpush1.msra.mxu0 0.0
    %1619 = vmatprep.subr.mxu0 0.0
    %1620 = vmatpush1.msra.mxu0 0.0
    %1621 = vmatprep.subr.mxu0 0.0
    %1622 = vmatpush1.msra.mxu0 0.0
    %1623 = vmatprep.subr.mxu0 0.0
    %1624 = vmatpush1.msra.mxu0 0.0
    %1625 = vmatprep.subr.mxu0 0.0
    %1626 = vmatpush1.msra.mxu0 0.0
    %1627 = vmatprep.subr.mxu0 0.0
    %1628 = vmatpush1.msra.mxu0 0.0
    %1629 = vmatprep.subr.mxu0 0.0
    %1630 = vmatpush1.msra.mxu0 0.0
    %1631 = vmatprep.subr.mxu0 0.0
    %1632 = vmatpush1.msra.mxu0 0.0
    %1633 = vmatprep.subr.mxu0 0.0
    %1634 = vmatpush1.msra.mxu0 0.0
    %1635 = vmatprep.subr.mxu0 0.0
    %1636 = vmatpush1.msra.mxu0 0.0
    %1637 = vmatprep.subr.mxu0 0.0
    %1638 = vmatpush1.msra.mxu0 0.0
    %1639 = vmatprep.subr.mxu0 0.0
    %1640 = vmatpush1.msra.mxu0 0.0
    %1641 = vmatprep.subr.mxu0 0.0
    %1642 = vmatpush1.msra.mxu0 0.0
    %1643 = vmatprep.subr.mxu0 0.0
    %1644 = vmatpush1.msra.mxu0 %v1613
    %1645 = vmatprep.subr.mxu0 0.0
    %1646 = vmatpush1.msra.mxu0 %v527
    %1647 = vmatprep.subr.mxu0 0.0
    %1648 = vmatpush2.msra.mxu0 0.0
    %1649 = vmatprep.subr.mxu0 0.0
    %1650 = vmatpush2.msra.mxu0 0.0
    %1651 = vmatprep.subr.mxu0 0.0
    %1652 = vmatpush2.msra.mxu0 0.0
    %1653 = vmatprep.subr.mxu0 0.0
    %1654 = vmatpush2.msra.mxu0 0.0
    %1655 = vmatprep.subr.mxu0 0.0
    %1656 = vmatpush2.msra.mxu0 0.0
    %1657 = vmatprep.subr.mxu0 0.0
    %1658 = vmatpush2.msra.mxu0 0.0
    %1659 = vmatprep.subr.mxu0 0.0
    %1660 = vmatpush2.msra.mxu0 0.0
    %1661 = vmatprep.subr.mxu0 0.0
    %1662 = vmatpush2.msra.mxu0 0.0
    %1663 = vmatprep.subr.mxu0 0.0
    %1664 = vmatpush2.msra.mxu0 0.0
    %1665 = vmatprep.subr.mxu0 0.0
    %1666 = vmatpush2.msra.mxu0 0.0
    %1667 = vmatprep.subr.mxu0 0.0
    %1668 = vmatpush2.msra.mxu0 0.0
    %1669 = vmatprep.subr.mxu0 0.0
    %1670 = vmatpush2.msra.mxu0 0.0
    %1671 = vmatprep.subr.mxu0 0.0
    %1672 = vmatpush2.msra.mxu0 0.0
    %1673 = vmatprep.subr.mxu0 0.0
    %1674 = vmatpush2.msra.mxu0 0.0
    %1675 = vmatprep.subr.mxu0 0.0
    %1676 = vmatpush2.msra.mxu0 0.0
    %1677 = vmatprep.subr.mxu0 0.0
    %1678 = vmatpush2.msra.mxu0 0.0
    %1679 = vmatprep.mubr.f32.mxu0 0.0
    %1680 = vmatmul.mubr.f32.gmra.mxu0 %v1610
    %v1681 = vpop.f32.mrf.mxu0
    %v1682 = vadd.f32 0.0, %v1681
    %v1683 = vpop.f32.mrf.mxu0
    %1684 = vdwg.mxu0
    %vm1685 = vcmask 130048
    %v1687 = vsel %vm1685, 0.0, 0
    %1689 = vmatprep.subr.mxu0 0.0
    %1690 = vmatpush1.msra.mxu0 0.0
    %1691 = vmatprep.subr.mxu0 0.0
    %1692 = vmatpush1.msra.mxu0 0.0
    %1693 = vmatprep.subr.mxu0 0.0
    %1694 = vmatpush1.msra.mxu0 0.0
    %1695 = vmatprep.subr.mxu0 0.0
    %1696 = vmatpush1.msra.mxu0 0.0
    %1697 = vmatprep.subr.mxu0 0.0
    %1698 = vmatpush1.msra.mxu0 0.0
    %1699 = vmatprep.subr.mxu0 0.0
    %1700 = vmatpush1.msra.mxu0 0.0
    %1701 = vmatprep.subr.mxu0 0.0
    %1702 = vmatpush1.msra.mxu0 0.0
    %1703 = vmatprep.subr.mxu0 0.0
    %1704 = vmatpush1.msra.mxu0 0.0
    %1705 = vmatprep.subr.mxu0 0.0
    %1706 = vmatpush1.msra.mxu0 0.0
    %1707 = vmatprep.subr.mxu0 0.0
    %1708 = vmatpush1.msra.mxu0 0.0
    %1709 = vmatprep.subr.mxu0 0.0
    %1710 = vmatpush1.msra.mxu0 0.0
    %1711 = vmatprep.subr.mxu0 0.0
    %1712 = vmatpush1.msra.mxu0 0.0
    %1713 = vmatprep.subr.mxu0 0.0
    %1714 = vmatpush1.msra.mxu0 0.0
    %1715 = vmatprep.subr.mxu0 0.0
    %1716 = vmatpush1.msra.mxu0 0.0
    %1717 = vmatprep.subr.mxu0 0.0
    %1718 = vmatpush1.msra.mxu0 %v150
    %1719 = vmatprep.subr.mxu0 0.0
    %1720 = vmatpush1.msra.mxu0 %v149
    %1721 = vmatprep.subr.mxu0 0.0
    %1722 = vmatpush2.msra.mxu0 0.0
    %1723 = vmatprep.subr.mxu0 0.0
    %1724 = vmatpush2.msra.mxu0 0.0
    %1725 = vmatprep.subr.mxu0 0.0
    %1726 = vmatpush2.msra.mxu0 0.0
    %1727 = vmatprep.subr.mxu0 0.0
    %1728 = vmatpush2.msra.mxu0 0.0
    %1729 = vmatprep.subr.mxu0 0.0
    %1730 = vmatpush2.msra.mxu0 0.0
    %1731 = vmatprep.subr.mxu0 0.0
    %1732 = vmatpush2.msra.mxu0 0.0
    %1733 = vmatprep.subr.mxu0 0.0
    %1734 = vmatpush2.msra.mxu0 0.0
    %1735 = vmatprep.subr.mxu0 0.0
    %1736 = vmatpush2.msra.mxu0 0.0
    %1737 = vmatprep.subr.mxu0 0.0
    %1738 = vmatpush2.msra.mxu0 0.0
    %1739 = vmatprep.subr.mxu0 0.0
    %1740 = vmatpush2.msra.mxu0 0.0
    %1741 = vmatprep.subr.mxu0 0.0
    %1742 = vmatpush2.msra.mxu0 0.0
    %1743 = vmatprep.subr.mxu0 0.0
    %1744 = vmatpush2.msra.mxu0 0.0
    %1745 = vmatprep.subr.mxu0 0.0
    %1746 = vmatpush2.msra.mxu0 0.0
    %1747 = vmatprep.subr.mxu0 0.0
    %1748 = vmatpush2.msra.mxu0 0.0
    %1749 = vmatprep.subr.mxu0 0.0
    %1750 = vmatpush2.msra.mxu0 0.0
    %1751 = vmatprep.subr.mxu0 0.0
    %1752 = vmatpush2.msra.mxu0 0.0
    %1753 = vmatprep.mubr.f32.mxu0 0.0
    %1754 = vmatmul.mubr.f32.gmra.mxu0 %v1687
    %v1755 = vpop.f32.mrf.mxu0
    %v1756 = vadd.f32 0.0, %v1755
    %v1757 = vpop.f32.mrf.mxu0
    %1758 = vdwg.mxu0
    %v1759 = vadd.f32 %v613, %v1756
    %v1760 = vxor.u32 %v1759, 2147483648
    %v1761 = vmul.f32 %v1760, 1.442695
    %v1762 = vpow.pop %v1761
    %v1763 = vadd.f32 %v1762, 1.0
    %v1764 = vrcp.pop %v1763
    %v1765 = vmul.f32 1.0, %v1764
    %v1766 = vtanh.pop %v1759
    %v1767 = vmul.f32 %v1765, 0.0
    %1769 = vrot.lane.b32.xlu0 %v1766, 80
    %v1770 = vpop.permute.xlu0 %1769
    %v1772 = vmul.f32 %v1765, %v1770
    %1774 = vrot.lane.b32.xlu0 %v1772, 16
    %v1775 = vpop.permute.xlu0 %1774
    %v1777 = vadd.f32 %v1767, %v1775
    %v1778 = vtanh.pop %v1777
    %1780 = vrot.lane.b32.xlu0 %v1778, 16
    %v1781 = vpop.permute.xlu0 %1780
    %v1783 = vmul.f32 %v1765, %v1781
    %1785 = vrot.lane.b32.xlu0 %v1783, 96
    %v1786 = vpop.permute.xlu0 %1785
    %v1787 = vsel %vm1685, %v1786, 0
    %1789 = vmatprep.subr.mxu0 0.0
    %1790 = vmatpush1.msra.mxu0 0.0
    %1791 = vmatprep.subr.mxu0 0.0
    %1792 = vmatpush1.msra.mxu0 0.0
    %1793 = vmatprep.subr.mxu0 0.0
    %1794 = vmatpush1.msra.mxu0 0.0
    %1795 = vmatprep.subr.mxu0 0.0
    %1796 = vmatpush1.msra.mxu0 0.0
    %1797 = vmatprep.subr.mxu0 0.0
    %1798 = vmatpush1.msra.mxu0 0.0
    %1799 = vmatprep.subr.mxu0 0.0
    %1800 = vmatpush1.msra.mxu0 0.0
    %1801 = vmatprep.subr.mxu0 0.0
    %1802 = vmatpush1.msra.mxu0 0.0
    %1803 = vmatprep.subr.mxu0 0.0
    %1804 = vmatpush1.msra.mxu0 0.0
    %1805 = vmatprep.subr.mxu0 0.0
    %1806 = vmatpush1.msra.mxu0 0.0
    %1807 = vmatprep.subr.mxu0 0.0
    %1808 = vmatpush1.msra.mxu0 0.0
    %1809 = vmatprep.subr.mxu0 0.0
    %1810 = vmatpush1.msra.mxu0 0.0
    %1811 = vmatprep.subr.mxu0 0.0
    %1812 = vmatpush1.msra.mxu0 0.0
    %1813 = vmatprep.subr.mxu0 0.0
    %1814 = vmatpush1.msra.mxu0 0.0
    %1815 = vmatprep.subr.mxu0 0.0
    %1816 = vmatpush1.msra.mxu0 0.0
    %1817 = vmatprep.subr.mxu0 0.0
    %1818 = vmatpush1.msra.mxu0 %v150
    %1819 = vmatprep.subr.mxu0 0.0
    %1820 = vmatpush1.msra.mxu0 %v149
    %1821 = vmatprep.subr.mxu0 0.0
    %1822 = vmatpush2.msra.mxu0 0.0
    %1823 = vmatprep.subr.mxu0 0.0
    %1824 = vmatpush2.msra.mxu0 0.0
    %1825 = vmatprep.subr.mxu0 0.0
    %1826 = vmatpush2.msra.mxu0 0.0
    %1827 = vmatprep.subr.mxu0 0.0
    %1828 = vmatpush2.msra.mxu0 0.0
    %1829 = vmatprep.subr.mxu0 0.0
    %1830 = vmatpush2.msra.mxu0 0.0
    %1831 = vmatprep.subr.mxu0 0.0
    %1832 = vmatpush2.msra.mxu0 0.0
    %1833 = vmatprep.subr.mxu0 0.0
    %1834 = vmatpush2.msra.mxu0 0.0
    %1835 = vmatprep.subr.mxu0 0.0
    %1836 = vmatpush2.msra.mxu0 0.0
    %1837 = vmatprep.subr.mxu0 0.0
    %1838 = vmatpush2.msra.mxu0 0.0
    %1839 = vmatprep.subr.mxu0 0.0
    %1840 = vmatpush2.msra.mxu0 0.0
    %1841 = vmatprep.subr.mxu0 0.0
    %1842 = vmatpush2.msra.mxu0 0.0
    %1843 = vmatprep.subr.mxu0 0.0
    %1844 = vmatpush2.msra.mxu0 0.0
    %1845 = vmatprep.subr.mxu0 0.0
    %1846 = vmatpush2.msra.mxu0 0.0
    %1847 = vmatprep.subr.mxu0 0.0
    %1848 = vmatpush2.msra.mxu0 0.0
    %1849 = vmatprep.subr.mxu0 0.0
    %1850 = vmatpush2.msra.mxu0 0.0
    %1851 = vmatprep.subr.mxu0 0.0
    %1852 = vmatpush2.msra.mxu0 0.0
    %1853 = vmatprep.mubr.f32.mxu0 0.0
    %1854 = vmatmul.mubr.f32.gmra.mxu0 %v1787
    %v1855 = vpop.f32.mrf.mxu0
    %v1856 = vadd.f32 0.0, %v1855
    %v1857 = vpop.f32.mrf.mxu0
    %1858 = vdwg.mxu0
    %v1859 = vadd.f32 %v761, %v1856
    %v1860 = vxor.u32 %v1859, 2147483648
    %v1861 = vmul.f32 %v1860, 1.442695
    %v1862 = vpow.pop %v1861
    %v1863 = vadd.f32 %v1862, 1.0
    %v1864 = vrcp.pop %v1863
    %v1865 = vmul.f32 1.0, %v1864
    %v1866 = vtanh.pop %v1859
    %v1867 = vmul.f32 %v1865, %v1777
    %1869 = vrot.lane.b32.xlu0 %v1866, 80
    %v1870 = vpop.permute.xlu0 %1869
    %v1872 = vmul.f32 %v1865, %v1870
    %1874 = vrot.lane.b32.xlu0 %v1872, 16
    %v1875 = vpop.permute.xlu0 %1874
    %v1877 = vadd.f32 %v1867, %v1875
    %v1878 = vtanh.pop %v1877
    %1880 = vrot.lane.b32.xlu0 %v1878, 16
    %v1881 = vpop.permute.xlu0 %1880
    %v1883 = vmul.f32 %v1865, %v1881
    %1885 = vrot.lane.b32.xlu0 %v1883, 96
    %v1886 = vpop.permute.xlu0 %1885
    %v1887 = vsel %vm1685, %v1886, 0
    %1889 = vmatprep.subr.mxu0 0.0
    %1890 = vmatpush1.msra.mxu0 0.0
    %1891 = vmatprep.subr.mxu0 0.0
    %1892 = vmatpush1.msra.mxu0 0.0
    %1893 = vmatprep.subr.mxu0 0.0
    %1894 = vmatpush1.msra.mxu0 0.0
    %1895 = vmatprep.subr.mxu0 0.0
    %1896 = vmatpush1.msra.mxu0 0.0
    %1897 = vmatprep.subr.mxu0 0.0
    %1898 = vmatpush1.msra.mxu0 0.0
    %1899 = vmatprep.subr.mxu0 0.0
    %1900 = vmatpush1.msra.mxu0 0.0
    %1901 = vmatprep.subr.mxu0 0.0
    %1902 = vmatpush1.msra.mxu0 0.0
    %1903 = vmatprep.subr.mxu0 0.0
    %1904 = vmatpush1.msra.mxu0 0.0
    %1905 = vmatprep.subr.mxu0 0.0
    %1906 = vmatpush1.msra.mxu0 0.0
    %1907 = vmatprep.subr.mxu0 0.0
    %1908 = vmatpush1.msra.mxu0 0.0
    %1909 = vmatprep.subr.mxu0 0.0
    %1910 = vmatpush1.msra.mxu0 0.0
    %1911 = vmatprep.subr.mxu0 0.0
    %1912 = vmatpush1.msra.mxu0 0.0
    %1913 = vmatprep.subr.mxu0 0.0
    %1914 = vmatpush1.msra.mxu0 0.0
    %1915 = vmatprep.subr.mxu0 0.0
    %1916 = vmatpush1.msra.mxu0 0.0
    %1917 = vmatprep.subr.mxu0 0.0
    %1918 = vmatpush1.msra.mxu0 %v150
    %1919 = vmatprep.subr.mxu0 0.0
    %1920 = vmatpush1.msra.mxu0 %v149
    %1921 = vmatprep.subr.mxu0 0.0
    %1922 = vmatpush2.msra.mxu0 0.0
    %1923 = vmatprep.subr.mxu0 0.0
    %1924 = vmatpush2.msra.mxu0 0.0
    %1925 = vmatprep.subr.mxu0 0.0
    %1926 = vmatpush2.msra.mxu0 0.0
    %1927 = vmatprep.subr.mxu0 0.0
    %1928 = vmatpush2.msra.mxu0 0.0
    %1929 = vmatprep.subr.mxu0 0.0
    %1930 = vmatpush2.msra.mxu0 0.0
    %1931 = vmatprep.subr.mxu0 0.0
    %1932 = vmatpush2.msra.mxu0 0.0
    %1933 = vmatprep.subr.mxu0 0.0
    %1934 = vmatpush2.msra.mxu0 0.0
    %1935 = vmatprep.subr.mxu0 0.0
    %1936 = vmatpush2.msra.mxu0 0.0
    %1937 = vmatprep.subr.mxu0 0.0
    %1938 = vmatpush2.msra.mxu0 0.0
    %1939 = vmatprep.subr.mxu0 0.0
    %1940 = vmatpush2.msra.mxu0 0.0
    %1941 = vmatprep.subr.mxu0 0.0
    %1942 = vmatpush2.msra.mxu0 0.0
    %1943 = vmatprep.subr.mxu0 0.0
    %1944 = vmatpush2.msra.mxu0 0.0
    %1945 = vmatprep.subr.mxu0 0.0
    %1946 = vmatpush2.msra.mxu0 0.0
    %1947 = vmatprep.subr.mxu0 0.0
    %1948 = vmatpush2.msra.mxu0 0.0
    %1949 = vmatprep.subr.mxu0 0.0
    %1950 = vmatpush2.msra.mxu0 0.0
    %1951 = vmatprep.subr.mxu0 0.0
    %1952 = vmatpush2.msra.mxu0 0.0
    %1953 = vmatprep.mubr.f32.mxu0 0.0
    %1954 = vmatmul.mubr.f32.gmra.mxu0 %v1887
    %v1955 = vpop.f32.mrf.mxu0
    %v1956 = vadd.f32 0.0, %v1955
    %v1957 = vpop.f32.mrf.mxu0
    %1958 = vdwg.mxu0
    %v1959 = vadd.f32 %v893, %v1956
    %v1960 = vxor.u32 %v1959, 2147483648
    %v1961 = vmul.f32 %v1960, 1.442695
    %v1962 = vpow.pop %v1961
    %v1963 = vadd.f32 %v1962, 1.0
    %v1964 = vrcp.pop %v1963
    %v1965 = vmul.f32 1.0, %v1964
    %v1966 = vtanh.pop %v1959
    %v1967 = vmul.f32 %v1965, %v1877
    %1969 = vrot.lane.b32.xlu0 %v1966, 80
    %v1970 = vpop.permute.xlu0 %1969
    %v1972 = vmul.f32 %v1965, %v1970
    %1974 = vrot.lane.b32.xlu0 %v1972, 16
    %v1975 = vpop.permute.xlu0 %1974
    %v1977 = vadd.f32 %v1967, %v1975
    %v1978 = vtanh.pop %v1977
    %1980 = vrot.lane.b32.xlu0 %v1978, 16
    %v1981 = vpop.permute.xlu0 %1980
    %v1983 = vmul.f32 %v1965, %v1981
    %1985 = vrot.lane.b32.xlu0 %v1983, 96
    %v1986 = vpop.permute.xlu0 %1985
    %v1987 = vsel %vm1685, %v1986, 0
    %1989 = vmatprep.subr.mxu0 0.0
    %1990 = vmatpush1.msra.mxu0 0.0
    %1991 = vmatprep.subr.mxu0 0.0
    %1992 = vmatpush1.msra.mxu0 0.0
    %1993 = vmatprep.subr.mxu0 0.0
    %1994 = vmatpush1.msra.mxu0 0.0
    %1995 = vmatprep.subr.mxu0 0.0
    %1996 = vmatpush1.msra.mxu0 0.0
    %1997 = vmatprep.subr.mxu0 0.0
    %1998 = vmatpush1.msra.mxu0 0.0
    %1999 = vmatprep.subr.mxu0 0.0
    %2000 = vmatpush1.msra.mxu0 0.0
    %2001 = vmatprep.subr.mxu0 0.0
    %2002 = vmatpush1.msra.mxu0 0.0
    %2003 = vmatprep.subr.mxu0 0.0
    %2004 = vmatpush1.msra.mxu0 0.0
    %2005 = vmatprep.subr.mxu0 0.0
    %2006 = vmatpush1.msra.mxu0 0.0
    %2007 = vmatprep.subr.mxu0 0.0
    %2008 = vmatpush1.msra.mxu0 0.0
    %2009 = vmatprep.subr.mxu0 0.0
    %2010 = vmatpush1.msra.mxu0 0.0
    %2011 = vmatprep.subr.mxu0 0.0
    %2012 = vmatpush1.msra.mxu0 0.0
    %2013 = vmatprep.subr.mxu0 0.0
    %2014 = vmatpush1.msra.mxu0 0.0
    %2015 = vmatprep.subr.mxu0 0.0
    %2016 = vmatpush1.msra.mxu0 0.0
    %2017 = vmatprep.subr.mxu0 0.0
    %2018 = vmatpush1.msra.mxu0 %v150
    %2019 = vmatprep.subr.mxu0 0.0
    %2020 = vmatpush1.msra.mxu0 %v149
    %2021 = vmatprep.subr.mxu0 0.0
    %2022 = vmatpush2.msra.mxu0 0.0
    %2023 = vmatprep.subr.mxu0 0.0
    %2024 = vmatpush2.msra.mxu0 0.0
    %2025 = vmatprep.subr.mxu0 0.0
    %2026 = vmatpush2.msra.mxu0 0.0
    %2027 = vmatprep.subr.mxu0 0.0
    %2028 = vmatpush2.msra.mxu0 0.0
    %2029 = vmatprep.subr.mxu0 0.0
    %2030 = vmatpush2.msra.mxu0 0.0
    %2031 = vmatprep.subr.mxu0 0.0
    %2032 = vmatpush2.msra.mxu0 0.0
    %2033 = vmatprep.subr.mxu0 0.0
    %2034 = vmatpush2.msra.mxu0 0.0
    %2035 = vmatprep.subr.mxu0 0.0
    %2036 = vmatpush2.msra.mxu0 0.0
    %2037 = vmatprep.subr.mxu0 0.0
    %2038 = vmatpush2.msra.mxu0 0.0
    %2039 = vmatprep.subr.mxu0 0.0
    %2040 = vmatpush2.msra.mxu0 0.0
    %2041 = vmatprep.subr.mxu0 0.0
    %2042 = vmatpush2.msra.mxu0 0.0
    %2043 = vmatprep.subr.mxu0 0.0
    %2044 = vmatpush2.msra.mxu0 0.0
    %2045 = vmatprep.subr.mxu0 0.0
    %2046 = vmatpush2.msra.mxu0 0.0
    %2047 = vmatprep.subr.mxu0 0.0
    %2048 = vmatpush2.msra.mxu0 0.0
    %2049 = vmatprep.subr.mxu0 0.0
    %2050 = vmatpush2.msra.mxu0 0.0
    %2051 = vmatprep.subr.mxu0 0.0
    %2052 = vmatpush2.msra.mxu0 0.0
    %2053 = vmatprep.mubr.f32.mxu0 0.0
    %2054 = vmatmul.mubr.f32.gmra.mxu0 %v1987
    %v2055 = vpop.f32.mrf.mxu0
    %v2056 = vadd.f32 0.0, %v2055
    %v2057 = vpop.f32.mrf.mxu0
    %2058 = vdwg.mxu0
    %v2059 = vadd.f32 %v1025, %v2056
    %v2060 = vxor.u32 %v2059, 2147483648
    %v2061 = vmul.f32 %v2060, 1.442695
    %v2062 = vpow.pop %v2061
    %v2063 = vadd.f32 %v2062, 1.0
    %v2064 = vrcp.pop %v2063
    %v2065 = vmul.f32 1.0, %v2064
    %v2066 = vtanh.pop %v2059
    %v2067 = vmul.f32 %v2065, %v1977
    %2069 = vrot.lane.b32.xlu0 %v2066, 80
    %v2070 = vpop.permute.xlu0 %2069
    %v2072 = vmul.f32 %v2065, %v2070
    %2074 = vrot.lane.b32.xlu0 %v2072, 16
    %v2075 = vpop.permute.xlu0 %2074
    %v2077 = vadd.f32 %v2067, %v2075
    %v2078 = vtanh.pop %v2077
    %2080 = vrot.lane.b32.xlu0 %v2078, 16
    %v2081 = vpop.permute.xlu0 %2080
    %v2083 = vmul.f32 %v2065, %v2081
    %2085 = vrot.lane.b32.xlu0 %v2083, 96
    %v2086 = vpop.permute.xlu0 %2085
    %v2087 = vsel %vm1685, %v2086, 0
    %2089 = vmatprep.subr.mxu0 0.0
    %2090 = vmatpush1.msra.mxu0 0.0
    %2091 = vmatprep.subr.mxu0 0.0
    %2092 = vmatpush1.msra.mxu0 0.0
    %2093 = vmatprep.subr.mxu0 0.0
    %2094 = vmatpush1.msra.mxu0 0.0
    %2095 = vmatprep.subr.mxu0 0.0
    %2096 = vmatpush1.msra.mxu0 0.0
    %2097 = vmatprep.subr.mxu0 0.0
    %2098 = vmatpush1.msra.mxu0 0.0
    %2099 = vmatprep.subr.mxu0 0.0
    %2100 = vmatpush1.msra.mxu0 0.0
    %2101 = vmatprep.subr.mxu0 0.0
    %2102 = vmatpush1.msra.mxu0 0.0
    %2103 = vmatprep.subr.mxu0 0.0
    %2104 = vmatpush1.msra.mxu0 0.0
    %2105 = vmatprep.subr.mxu0 0.0
    %2106 = vmatpush1.msra.mxu0 0.0
    %2107 = vmatprep.subr.mxu0 0.0
    %2108 = vmatpush1.msra.mxu0 0.0
    %2109 = vmatprep.subr.mxu0 0.0
    %2110 = vmatpush1.msra.mxu0 0.0
    %2111 = vmatprep.subr.mxu0 0.0
    %2112 = vmatpush1.msra.mxu0 0.0
    %2113 = vmatprep.subr.mxu0 0.0
    %2114 = vmatpush1.msra.mxu0 0.0
    %2115 = vmatprep.subr.mxu0 0.0
    %2116 = vmatpush1.msra.mxu0 0.0
    %2117 = vmatprep.subr.mxu0 0.0
    %2118 = vmatpush1.msra.mxu0 %v150
    %2119 = vmatprep.subr.mxu0 0.0
    %2120 = vmatpush1.msra.mxu0 %v149
    %2121 = vmatprep.subr.mxu0 0.0
    %2122 = vmatpush2.msra.mxu0 0.0
    %2123 = vmatprep.subr.mxu0 0.0
    %2124 = vmatpush2.msra.mxu0 0.0
    %2125 = vmatprep.subr.mxu0 0.0
    %2126 = vmatpush2.msra.mxu0 0.0
    %2127 = vmatprep.subr.mxu0 0.0
    %2128 = vmatpush2.msra.mxu0 0.0
    %2129 = vmatprep.subr.mxu0 0.0
    %2130 = vmatpush2.msra.mxu0 0.0
    %2131 = vmatprep.subr.mxu0 0.0
    %2132 = vmatpush2.msra.mxu0 0.0
    %2133 = vmatprep.subr.mxu0 0.0
    %2134 = vmatpush2.msra.mxu0 0.0
    %2135 = vmatprep.subr.mxu0 0.0
    %2136 = vmatpush2.msra.mxu0 0.0
    %2137 = vmatprep.subr.mxu0 0.0
    %2138 = vmatpush2.msra.mxu0 0.0
    %2139 = vmatprep.subr.mxu0 0.0
    %2140 = vmatpush2.msra.mxu0 0.0
    %2141 = vmatprep.subr.mxu0 0.0
    %2142 = vmatpush2.msra.mxu0 0.0
    %2143 = vmatprep.subr.mxu0 0.0
    %2144 = vmatpush2.msra.mxu0 0.0
    %2145 = vmatprep.subr.mxu0 0.0
    %2146 = vmatpush2.msra.mxu0 0.0
    %2147 = vmatprep.subr.mxu0 0.0
    %2148 = vmatpush2.msra.mxu0 0.0
    %2149 = vmatprep.subr.mxu0 0.0
    %2150 = vmatpush2.msra.mxu0 0.0
    %2151 = vmatprep.subr.mxu0 0.0
    %2152 = vmatpush2.msra.mxu0 0.0
    %2153 = vmatprep.mubr.f32.mxu0 0.0
    %2154 = vmatmul.mubr.f32.gmra.mxu0 %v2087
    %v2155 = vpop.f32.mrf.mxu0
    %v2156 = vadd.f32 0.0, %v2155
    %v2157 = vpop.f32.mrf.mxu0
    %2158 = vdwg.mxu0
    %v2159 = vadd.f32 %v1157, %v2156
    %v2160 = vxor.u32 %v2159, 2147483648
    %v2161 = vmul.f32 %v2160, 1.442695
    %v2162 = vpow.pop %v2161
    %v2163 = vadd.f32 %v2162, 1.0
    %v2164 = vrcp.pop %v2163
    %v2165 = vmul.f32 1.0, %v2164
    %v2166 = vtanh.pop %v2159
    %v2167 = vmul.f32 %v2165, %v2077
    %2169 = vrot.lane.b32.xlu0 %v2166, 80
    %v2170 = vpop.permute.xlu0 %2169
    %v2172 = vmul.f32 %v2165, %v2170
    %2174 = vrot.lane.b32.xlu0 %v2172, 16
    %v2175 = vpop.permute.xlu0 %2174
    %v2177 = vadd.f32 %v2167, %v2175
    %v2178 = vtanh.pop %v2177
    %2180 = vrot.lane.b32.xlu0 %v2178, 16
    %v2181 = vpop.permute.xlu0 %2180
    %v2183 = vmul.f32 %v2165, %v2181
    %2185 = vrot.lane.b32.xlu0 %v2183, 96
    %v2186 = vpop.permute.xlu0 %2185
    %v2187 = vsel %vm1685, %v2186, 0
    %2189 = vmatprep.subr.mxu0 0.0
    %2190 = vmatpush1.msra.mxu0 0.0
    %2191 = vmatprep.subr.mxu0 0.0
    %2192 = vmatpush1.msra.mxu0 0.0
    %2193 = vmatprep.subr.mxu0 0.0
    %2194 = vmatpush1.msra.mxu0 0.0
    %2195 = vmatprep.subr.mxu0 0.0
    %2196 = vmatpush1.msra.mxu0 0.0
    %2197 = vmatprep.subr.mxu0 0.0
    %2198 = vmatpush1.msra.mxu0 0.0
    %2199 = vmatprep.subr.mxu0 0.0
    %2200 = vmatpush1.msra.mxu0 0.0
    %2201 = vmatprep.subr.mxu0 0.0
    %2202 = vmatpush1.msra.mxu0 0.0
    %2203 = vmatprep.subr.mxu0 0.0
    %2204 = vmatpush1.msra.mxu0 0.0
    %2205 = vmatprep.subr.mxu0 0.0
    %2206 = vmatpush1.msra.mxu0 0.0
    %2207 = vmatprep.subr.mxu0 0.0
    %2208 = vmatpush1.msra.mxu0 0.0
    %2209 = vmatprep.subr.mxu0 0.0
    %2210 = vmatpush1.msra.mxu0 0.0
    %2211 = vmatprep.subr.mxu0 0.0
    %2212 = vmatpush1.msra.mxu0 0.0
    %2213 = vmatprep.subr.mxu0 0.0
    %2214 = vmatpush1.msra.mxu0 0.0
    %2215 = vmatprep.subr.mxu0 0.0
    %2216 = vmatpush1.msra.mxu0 0.0
    %2217 = vmatprep.subr.mxu0 0.0
    %2218 = vmatpush1.msra.mxu0 %v150
    %2219 = vmatprep.subr.mxu0 0.0
    %2220 = vmatpush1.msra.mxu0 %v149
    %2221 = vmatprep.subr.mxu0 0.0
    %2222 = vmatpush2.msra.mxu0 0.0
    %2223 = vmatprep.subr.mxu0 0.0
    %2224 = vmatpush2.msra.mxu0 0.0
    %2225 = vmatprep.subr.mxu0 0.0
    %2226 = vmatpush2.msra.mxu0 0.0
    %2227 = vmatprep.subr.mxu0 0.0
    %2228 = vmatpush2.msra.mxu0 0.0
    %2229 = vmatprep.subr.mxu0 0.0
    %2230 = vmatpush2.msra.mxu0 0.0
    %2231 = vmatprep.subr.mxu0 0.0
    %2232 = vmatpush2.msra.mxu0 0.0
    %2233 = vmatprep.subr.mxu0 0.0
    %2234 = vmatpush2.msra.mxu0 0.0
    %2235 = vmatprep.subr.mxu0 0.0
    %2236 = vmatpush2.msra.mxu0 0.0
    %2237 = vmatprep.subr.mxu0 0.0
    %2238 = vmatpush2.msra.mxu0 0.0
    %2239 = vmatprep.subr.mxu0 0.0
    %2240 = vmatpush2.msra.mxu0 0.0
    %2241 = vmatprep.subr.mxu0 0.0
    %2242 = vmatpush2.msra.mxu0 0.0
    %2243 = vmatprep.subr.mxu0 0.0
    %2244 = vmatpush2.msra.mxu0 0.0
    %2245 = vmatprep.subr.mxu0 0.0
    %2246 = vmatpush2.msra.mxu0 0.0
    %2247 = vmatprep.subr.mxu0 0.0
    %2248 = vmatpush2.msra.mxu0 0.0
    %2249 = vmatprep.subr.mxu0 0.0
    %2250 = vmatpush2.msra.mxu0 0.0
    %2251 = vmatprep.subr.mxu0 0.0
    %2252 = vmatpush2.msra.mxu0 0.0
    %2253 = vmatprep.mubr.f32.mxu0 0.0
    %2254 = vmatmul.mubr.f32.gmra.mxu0 %v2187
    %v2255 = vpop.f32.mrf.mxu0
    %v2256 = vadd.f32 0.0, %v2255
    %v2257 = vpop.f32.mrf.mxu0
    %2258 = vdwg.mxu0
    %v2259 = vadd.f32 %v1289, %v2256
    %v2260 = vxor.u32 %v2259, 2147483648
    %v2261 = vmul.f32 %v2260, 1.442695
    %v2262 = vpow.pop %v2261
    %v2263 = vadd.f32 %v2262, 1.0
    %v2264 = vrcp.pop %v2263
    %v2265 = vmul.f32 1.0, %v2264
    %v2266 = vtanh.pop %v2259
    %v2267 = vmul.f32 %v2265, %v2177
    %2269 = vrot.lane.b32.xlu0 %v2266, 80
    %v2270 = vpop.permute.xlu0 %2269
    %v2272 = vmul.f32 %v2265, %v2270
    %2274 = vrot.lane.b32.xlu0 %v2272, 16
    %v2275 = vpop.permute.xlu0 %2274
    %v2277 = vadd.f32 %v2267, %v2275
    %v2278 = vtanh.pop %v2277
    %2280 = vrot.lane.b32.xlu0 %v2278, 16
    %v2281 = vpop.permute.xlu0 %2280
    %v2283 = vmul.f32 %v2265, %v2281
    %2285 = vrot.lane.b32.xlu0 %v2283, 96
    %v2286 = vpop.permute.xlu0 %2285
    %v2287 = vsel %vm1685, %v2286, 0
    %2289 = vmatprep.subr.mxu0 0.0
    %2290 = vmatpush1.msra.mxu0 0.0
    %2291 = vmatprep.subr.mxu0 0.0
    %2292 = vmatpush1.msra.mxu0 0.0
    %2293 = vmatprep.subr.mxu0 0.0
    %2294 = vmatpush1.msra.mxu0 0.0
    %2295 = vmatprep.subr.mxu0 0.0
    %2296 = vmatpush1.msra.mxu0 0.0
    %2297 = vmatprep.subr.mxu0 0.0
    %2298 = vmatpush1.msra.mxu0 0.0
    %2299 = vmatprep.subr.mxu0 0.0
    %2300 = vmatpush1.msra.mxu0 0.0
    %2301 = vmatprep.subr.mxu0 0.0
    %2302 = vmatpush1.msra.mxu0 0.0
    %2303 = vmatprep.subr.mxu0 0.0
    %2304 = vmatpush1.msra.mxu0 0.0
    %2305 = vmatprep.subr.mxu0 0.0
    %2306 = vmatpush1.msra.mxu0 0.0
    %2307 = vmatprep.subr.mxu0 0.0
    %2308 = vmatpush1.msra.mxu0 0.0
    %2309 = vmatprep.subr.mxu0 0.0
    %2310 = vmatpush1.msra.mxu0 0.0
    %2311 = vmatprep.subr.mxu0 0.0
    %2312 = vmatpush1.msra.mxu0 0.0
    %2313 = vmatprep.subr.mxu0 0.0
    %2314 = vmatpush1.msra.mxu0 0.0
    %2315 = vmatprep.subr.mxu0 0.0
    %2316 = vmatpush1.msra.mxu0 0.0
    %2317 = vmatprep.subr.mxu0 0.0
    %2318 = vmatpush1.msra.mxu0 %v150
    %2319 = vmatprep.subr.mxu0 0.0
    %2320 = vmatpush1.msra.mxu0 %v149
    %2321 = vmatprep.subr.mxu0 0.0
    %2322 = vmatpush2.msra.mxu0 0.0
    %2323 = vmatprep.subr.mxu0 0.0
    %2324 = vmatpush2.msra.mxu0 0.0
    %2325 = vmatprep.subr.mxu0 0.0
    %2326 = vmatpush2.msra.mxu0 0.0
    %2327 = vmatprep.subr.mxu0 0.0
    %2328 = vmatpush2.msra.mxu0 0.0
    %2329 = vmatprep.subr.mxu0 0.0
    %2330 = vmatpush2.msra.mxu0 0.0
    %2331 = vmatprep.subr.mxu0 0.0
    %2332 = vmatpush2.msra.mxu0 0.0
    %2333 = vmatprep.subr.mxu0 0.0
    %2334 = vmatpush2.msra.mxu0 0.0
    %2335 = vmatprep.subr.mxu0 0.0
    %2336 = vmatpush2.msra.mxu0 0.0
    %2337 = vmatprep.subr.mxu0 0.0
    %2338 = vmatpush2.msra.mxu0 0.0
    %2339 = vmatprep.subr.mxu0 0.0
    %2340 = vmatpush2.msra.mxu0 0.0
    %2341 = vmatprep.subr.mxu0 0.0
    %2342 = vmatpush2.msra.mxu0 0.0
    %2343 = vmatprep.subr.mxu0 0.0
    %2344 = vmatpush2.msra.mxu0 0.0
    %2345 = vmatprep.subr.mxu0 0.0
    %2346 = vmatpush2.msra.mxu0 0.0
    %2347 = vmatprep.subr.mxu0 0.0
    %2348 = vmatpush2.msra.mxu0 0.0
    %2349 = vmatprep.subr.mxu0 0.0
    %2350 = vmatpush2.msra.mxu0 0.0
    %2351 = vmatprep.subr.mxu0 0.0
    %2352 = vmatpush2.msra.mxu0 0.0
    %2353 = vmatprep.mubr.f32.mxu0 0.0
    %2354 = vmatmul.mubr.f32.gmra.mxu0 %v2287
    %v2355 = vpop.f32.mrf.mxu0
    %v2356 = vadd.f32 0.0, %v2355
    %v2357 = vpop.f32.mrf.mxu0
    %2358 = vdwg.mxu0
    %v2359 = vadd.f32 %v1421, %v2356
    %v2360 = vxor.u32 %v2359, 2147483648
    %v2361 = vmul.f32 %v2360, 1.442695
    %v2362 = vpow.pop %v2361
    %v2363 = vadd.f32 %v2362, 1.0
    %v2364 = vrcp.pop %v2363
    %v2365 = vmul.f32 1.0, %v2364
    %v2366 = vtanh.pop %v2359
    %v2367 = vmul.f32 %v2365, %v2277
    %2369 = vrot.lane.b32.xlu0 %v2366, 80
    %v2370 = vpop.permute.xlu0 %2369
    %v2372 = vmul.f32 %v2365, %v2370
    %2374 = vrot.lane.b32.xlu0 %v2372, 16
    %v2375 = vpop.permute.xlu0 %2374
    %v2377 = vadd.f32 %v2367, %v2375
    %v2378 = vtanh.pop %v2377
    %2380 = vrot.lane.b32.xlu0 %v2378, 16
    %v2381 = vpop.permute.xlu0 %2380
    %v2383 = vmul.f32 %v2365, %v2381
    %2385 = vrot.lane.b32.xlu0 %v2383, 96
    %v2386 = vpop.permute.xlu0 %2385
    %v2387 = vsel %vm1685, %v2386, 0
    %2389 = vmatprep.subr.mxu0 0.0
    %2390 = vmatpush1.msra.mxu0 0.0
    %2391 = vmatprep.subr.mxu0 0.0
    %2392 = vmatpush1.msra.mxu0 0.0
    %2393 = vmatprep.subr.mxu0 0.0
    %2394 = vmatpush1.msra.mxu0 0.0
    %2395 = vmatprep.subr.mxu0 0.0
    %2396 = vmatpush1.msra.mxu0 0.0
    %2397 = vmatprep.subr.mxu0 0.0
    %2398 = vmatpush1.msra.mxu0 0.0
    %2399 = vmatprep.subr.mxu0 0.0
    %2400 = vmatpush1.msra.mxu0 0.0
    %2401 = vmatprep.subr.mxu0 0.0
    %2402 = vmatpush1.msra.mxu0 0.0
    %2403 = vmatprep.subr.mxu0 0.0
    %2404 = vmatpush1.msra.mxu0 0.0
    %2405 = vmatprep.subr.mxu0 0.0
    %2406 = vmatpush1.msra.mxu0 0.0
    %2407 = vmatprep.subr.mxu0 0.0
    %2408 = vmatpush1.msra.mxu0 0.0
    %2409 = vmatprep.subr.mxu0 0.0
    %2410 = vmatpush1.msra.mxu0 0.0
    %2411 = vmatprep.subr.mxu0 0.0
    %2412 = vmatpush1.msra.mxu0 0.0
    %2413 = vmatprep.subr.mxu0 0.0
    %2414 = vmatpush1.msra.mxu0 0.0
    %2415 = vmatprep.subr.mxu0 0.0
    %2416 = vmatpush1.msra.mxu0 0.0
    %2417 = vmatprep.subr.mxu0 0.0
    %2418 = vmatpush1.msra.mxu0 %v150
    %2419 = vmatprep.subr.mxu0 0.0
    %2420 = vmatpush1.msra.mxu0 %v149
    %2421 = vmatprep.subr.mxu0 0.0
    %2422 = vmatpush2.msra.mxu0 0.0
    %2423 = vmatprep.subr.mxu0 0.0
    %2424 = vmatpush2.msra.mxu0 0.0
    %2425 = vmatprep.subr.mxu0 0.0
    %2426 = vmatpush2.msra.mxu0 0.0
    %2427 = vmatprep.subr.mxu0 0.0
    %2428 = vmatpush2.msra.mxu0 0.0
    %2429 = vmatprep.subr.mxu0 0.0
    %2430 = vmatpush2.msra.mxu0 0.0
    %2431 = vmatprep.subr.mxu0 0.0
    %2432 = vmatpush2.msra.mxu0 0.0
    %2433 = vmatprep.subr.mxu0 0.0
    %2434 = vmatpush2.msra.mxu0 0.0
    %2435 = vmatprep.subr.mxu0 0.0
    %2436 = vmatpush2.msra.mxu0 0.0
    %2437 = vmatprep.subr.mxu0 0.0
    %2438 = vmatpush2.msra.mxu0 0.0
    %2439 = vmatprep.subr.mxu0 0.0
    %2440 = vmatpush2.msra.mxu0 0.0
    %2441 = vmatprep.subr.mxu0 0.0
    %2442 = vmatpush2.msra.mxu0 0.0
    %2443 = vmatprep.subr.mxu0 0.0
    %2444 = vmatpush2.msra.mxu0 0.0
    %2445 = vmatprep.subr.mxu0 0.0
    %2446 = vmatpush2.msra.mxu0 0.0
    %2447 = vmatprep.subr.mxu0 0.0
    %2448 = vmatpush2.msra.mxu0 0.0
    %2449 = vmatprep.subr.mxu0 0.0
    %2450 = vmatpush2.msra.mxu0 0.0
    %2451 = vmatprep.subr.mxu0 0.0
    %2452 = vmatpush2.msra.mxu0 0.0
    %2453 = vmatprep.mubr.f32.mxu0 0.0
    %2454 = vmatmul.mubr.f32.gmra.mxu0 %v2387
    %v2455 = vpop.f32.mrf.mxu0
    %v2456 = vadd.f32 0.0, %v2455
    %v2457 = vpop.f32.mrf.mxu0
    %2458 = vdwg.mxu0
    %v2459 = vadd.f32 %v1553, %v2456
    %v2460 = vxor.u32 %v2459, 2147483648
    %v2461 = vmul.f32 %v2460, 1.442695
    %v2462 = vpow.pop %v2461
    %v2463 = vadd.f32 %v2462, 1.0
    %v2464 = vrcp.pop %v2463
    %v2465 = vmul.f32 1.0, %v2464
    %v2466 = vtanh.pop %v2459
    %v2467 = vmul.f32 %v2465, %v2377
    %2469 = vrot.lane.b32.xlu0 %v2466, 80
    %v2470 = vpop.permute.xlu0 %2469
    %v2472 = vmul.f32 %v2465, %v2470
    %2474 = vrot.lane.b32.xlu0 %v2472, 16
    %v2475 = vpop.permute.xlu0 %2474
    %v2477 = vadd.f32 %v2467, %v2475
    %v2478 = vtanh.pop %v2477
    %2480 = vrot.lane.b32.xlu0 %v2478, 16
    %v2481 = vpop.permute.xlu0 %2480
    %v2483 = vmul.f32 %v2465, %v2481
    %v2484 = vlaneseq
    %v2485 = vshrl.u32 %v2484, 7
    %v2486 = vsub.s32 0, %v2485
    %v2487 = vrot.slane %v171, %v2486
    %v2488 = vmul.f32 %v226, %v2487
    %v2489 = vld [vmem:[%s8 + $0x5] ss:$0 sm:$0xff]
    %v2490 = vadd.f32 %v2488, %v2489
    %v2491 = vmax.f32 %v2490, 0.0
    %v2492 = vadd.f32 %v2491, %v1682
    %2494 = vrot.lane.b32.xlu0 %v2483, 96
    %v2495 = vpop.permute.xlu0 %2494
    %v2497 = vadd.f32 %v2492, %v2495
    %v2498 = vld [vmem:[%s8 + $0x6] ss:$0 sm:$0xff]
    %v2500 = vsel %vm1685, %v2497, 0
    %2502 = vmatprep.subr.mxu0 0.0
    %2503 = vmatpush1.msra.mxu0 0.0
    %2504 = vmatprep.subr.mxu0 0.0
    %2505 = vmatpush1.msra.mxu0 0.0
    %2506 = vmatprep.subr.mxu0 0.0
    %2507 = vmatpush1.msra.mxu0 0.0
    %2508 = vmatprep.subr.mxu0 0.0
    %2509 = vmatpush1.msra.mxu0 0.0
    %2510 = vmatprep.subr.mxu0 0.0
    %2511 = vmatpush1.msra.mxu0 0.0
    %2512 = vmatprep.subr.mxu0 0.0
    %2513 = vmatpush1.msra.mxu0 0.0
    %2514 = vmatprep.subr.mxu0 0.0
    %2515 = vmatpush1.msra.mxu0 0.0
    %2516 = vmatprep.subr.mxu0 0.0
    %2517 = vmatpush1.msra.mxu0 0.0
    %2518 = vmatprep.subr.mxu0 0.0
    %2519 = vmatpush1.msra.mxu0 0.0
    %2520 = vmatprep.subr.mxu0 0.0
    %2521 = vmatpush1.msra.mxu0 0.0
    %2522 = vmatprep.subr.mxu0 0.0
    %2523 = vmatpush1.msra.mxu0 0.0
    %2524 = vmatprep.subr.mxu0 0.0
    %2525 = vmatpush1.msra.mxu0 0.0
    %2526 = vmatprep.subr.mxu0 0.0
    %2527 = vmatpush1.msra.mxu0 0.0
    %2528 = vmatprep.subr.mxu0 0.0
    %2529 = vmatpush1.msra.mxu0 0.0
    %2530 = vmatprep.subr.mxu0 0.0
    %2531 = vmatpush1.msra.mxu0 %v146
    %2532 = vmatprep.subr.mxu0 0.0
    %2533 = vmatpush1.msra.mxu0 %v145
    %2534 = vmatprep.subr.mxu0 0.0
    %2535 = vmatpush2.msra.mxu0 0.0
    %2536 = vmatprep.subr.mxu0 0.0
    %2537 = vmatpush2.msra.mxu0 0.0
    %2538 = vmatprep.subr.mxu0 0.0
    %2539 = vmatpush2.msra.mxu0 0.0
    %2540 = vmatprep.subr.mxu0 0.0
    %2541 = vmatpush2.msra.mxu0 0.0
    %2542 = vmatprep.subr.mxu0 0.0
    %2543 = vmatpush2.msra.mxu0 0.0
    %2544 = vmatprep.subr.mxu0 0.0
    %2545 = vmatpush2.msra.mxu0 0.0
    %2546 = vmatprep.subr.mxu0 0.0
    %2547 = vmatpush2.msra.mxu0 0.0
    %2548 = vmatprep.subr.mxu0 0.0
    %2549 = vmatpush2.msra.mxu0 0.0
    %2550 = vmatprep.subr.mxu0 0.0
    %2551 = vmatpush2.msra.mxu0 0.0
    %2552 = vmatprep.subr.mxu0 0.0
    %2553 = vmatpush2.msra.mxu0 0.0
    %2554 = vmatprep.subr.mxu0 0.0
    %2555 = vmatpush2.msra.mxu0 0.0
    %2556 = vmatprep.subr.mxu0 0.0
    %2557 = vmatpush2.msra.mxu0 0.0
    %2558 = vmatprep.subr.mxu0 0.0
    %2559 = vmatpush2.msra.mxu0 0.0
    %2560 = vmatprep.subr.mxu0 0.0
    %2561 = vmatpush2.msra.mxu0 0.0
    %2562 = vmatprep.subr.mxu0 0.0
    %2563 = vmatpush2.msra.mxu0 0.0
    %2564 = vmatprep.subr.mxu0 0.0
    %2565 = vmatpush2.msra.mxu0 0.0
    %2566 = vmatprep.mubr.f32.mxu0 0.0
    %2567 = vmatmul.mubr.f32.gmra.mxu0 %v2500
    %v2568 = vpop.f32.mrf.mxu0
    %v2569 = vadd.f32 %v2498, %v2568
    %v2570 = vpop.f32.mrf.mxu0
    %2571 = vdwg.mxu0
    %v2572 = vmax.f32 %v2569, 0.0
    %s2573 = scalar_lea.vmem %s8, 7
    %v2574 = vld [vmem:[%s2573] ss:$8 sm:$0x7]
    %v2576 = vlaneseq
    %v2577 = vshrl.u32 %v2576, 7
    %v2578 = vsub.s32 0, %v2577
    %v2579 = vrot.slane %v2574, %v2578
    %v2580 = vlaneseq
    %v2581 = vshrl.u32 %v2580, 7
    %v2582 = vsub.s32 1, %v2581
    %v2583 = vrot.slane %v2574, %v2582
    %v2584 = vlaneseq
    %v2585 = vshrl.u32 %v2584, 7
    %v2586 = vsub.s32 2, %v2585
    %v2587 = vrot.slane %v2574, %v2586
    %v2592 = vsel %vm279, %v2572, 0
    %2594 = vmatprep.subr.mxu0 0.0
    %2595 = vmatpush1.msra.mxu0 0.0
    %2596 = vmatprep.subr.mxu0 0.0
    %2597 = vmatpush1.msra.mxu0 0.0
    %2598 = vmatprep.subr.mxu0 0.0
    %2599 = vmatpush1.msra.mxu0 0.0
    %2600 = vmatprep.subr.mxu0 0.0
    %2601 = vmatpush1.msra.mxu0 0.0
    %2602 = vmatprep.subr.mxu0 0.0
    %2603 = vmatpush1.msra.mxu0 0.0
    %2604 = vmatprep.subr.mxu0 0.0
    %2605 = vmatpush1.msra.mxu0 0.0
    %2606 = vmatprep.subr.mxu0 0.0
    %2607 = vmatpush1.msra.mxu0 0.0
    %2608 = vmatprep.subr.mxu0 0.0
    %2609 = vmatpush1.msra.mxu0 0.0
    %2610 = vmatprep.subr.mxu0 %v63
    %2611 = vmatpush1.msra.mxu0 %v62
    %2612 = vmatprep.subr.mxu0 %v60
    %2613 = vmatpush1.msra.mxu0 %v59
    %2614 = vmatprep.subr.mxu0 %v57
    %2615 = vmatpush1.msra.mxu0 %v56
    %2616 = vmatprep.subr.mxu0 %v54
    %2617 = vmatpush1.msra.mxu0 %v53
    %2618 = vmatprep.subr.mxu0 %v51
    %2619 = vmatpush1.msra.mxu0 %v50
    %2620 = vmatprep.subr.mxu0 %v48
    %2621 = vmatpush1.msra.mxu0 %v47
    %2622 = vmatprep.subr.mxu0 %v45
    %2623 = vmatpush1.msra.mxu0 %v44
    %2624 = vmatprep.subr.mxu0 %v42
    %2625 = vmatpush1.msra.mxu0 %v41
    %2626 = vmatprep.subr.mxu0 0.0
    %2627 = vmatpush2.msra.mxu0 0.0
    %2628 = vmatprep.subr.mxu0 0.0
    %2629 = vmatpush2.msra.mxu0 0.0
    %2630 = vmatprep.subr.mxu0 0.0
    %2631 = vmatpush2.msra.mxu0 0.0
    %2632 = vmatprep.subr.mxu0 0.0
    %2633 = vmatpush2.msra.mxu0 0.0
    %2634 = vmatprep.subr.mxu0 0.0
    %2635 = vmatpush2.msra.mxu0 0.0
    %2636 = vmatprep.subr.mxu0 0.0
    %2637 = vmatpush2.msra.mxu0 0.0
    %2638 = vmatprep.subr.mxu0 0.0
    %2639 = vmatpush2.msra.mxu0 0.0
    %2640 = vmatprep.subr.mxu0 0.0
    %2641 = vmatpush2.msra.mxu0 0.0
    %2642 = vmatprep.subr.mxu0 0.0
    %2643 = vmatpush2.msra.mxu0 0.0
    %2644 = vmatprep.subr.mxu0 0.0
    %2645 = vmatpush2.msra.mxu0 0.0
    %2646 = vmatprep.subr.mxu0 0.0
    %2647 = vmatpush2.msra.mxu0 0.0
    %2648 = vmatprep.subr.mxu0 0.0
    %2649 = vmatpush2.msra.mxu0 0.0
    %2650 = vmatprep.subr.mxu0 0.0
    %2651 = vmatpush2.msra.mxu0 0.0
    %2652 = vmatprep.subr.mxu0 0.0
    %2653 = vmatpush2.msra.mxu0 0.0
    %2654 = vmatprep.subr.mxu0 0.0
    %2655 = vmatpush2.msra.mxu0 0.0
    %2656 = vmatprep.subr.mxu0 0.0
    %2657 = vmatpush2.msra.mxu0 0.0
    %2658 = vmatprep.mubr.f32.mxu0 0.0
    %2659 = vmatmul.mubr.f32.gmra.mxu0 %v2592
    %v2660 = vpop.f32.mrf.mxu0
    %v2661 = vadd.f32 %v2579, %v2660
    %v2662 = vpop.f32.mrf.mxu0
    %v2663 = vadd.f32 %v2583, %v2662
    %2664 = vdwg.mxu0
    %2665 = vmatprep.subr.mxu0 0.0
    %2666 = vmatpush1.msra.mxu0 0.0
    %2667 = vmatprep.subr.mxu0 0.0
    %2668 = vmatpush1.msra.mxu0 0.0
    %2669 = vmatprep.subr.mxu0 0.0
    %2670 = vmatpush1.msra.mxu0 0.0
    %2671 = vmatprep.subr.mxu0 0.0
    %2672 = vmatpush1.msra.mxu0 0.0
    %2673 = vmatprep.subr.mxu0 0.0
    %2674 = vmatpush1.msra.mxu0 0.0
    %2675 = vmatprep.subr.mxu0 0.0
    %2676 = vmatpush1.msra.mxu0 0.0
    %2677 = vmatprep.subr.mxu0 0.0
    %2678 = vmatpush1.msra.mxu0 0.0
    %2679 = vmatprep.subr.mxu0 0.0
    %2680 = vmatpush1.msra.mxu0 0.0
    %2681 = vmatprep.subr.mxu0 0.0
    %2682 = vmatpush1.msra.mxu0 %v64
    %2683 = vmatprep.subr.mxu0 0.0
    %2684 = vmatpush1.msra.mxu0 %v61
    %2685 = vmatprep.subr.mxu0 0.0
    %2686 = vmatpush1.msra.mxu0 %v58
    %2687 = vmatprep.subr.mxu0 0.0
    %2688 = vmatpush1.msra.mxu0 %v55
    %2689 = vmatprep.subr.mxu0 0.0
    %2690 = vmatpush1.msra.mxu0 %v52
    %2691 = vmatprep.subr.mxu0 0.0
    %2692 = vmatpush1.msra.mxu0 %v49
    %2693 = vmatprep.subr.mxu0 0.0
    %2694 = vmatpush1.msra.mxu0 %v46
    %2695 = vmatprep.subr.mxu0 0.0
    %2696 = vmatpush1.msra.mxu0 %v43
    %2697 = vmatprep.subr.mxu0 0.0
    %2698 = vmatpush2.msra.mxu0 0.0
    %2699 = vmatprep.subr.mxu0 0.0
    %2700 = vmatpush2.msra.mxu0 0.0
    %2701 = vmatprep.subr.mxu0 0.0
    %2702 = vmatpush2.msra.mxu0 0.0
    %2703 = vmatprep.subr.mxu0 0.0
    %2704 = vmatpush2.msra.mxu0 0.0
    %2705 = vmatprep.subr.mxu0 0.0
    %2706 = vmatpush2.msra.mxu0 0.0
    %2707 = vmatprep.subr.mxu0 0.0
    %2708 = vmatpush2.msra.mxu0 0.0
    %2709 = vmatprep.subr.mxu0 0.0
    %2710 = vmatpush2.msra.mxu0 0.0
    %2711 = vmatprep.subr.mxu0 0.0
    %2712 = vmatpush2.msra.mxu0 0.0
    %2713 = vmatprep.subr.mxu0 0.0
    %2714 = vmatpush2.msra.mxu0 0.0
    %2715 = vmatprep.subr.mxu0 0.0
    %2716 = vmatpush2.msra.mxu0 0.0
    %2717 = vmatprep.subr.mxu0 0.0
    %2718 = vmatpush2.msra.mxu0 0.0
    %2719 = vmatprep.subr.mxu0 0.0
    %2720 = vmatpush2.msra.mxu0 0.0
    %2721 = vmatprep.subr.mxu0 0.0
    %2722 = vmatpush2.msra.mxu0 0.0
    %2723 = vmatprep.subr.mxu0 0.0
    %2724 = vmatpush2.msra.mxu0 0.0
    %2725 = vmatprep.subr.mxu0 0.0
    %2726 = vmatpush2.msra.mxu0 0.0
    %2727 = vmatprep.subr.mxu0 0.0
    %2728 = vmatpush2.msra.mxu0 0.0
    %2729 = vmatprep.mubr.f32.mxu0 0.0
    %2730 = vmatmul.mubr.f32.gmra.mxu0 %v2592
    %v2731 = vpop.f32.mrf.mxu0
    %v2732 = vadd.f32 %v2587, %v2731
    %v2733 = vpop.f32.mrf.mxu0
    %2734 = vdwg.mxu0
    %v2735 = vmax.f32 %v2661, 0.0
    %v2736 = vmax.f32 %v2663, 0.0
    %v2737 = vmax.f32 %v2732, 0.0
    %v2738 = vld [vmem:[%s8 + $0x18] ss:$0 sm:$0xff]
    %v2740 = vsel %vm279, %v2737, 0
    %2742 = vmatprep.subr.mxu0 0.0
    %2743 = vmatpush1.msra.mxu0 %v190
    %2744 = vmatprep.subr.mxu0 0.0
    %2745 = vmatpush1.msra.mxu0 %v189
    %2746 = vmatprep.subr.mxu0 0.0
    %2747 = vmatpush1.msra.mxu0 %v188
    %2748 = vmatprep.subr.mxu0 0.0
    %2749 = vmatpush1.msra.mxu0 %v187
    %2750 = vmatprep.subr.mxu0 0.0
    %2751 = vmatpush1.msra.mxu0 %v186
    %2752 = vmatprep.subr.mxu0 0.0
    %2753 = vmatpush1.msra.mxu0 %v185
    %2754 = vmatprep.subr.mxu0 0.0
    %2755 = vmatpush1.msra.mxu0 %v184
    %2756 = vmatprep.subr.mxu0 0.0
    %2757 = vmatpush1.msra.mxu0 %v183
    %2758 = vmatprep.subr.mxu0 0.0
    %2759 = vmatpush1.msra.mxu0 %v182
    %2760 = vmatprep.subr.mxu0 0.0
    %2761 = vmatpush1.msra.mxu0 %v181
    %2762 = vmatprep.subr.mxu0 0.0
    %2763 = vmatpush1.msra.mxu0 %v180
    %2764 = vmatprep.subr.mxu0 0.0
    %2765 = vmatpush1.msra.mxu0 %v179
    %2766 = vmatprep.subr.mxu0 0.0
    %2767 = vmatpush1.msra.mxu0 %v178
    %2768 = vmatprep.subr.mxu0 0.0
    %2769 = vmatpush1.msra.mxu0 %v177
    %2770 = vmatprep.subr.mxu0 0.0
    %2771 = vmatpush1.msra.mxu0 %v176
    %2772 = vmatprep.subr.mxu0 0.0
    %2773 = vmatpush1.msra.mxu0 %v175
    %2774 = vmatprep.subr.mxu0 0.0
    %2775 = vmatpush2.msra.mxu0 %v206
    %2776 = vmatprep.subr.mxu0 0.0
    %2777 = vmatpush2.msra.mxu0 %v205
    %2778 = vmatprep.subr.mxu0 0.0
    %2779 = vmatpush2.msra.mxu0 %v204
    %2780 = vmatprep.subr.mxu0 0.0
    %2781 = vmatpush2.msra.mxu0 %v203
    %2782 = vmatprep.subr.mxu0 0.0
    %2783 = vmatpush2.msra.mxu0 %v202
    %2784 = vmatprep.subr.mxu0 0.0
    %2785 = vmatpush2.msra.mxu0 %v201
    %2786 = vmatprep.subr.mxu0 0.0
    %2787 = vmatpush2.msra.mxu0 %v200
    %2788 = vmatprep.subr.mxu0 0.0
    %2789 = vmatpush2.msra.mxu0 %v199
    %2790 = vmatprep.subr.mxu0 0.0
    %2791 = vmatpush2.msra.mxu0 %v198
    %2792 = vmatprep.subr.mxu0 0.0
    %2793 = vmatpush2.msra.mxu0 %v197
    %2794 = vmatprep.subr.mxu0 0.0
    %2795 = vmatpush2.msra.mxu0 %v196
    %2796 = vmatprep.subr.mxu0 0.0
    %2797 = vmatpush2.msra.mxu0 %v195
    %2798 = vmatprep.subr.mxu0 0.0
    %2799 = vmatpush2.msra.mxu0 %v194
    %2800 = vmatprep.subr.mxu0 0.0
    %2801 = vmatpush2.msra.mxu0 %v193
    %2802 = vmatprep.subr.mxu0 0.0
    %2803 = vmatpush2.msra.mxu0 %v192
    %2804 = vmatprep.subr.mxu0 0.0
    %2805 = vmatpush2.msra.mxu0 %v191
    %2806 = vmatprep.mubr.f32.mxu0 %v2736
    %2807 = vmatmul.mubr.f32.gmra.mxu0 %v2735
    %v2808 = vpop.f32.mrf.mxu0
    %v2809 = vadd.f32 %v2738, %v2808
    %v2810 = vpop.f32.mrf.mxu0
    %2811 = vdwg.mxu0
    %2812 = vmatprep.subr.mxu0 0.0
    %2813 = vmatpush1.msra.mxu0 0.0
    %2814 = vmatprep.subr.mxu0 0.0
    %2815 = vmatpush1.msra.mxu0 0.0
    %2816 = vmatprep.subr.mxu0 0.0
    %2817 = vmatpush1.msra.mxu0 0.0
    %2818 = vmatprep.subr.mxu0 0.0
    %2819 = vmatpush1.msra.mxu0 0.0
    %2820 = vmatprep.subr.mxu0 0.0
    %2821 = vmatpush1.msra.mxu0 0.0
    %2822 = vmatprep.subr.mxu0 0.0
    %2823 = vmatpush1.msra.mxu0 0.0
    %2824 = vmatprep.subr.mxu0 0.0
    %2825 = vmatpush1.msra.mxu0 0.0
    %2826 = vmatprep.subr.mxu0 0.0
    %2827 = vmatpush1.msra.mxu0 0.0
    %2828 = vmatprep.subr.mxu0 0.0
    %2829 = vmatpush1.msra.mxu0 %v214
    %2830 = vmatprep.subr.mxu0 0.0
    %2831 = vmatpush1.msra.mxu0 %v213
    %2832 = vmatprep.subr.mxu0 0.0
    %2833 = vmatpush1.msra.mxu0 %v212
    %2834 = vmatprep.subr.mxu0 0.0
    %2835 = vmatpush1.msra.mxu0 %v211
    %2836 = vmatprep.subr.mxu0 0.0
    %2837 = vmatpush1.msra.mxu0 %v210
    %2838 = vmatprep.subr.mxu0 0.0
    %2839 = vmatpush1.msra.mxu0 %v209
    %2840 = vmatprep.subr.mxu0 0.0
    %2841 = vmatpush1.msra.mxu0 %v208
    %2842 = vmatprep.subr.mxu0 0.0
    %2843 = vmatpush1.msra.mxu0 %v207
    %2844 = vmatprep.subr.mxu0 0.0
    %2845 = vmatpush2.msra.mxu0 0.0
    %2846 = vmatprep.subr.mxu0 0.0
    %2847 = vmatpush2.msra.mxu0 0.0
    %2848 = vmatprep.subr.mxu0 0.0
    %2849 = vmatpush2.msra.mxu0 0.0
    %2850 = vmatprep.subr.mxu0 0.0
    %2851 = vmatpush2.msra.mxu0 0.0
    %2852 = vmatprep.subr.mxu0 0.0
    %2853 = vmatpush2.msra.mxu0 0.0
    %2854 = vmatprep.subr.mxu0 0.0
    %2855 = vmatpush2.msra.mxu0 0.0
    %2856 = vmatprep.subr.mxu0 0.0
    %2857 = vmatpush2.msra.mxu0 0.0
    %2858 = vmatprep.subr.mxu0 0.0
    %2859 = vmatpush2.msra.mxu0 0.0
    %2860 = vmatprep.subr.mxu0 0.0
    %2861 = vmatpush2.msra.mxu0 0.0
    %2862 = vmatprep.subr.mxu0 0.0
    %2863 = vmatpush2.msra.mxu0 0.0
    %2864 = vmatprep.subr.mxu0 0.0
    %2865 = vmatpush2.msra.mxu0 0.0
    %2866 = vmatprep.subr.mxu0 0.0
    %2867 = vmatpush2.msra.mxu0 0.0
    %2868 = vmatprep.subr.mxu0 0.0
    %2869 = vmatpush2.msra.mxu0 0.0
    %2870 = vmatprep.subr.mxu0 0.0
    %2871 = vmatpush2.msra.mxu0 0.0
    %2872 = vmatprep.subr.mxu0 0.0
    %2873 = vmatpush2.msra.mxu0 0.0
    %2874 = vmatprep.subr.mxu0 0.0
    %2875 = vmatpush2.msra.mxu0 0.0
    %2876 = vmatprep.mubr.f32.mxu0 0.0
    %2877 = vmatmul.mubr.f32.gmra.mxu0 %v2740
    %v2878 = vpop.f32.mrf.mxu0
    %v2879 = vadd.f32 %v2809, %v2878
    %v2880 = vpop.f32.mrf.mxu0
    %2881 = vdwg.mxu0
    %v2882 = vmax.f32 %v2879, 0.0
    %vm2883 = vcmask 74752
    %v2884 = vsel %vm2883, %v2882, -inf
    %2885 = vmax.xlane.f32.xlu0 %v2884
    %v2886 = vpop.xlane.xlu0 %2885
    %v2887 = vsub.f32 %v2882, %v2886
    %v2888 = vmul.f32 %v2887, 1.442695
    %v2889 = vpow.pop %v2888
    %v2890 = vsel %vm2883, %v2889, 0.0
    %2891 = vadd.xlane.f32.xlu0 %v2890
    %v2892 = vpop.xlane.xlu0 %2891
    %v2893 = vlog2.pop %v2892
    %v2894 = vmul.f32 %v2893, 0.6931472
    %v2895 = vsub.f32 %v2887, %v2894
    %2896 = vst.msk [vmem:[#allocation2] sm:$0x3] %vm2883, %v2895
    %v2897 = vcvt.s32.f32 %v530
    %vm2898 = vcmp.eq.f32.partialorder %v2882, %v2886
    %v2899 = vsel %vm2898, %v2897, 10.0
    %v2900 = vsel %vm2883, %v2899, inf
    %2901 = vmin.xlane.f32.xlu0 %v2900
    %v2902 = vpop.xlane.xlu0 %2901
    %vm2903 = vcmp.eq.f32.partialorder %v2897, %v2902
    %v2904 = vsel %vm2903, 1, 0
    %v2905 = vcvt.s32.f32 %v2904
    %v2907 = vsel %vm538, %v2905, 0
    %2909 = vmatprep.subr.mxu0 0.0
    %2910 = vmatpush1.msra.mxu0 0.0
    %2911 = vmatprep.subr.mxu0 0.0
    %2912 = vmatpush1.msra.mxu0 0.0
    %2913 = vmatprep.subr.mxu0 0.0
    %2914 = vmatpush1.msra.mxu0 0.0
    %2915 = vmatprep.subr.mxu0 0.0
    %2916 = vmatpush1.msra.mxu0 0.0
    %2917 = vmatprep.subr.mxu0 0.0
    %2918 = vmatpush1.msra.mxu0 0.0
    %2919 = vmatprep.subr.mxu0 0.0
    %2920 = vmatpush1.msra.mxu0 0.0
    %2921 = vmatprep.subr.mxu0 0.0
    %2922 = vmatpush1.msra.mxu0 0.0
    %2923 = vmatprep.subr.mxu0 0.0
    %2924 = vmatpush1.msra.mxu0 0.0
    %2925 = vmatprep.subr.mxu0 0.0
    %2926 = vmatpush1.msra.mxu0 0.0
    %2927 = vmatprep.subr.mxu0 0.0
    %2928 = vmatpush1.msra.mxu0 0.0
    %2929 = vmatprep.subr.mxu0 0.0
    %2930 = vmatpush1.msra.mxu0 0.0
    %2931 = vmatprep.subr.mxu0 0.0
    %2932 = vmatpush1.msra.mxu0 0.0
    %2933 = vmatprep.subr.mxu0 0.0
    %2934 = vmatpush1.msra.mxu0 0.0
    %2935 = vmatprep.subr.mxu0 0.0
    %2936 = vmatpush1.msra.mxu0 0.0
    %2937 = vmatprep.subr.mxu0 0.0
    %2938 = vmatpush1.msra.mxu0 %v1613
    %2939 = vmatprep.subr.mxu0 0.0
    %2940 = vmatpush1.msra.mxu0 %v527
    %2941 = vmatprep.subr.mxu0 0.0
    %2942 = vmatpush2.msra.mxu0 0.0
    %2943 = vmatprep.subr.mxu0 0.0
    %2944 = vmatpush2.msra.mxu0 0.0
    %2945 = vmatprep.subr.mxu0 0.0
    %2946 = vmatpush2.msra.mxu0 0.0
    %2947 = vmatprep.subr.mxu0 0.0
    %2948 = vmatpush2.msra.mxu0 0.0
    %2949 = vmatprep.subr.mxu0 0.0
    %2950 = vmatpush2.msra.mxu0 0.0
    %2951 = vmatprep.subr.mxu0 0.0
    %2952 = vmatpush2.msra.mxu0 0.0
    %2953 = vmatprep.subr.mxu0 0.0
    %2954 = vmatpush2.msra.mxu0 0.0
    %2955 = vmatprep.subr.mxu0 0.0
    %2956 = vmatpush2.msra.mxu0 0.0
    %2957 = vmatprep.subr.mxu0 0.0
    %2958 = vmatpush2.msra.mxu0 0.0
    %2959 = vmatprep.subr.mxu0 0.0
    %2960 = vmatpush2.msra.mxu0 0.0
    %2961 = vmatprep.subr.mxu0 0.0
    %2962 = vmatpush2.msra.mxu0 0.0
    %2963 = vmatprep.subr.mxu0 0.0
    %2964 = vmatpush2.msra.mxu0 0.0
    %2965 = vmatprep.subr.mxu0 0.0
    %2966 = vmatpush2.msra.mxu0 0.0
    %2967 = vmatprep.subr.mxu0 0.0
    %2968 = vmatpush2.msra.mxu0 0.0
    %2969 = vmatprep.subr.mxu0 0.0
    %2970 = vmatpush2.msra.mxu0 0.0
    %2971 = vmatprep.subr.mxu0 0.0
    %2972 = vmatpush2.msra.mxu0 0.0
    %2973 = vmatprep.mubr.f32.mxu0 0.0
    %2974 = vmatmul.mubr.f32.gmra.mxu0 %v2907
    %v2975 = vpop.f32.mrf.mxu0
    %v2976 = vadd.f32 0.0, %v2975
    %v2977 = vpop.f32.mrf.mxu0
    %2978 = vdwg.mxu0
    %v2979 = vlaneseq
    %v2980 = vshrl.u32 %v2979, 7
    %v2981 = vsub.s32 0, %v2980
    %v2982 = vrot.slane %v172, %v2981
    %v2983 = vmul.f32 %v226, %v2982
    %2984 = vset.pattern.permute.xlu0 2
    %2985 = vperm.xlu0 %2984, %v222
    %v2986 = vpop.permute.xlu0 %2985
    %v2988 = vlaneseq
    %v2989 = vshrl.u32 %v2988, 7
    %v2990 = vsub.s32 0, %v2989
    %v2991 = vrot.slane %v173, %v2990
    %v2992 = vmul.f32 %v2986, %v2991
    %v2993 = vadd.f32 %v2983, %v2992
    %2994 = vset.pattern.permute.xlu0 3
    %2995 = vperm.xlu0 %2994, %v222
    %v2996 = vpop.permute.xlu0 %2995
    %v2998 = vlaneseq
    %v2999 = vshrl.u32 %v2998, 7
    %v3000 = vsub.s32 0, %v2999
    %v3001 = vrot.slane %v174, %v3000
    %v3002 = vmul.f32 %v2996, %v3001
    %v3003 = vadd.f32 %v2993, %v3002
    %v3004 = vld [vmem:[%s8 + $0x19] ss:$0 sm:$0xff]
    %v3005 = vadd.f32 %v3003, %v3004
    %v3006 = vmax.f32 %v3005, 0.0
    %v3007 = vadd.f32 %v1682, %v2976
    %v3008 = vadd.f32 %v3006, %v3007
    %v3009 = vadd.f32 %v3008, %v2495
    %v3010 = vld [vmem:[%s8 + $0x1a] ss:$0 sm:$0xff]
    %v3012 = vsel %vm1685, %v3009, 0
    %3014 = vmatprep.subr.mxu0 0.0
    %3015 = vmatpush1.msra.mxu0 0.0
    %3016 = vmatprep.subr.mxu0 0.0
    %3017 = vmatpush1.msra.mxu0 0.0
    %3018 = vmatprep.subr.mxu0 0.0
    %3019 = vmatpush1.msra.mxu0 0.0
    %3020 = vmatprep.subr.mxu0 0.0
    %3021 = vmatpush1.msra.mxu0 0.0
    %3022 = vmatprep.subr.mxu0 0.0
    %3023 = vmatpush1.msra.mxu0 0.0
    %3024 = vmatprep.subr.mxu0 0.0
    %3025 = vmatpush1.msra.mxu0 0.0
    %3026 = vmatprep.subr.mxu0 0.0
    %3027 = vmatpush1.msra.mxu0 0.0
    %3028 = vmatprep.subr.mxu0 0.0
    %3029 = vmatpush1.msra.mxu0 0.0
    %3030 = vmatprep.subr.mxu0 0.0
    %3031 = vmatpush1.msra.mxu0 0.0
    %3032 = vmatprep.subr.mxu0 0.0
    %3033 = vmatpush1.msra.mxu0 0.0
    %3034 = vmatprep.subr.mxu0 0.0
    %3035 = vmatpush1.msra.mxu0 0.0
    %3036 = vmatprep.subr.mxu0 0.0
    %3037 = vmatpush1.msra.mxu0 0.0
    %3038 = vmatprep.subr.mxu0 0.0
    %3039 = vmatpush1.msra.mxu0 0.0
    %3040 = vmatprep.subr.mxu0 0.0
    %3041 = vmatpush1.msra.mxu0 0.0
    %3042 = vmatprep.subr.mxu0 0.0
    %3043 = vmatpush1.msra.mxu0 %v216
    %3044 = vmatprep.subr.mxu0 0.0
    %3045 = vmatpush1.msra.mxu0 %v215
    %3046 = vmatprep.subr.mxu0 0.0
    %3047 = vmatpush2.msra.mxu0 0.0
    %3048 = vmatprep.subr.mxu0 0.0
    %3049 = vmatpush2.msra.mxu0 0.0
    %3050 = vmatprep.subr.mxu0 0.0
    %3051 = vmatpush2.msra.mxu0 0.0
    %3052 = vmatprep.subr.mxu0 0.0
    %3053 = vmatpush2.msra.mxu0 0.0
    %3054 = vmatprep.subr.mxu0 0.0
    %3055 = vmatpush2.msra.mxu0 0.0
    %3056 = vmatprep.subr.mxu0 0.0
    %3057 = vmatpush2.msra.mxu0 0.0
    %3058 = vmatprep.subr.mxu0 0.0
    %3059 = vmatpush2.msra.mxu0 0.0
    %3060 = vmatprep.subr.mxu0 0.0
    %3061 = vmatpush2.msra.mxu0 0.0
    %3062 = vmatprep.subr.mxu0 0.0
    %3063 = vmatpush2.msra.mxu0 0.0
    %3064 = vmatprep.subr.mxu0 0.0
    %3065 = vmatpush2.msra.mxu0 0.0
    %3066 = vmatprep.subr.mxu0 0.0
    %3067 = vmatpush2.msra.mxu0 0.0
    %3068 = vmatprep.subr.mxu0 0.0
    %3069 = vmatpush2.msra.mxu0 0.0
    %3070 = vmatprep.subr.mxu0 0.0
    %3071 = vmatpush2.msra.mxu0 0.0
    %3072 = vmatprep.subr.mxu0 0.0
    %3073 = vmatpush2.msra.mxu0 0.0
    %3074 = vmatprep.subr.mxu0 0.0
    %3075 = vmatpush2.msra.mxu0 0.0
    %3076 = vmatprep.subr.mxu0 0.0
    %3077 = vmatpush2.msra.mxu0 0.0
    %3078 = vmatprep.mubr.f32.mxu0 0.0
    %3079 = vmatmul.mubr.f32.gmra.mxu0 %v3012
    %v3080 = vpop.f32.mrf.mxu0
    %v3081 = vadd.f32 %v3010, %v3080
    %v3082 = vpop.f32.mrf.mxu0
    %3083 = vdwg.mxu0
    %v3084 = vmax.f32 %v3081, 0.0
    %v3085 = vlaneseq
    %v3086 = vshrl.u32 %v3085, 7
    %v3087 = vsub.s32 0, %v3086
    %v3088 = vrot.slane %v217, %v3087
    %v3089 = vmul.f32 %v3084, %v3088
    %vm3090 = vcmask 58368
    %v3091 = vsel %vm3090, %v3089, 0.0
    %3092 = vadd.xlane.f32.xlu0 %v3091
    %v3093 = vpop.xlane.xlu0 %3092
    %v3094 = vld [vmem:[%s8 + $0x1b] ss:$0 sm:$0xff]
    %v3095 = vadd.f32 %v3093, %v3094
    %v3096 = vmax.f32 %v3095, 0.0
    %vm3097 = vcmask 1024
    %3098 = vst.msk [vmem:[%s10] sm:$0x3] %vm3097, %v3096
    // Predicated region
    $region38: #{seqattn_forward.1} parent=1 // pred_check
      _
    $region39: #{seqattn_forward.1} parent=1 // pred_check_branch
      %3100 = sbr.rel (0) target = $region41
    $region40: #{seqattn_forward.1} parent=1 // pred_region
      %s3102 = ssub.s32 32, 32
      %3103 = vsyncadd [#allocation3], %s3102
      %s3105 = sshll.u32 [#allocation2], 4
      %s3106 = int_to_ptr.vmem [resolvable:$true] %s3105
      %3108 = dma.vmem_to_hbm [thread:$0]  %s3106, 32, %s9, [#allocation3]
    $region41: #{seqattn_forward.1} parent=1 // pred_fallthru
      _
    // Predicated region
    $region42: #{seqattn_forward.1} parent=1 // pred_check
      _
    $region43: #{seqattn_forward.1} parent=1 // pred_check_branch
      %3110 = sbr.rel (0) target = $region45
    $region44: #{seqattn_forward.1} parent=1 // pred_region
      _
    $region45: #{seqattn_forward.1} parent=1 // pred_fallthru
      _
    // Predicated region
    $region46: #{seqattn_forward.1} parent=1 // pred_check
      _
    $region47: #{seqattn_forward.1} parent=1 // pred_check_branch
      %3112 = sbr.rel (0) target = $region49
    $region48: #{seqattn_forward.1} parent=1 // pred_region
      %3113 = dma.done [#allocation3], 32
    $region49: #{seqattn_forward.1} parent=1 // pred_fallthru
      _
    // Predicated region
    $region50: #{seqattn_forward.1} parent=1 // pred_check
      _
    $region51: #{seqattn_forward.1} parent=1 // pred_check_branch
      %3115 = sbr.rel (0) target = $region53
    $region52: #{seqattn_forward.1} parent=1 // pred_region
      _
    $region53: #{seqattn_forward.1} parent=1 // pred_fallthru
      _
    %3116 = vsyncpa [#allocation3], 1

</llo_original>
